<compile_context>
chip_gen: v6e
topology: v6e:2x2x1
jax: 0.10.0
libtpu: 0.0.40
codegen_flags: <defaults>
</compile_context>

<pallas_src>
import functools

import numpy as np
import jax
import jax.numpy as jnp
from jax import lax
from jax.experimental import pallas as pl
from jax.experimental.pallas import tpu as pltpu


# ---------------------------------------------------------------------------
# Host-side edge de-duplication (data-dependent, variable-length output ->
# host/NumPy glue, but vectorized).  Semantics identical to the sequential
# PyTorch FilterRepeatedEdges: keep the FIRST occurrence of every undirected
# edge, in original order / original direction.
# ---------------------------------------------------------------------------
def filter_repeated_edges(edges):
    e = np.asarray(edges)
    if e.shape[1] == 0:
        return e
    lo = np.minimum(e[0], e[1]).astype(np.int64)
    hi = np.maximum(e[0], e[1]).astype(np.int64)
    key = lo * (np.int64(e.max()) + 1) + hi            # canonical undirected key
    _, first_idx = np.unique(key, return_index=True)    # first occurrence of each
    keep = np.sort(first_idx)                            # restore original order
    return e[:, keep]


def _filter_repeated_edges_ref(edges):
    """Literal replica of the PyTorch loop (verification only)."""
    e = np.asarray(edges)
    cols = [e[:, 0]]
    seen = {(int(e[0, 0]), int(e[1, 0]))}
    for n in range(1, e.shape[1]):
        a, b = int(e[0, n]), int(e[1, n])
        if (a, b) in seen or (b, a) in seen:
            continue
        seen.add((a, b))
        cols.append(e[:, n])
    return np.stack(cols, axis=1)


# ---------------------------------------------------------------------------
# Pallas kernel: blocked endpoint gather via ONE stacked one-hot MXU matmul,
# emitted transposed so stores are lane-dense.
# ---------------------------------------------------------------------------
def _gather_kernel(edges_ref, vt_ref, out_ref):
    """Gather both endpoints of an E_BLK edge block.

    edges_ref : (2, E_BLK) int32   endpoint indices for this edge block
    vt_ref    : (M, N)             transposed vertex table (VMEM-resident)
    out_ref   : (2, M, E_BLK)      out[0] = V1_block.T, out[1] = V2_block.T
    """
    m, n_vert = vt_ref.shape
    e_blk = edges_ref.shape[1]

    idx = edges_ref[...]                                          # (2, E_BLK)
    # Stack both endpoint index vectors along lanes -> (1, 2*E_BLK); a single
    # fused matmul then gathers both endpoints in one MXU pass.
    stacked = jnp.concatenate([idx[0:1, :], idx[1:2, :]], axis=1)
    rows = lax.broadcasted_iota(jnp.int32, (n_vert, 2 * e_blk), 0)
    onehot = (rows == stacked).astype(vt_ref.dtype)               # (N, 2*E_BLK)

    # Precision/dtype coupling (documented per review): f32 tables need
    # HIGHEST for a bit-exact gather; bf16 tables are already exact with the
    # default dot (one non-zero term per output, f32 accumulation), so the
    # 3-6x cost of HIGHEST would be pure waste there.
    precision = lax.Precision.HIGHEST if vt_ref.dtype == jnp.float32 else None
    g = jnp.dot(vt_ref[...], onehot, precision=precision,
                preferred_element_type=jnp.float32)               # (M, 2*E_BLK)

    out_ref[0] = g[:, :e_blk].astype(out_ref.dtype)               # V1.T block
    out_ref[1] = g[:, e_blk:].astype(out_ref.dtype)               # V2.T block


# ---------------------------------------------------------------------------
# Wrapper: generation-aware block sizing, right-sized VMEM limit, cached
# jitted pallas_call, shape-stable padding.
# ---------------------------------------------------------------------------
def _physical_vmem_bytes():
    try:
        return int(pltpu.get_tpu_info().vmem_capacity_bytes)
    except Exception:
        return 64 * 1024 * 1024  # conservative (v7x per-TC)


def _choose_e_blk(n, m, itemsize):
    phys = _physical_vmem_bytes()
    # v5e/v6e (128 MiB VMEM) -> 1024; v7x (64 MiB per TC) -> 512.
    e_blk = 1024 if phys >= 100 * 1024 * 1024 else 512
    budget = phys // 2
    while e_blk > 128:
        footprint = (m * n * itemsize                    # resident table
                     + 2 * (n * 2 * e_blk * 4)           # one-hot temporaries
                     + 2 * m * e_blk * itemsize * 2      # output block (x2 bufs)
                     + 2 * e_blk * 4 * 2)                # edge block (x2 bufs)
        if footprint <= budget:
            break
        e_blk //= 2
    return e_blk


_SINGLE_BUFFER_TABLE_OK = [True]  # downgraded if pl.Buffered(1) is unsupported


@functools.lru_cache(maxsize=None)
def _build_gather_fn(n, m, dtype, n_pad, e_blk, single_buffer_table):
    dtype = jnp.dtype(dtype)
    itemsize = dtype.itemsize
    table_bufs = 1 if single_buffer_table else 2

    need = (m * n * itemsize * table_bufs          # resident transposed table
            + 2 * e_blk * 4 * 2                    # edge index block (double-buffered)
            + 2 * m * e_blk * itemsize * 2         # fused output block (double-buffered)
            + 2 * (n * 2 * e_blk * 4)              # one-hot / compare temporaries
            + (2 << 20))                           # slack for compiler scratch
    phys = _physical_vmem_bytes()
    vmem_limit = int(min(max(2 * need, 16 * 1024 * 1024), phys * 3 // 4))

    table_kwargs = dict(pipeline_mode=pl.Buffered(1)) if single_buffer_table else {}
    grid_spec = pltpu.PrefetchScalarGridSpec(
        num_scalar_prefetch=0,
        grid=(n_pad // e_blk,),
        in_specs=[
            pl.BlockSpec((2, e_blk), lambda blk: (0, blk)),        # edge block
            pl.BlockSpec((m, n), lambda blk: (0, 0), **table_kwargs),  # resident table
        ],
        out_specs=pl.BlockSpec((2, m, e_blk), lambda blk: (0, 0, blk)),
    )
    call = pl.pallas_call(
        _gather_kernel,
        out_shape=jax.ShapeDtypeStruct((2, m, n_pad), dtype),
        grid_spec=grid_spec,
        compiler_params=pltpu.CompilerParams(
            # TODO(synk): on v7x verify "parallel" actually shards edge blocks
            # across both TensorCores; if not, switch to pltpu.CORE_PARALLEL.
            dimension_semantics=("parallel",),
            vmem_limit_bytes=vmem_limit,
        ),
    )

    def fn(edges_pad, vt):
        fused = call(edges_pad, vt)            # (2, M, n_pad): lane-dense stores
        return jnp.swapaxes(fused, 1, 2)       # (2, n_pad, M): layout plumbing

    return jax.jit(fn)


def gather_edge_endpoints(vertices, filtered_edges, *, n_pad, e_blk):
    """V_1 = vertices[edges[0]], V_2 = vertices[edges[1]] via Pallas."""
    n, m = vertices.shape
    fe = np.asarray(filtered_edges)
    n_edges = int(fe.shape[1])
    if n_edges == 0:
        z = jnp.zeros((0, m), vertices.dtype)
        return z, z
    if fe.min() < 0 or fe.max() >= n:
        raise ValueError("edge indices must lie in [0, num_vertices)")

    # Shape-stable padding (n_pad derives from the RAW edge count upstream);
    # padded rows gather vertex 0 and are sliced off afterwards.
    edges_pad = np.zeros((2, n_pad), dtype=np.int32)
    edges_pad[:, :n_edges] = fe
    edges_dev = jnp.asarray(edges_pad)
    vt = jnp.asarray(vertices).T               # one-time (M, N) transpose

    # TODO(synk): for vertex tables that exceed the per-TC VMEM budget, switch
    # vertices to memory_space=pl.ANY and gather rows with manual
    # make_async_copy double-buffering driven by scalar-prefetched indices.
    while True:
        single = _SINGLE_BUFFER_TABLE_OK[0]
        fn = _build_gather_fn(n, m, np.dtype(vertices.dtype), n_pad, e_blk, single)
        try:
            out = fn(edges_dev, vt)
            break
        except Exception:
            if not single:
                raise
            _SINGLE_BUFFER_TABLE_OK[0] = False   # retry with default buffering

    v_1 = out[0, :n_edges]
    v_2 = out[1, :n_edges]
    return v_1, v_2


class GraphLoss:
    """JAX/Pallas port of the (truncated) PyTorch GraphLoss module."""

    def __init__(self, singularity_cutoff=1000):
        self.singularity_cutoff = singularity_cutoff
        self._dedup_cache = {}

    def _dedup(self, edges_np):
        key = (edges_np.shape, np.ascontiguousarray(edges_np).tobytes())
        if key not in self._dedup_cache:
            self._dedup_cache[key] = filter_repeated_edges(edges_np)
        return self._dedup_cache[key]

    def forward(self, vertices, edges, edge_features, edge_matrices):
        edges_np = np.asarray(edges, dtype=np.int32)
        filtered_edges = self._dedup(edges_np)

        n, m = vertices.shape
        e_blk = _choose_e_blk(n, m, jnp.dtype(vertices.dtype).itemsize)
        # Pad to a static multiple of e_blk derived from the RAW edge count so
        # block shapes do not depend on the data-dependent dedup count.
        n_raw = max(1, edges_np.shape[1])
        n_pad = max(e_blk, -(-n_raw // e_blk) * e_blk)

        v_1, v_2 = gather_edge_endpoints(vertices, filtered_edges,
                                         n_pad=n_pad, e_blk=e_blk)
        # TODO(synk): the reference forward() is truncated right after forming
        # V_1/V_2 (no loss is ever computed or returned); we return the
        # gathered endpoint features, which is all the reference does.
        return v_1, v_2


if __name__ == "__main__":
    key = jax.random.PRNGKey(0)
    k_vert, k_edge, k_feat = jax.random.split(key, 3)

    n_vertices, m_features, n_edges = 16, 32, 8
    vertices = jax.random.normal(k_vert, (n_vertices, m_features), jnp.float32)

    # Random edges plus one exact duplicate and one reversed duplicate so the
    # dedup path is exercised deterministically.
    raw = jax.random.randint(k_edge, (2, n_edges - 2), 0, n_vertices, jnp.int32)
    raw_np = np.asarray(raw)
    dup = raw_np[:, :1]            # exact duplicate of edge 0
    rev = raw_np[::-1, 1:2]        # reversed duplicate of edge 1
    edges = np.concatenate([raw_np, dup, rev], axis=1).astype(np.int32)

    edge_features = jax.random.uniform(k_feat, (edges.shape[1],), jnp.float32)
    edge_matrices = None  # unused by the (truncated) reference forward

    # Vectorized dedup must match the sequential reference semantics.
    np.testing.assert_array_equal(filter_repeated_edges(edges),
                                  _filter_repeated_edges_ref(edges))

    loss_mod = GraphLoss()
    v_1, v_2 = loss_mod.forward(vertices, edges, edge_features, edge_matrices)
    jax.block_until_ready((v_1, v_2))

    # Second call exercises the cached dedup + cached jitted pallas_call path.
    v_1b, v_2b = loss_mod.forward(vertices, edges, edge_features, edge_matrices)
    jax.block_until_ready((v_1b, v_2b))

    # Reference check in plain JAX against the literal sequential dedup.
    filt = jnp.asarray(_filter_repeated_edges_ref(edges), dtype=jnp.int32)
    ref_v1 = vertices[filt[0]]
    ref_v2 = vertices[filt[1]]
    assert v_1.shape == ref_v1.shape and v_2.shape == ref_v2.shape
    np.testing.assert_allclose(np.asarray(v_1), np.asarray(ref_v1),
                               rtol=1e-6, atol=1e-6)
    np.testing.assert_allclose(np.asarray(v_2), np.asarray(ref_v2),
                               rtol=1e-6, atol=1e-6)
    np.testing.assert_allclose(np.asarray(v_1b), np.asarray(ref_v1),
                               rtol=1e-6, atol=1e-6)
    np.testing.assert_allclose(np.asarray(v_2b), np.asarray(ref_v2),
                               rtol=1e-6, atol=1e-6)

    print("KERNEL_OK")
</pallas_src>

<mosaic_0001>
module attributes {stable_mosaic.version = 11 : i64} {
  func.func @_gather_kernel(%arg0: i32, %arg1: memref<2x512xi32, #tpu.memory_space<vmem>>, %arg2: memref<32x16xf32, #tpu.memory_space<vmem>>, %arg3: memref<2x32x512xf32, #tpu.memory_space<vmem>>) attributes {dimension_semantics = [#tpu.dimension_semantics<parallel>], iteration_bounds = array<i64: 1>, scalar_prefetch = 0 : i64, scratch_operands = 0 : i64, tpu.core_type = #tpu.core_type<tc>, window_params = [{transform_indices = @transform_0, window_bounds = array<i64: 2, 512>}, {pipeline_mode = #tpu.pipeline_mode<synchronous>, transform_indices = @transform_1, window_bounds = array<i64: 32, 16>}, {transform_indices = @transform_2, window_bounds = array<i64: 2, 32, 512>}]} {
    %c0 = arith.constant 0 : index
    %c0_0 = arith.constant 0 : index
    %0 = vector.load %arg1[%c0, %c0_0] : memref<2x512xi32, #tpu.memory_space<vmem>>, vector<2x512xi32>
    %1 = vector.extract_strided_slice %0 {offsets = [0, 0], sizes = [1, 512], strides = [1, 1]} : vector<2x512xi32> to vector<1x512xi32>
    %2 = vector.extract_strided_slice %0 {offsets = [1, 0], sizes = [1, 512], strides = [1, 1]} : vector<2x512xi32> to vector<1x512xi32>
    %3 = tpu.concatenate %1, %2 in 1 : vector<1x512xi32>, vector<1x512xi32> -> vector<1x1024xi32>
    %4 = tpu.iota {dimensions = array<i32: 0>} : vector<16x1024xi32>
    %5 = vector.broadcast %3 : vector<1x1024xi32> to vector<16x1024xi32>
    %6 = arith.cmpi eq, %4, %5 : vector<16x1024xi32>
    %7 = arith.extui %6 : vector<16x1024xi1> to vector<16x1024xi32>
    %8 = arith.sitofp %7 : vector<16x1024xi32> to vector<16x1024xf32>
    %c0_1 = arith.constant 0 : index
    %c0_2 = arith.constant 0 : index
    %9 = vector.load %arg2[%c0_1, %c0_2] : memref<32x16xf32, #tpu.memory_space<vmem>>, vector<32x16xf32>
    %cst = arith.constant dense<0.000000e+00> : vector<32x1024xf32>
    %10 = tpu.matmul %9, %8, %cst {dimension_numbers = #tpu.dot_dimension_numbers<[1], [0], [0], [1], [0, 0, 1, 1], [], []>, precision = #tpu.contract_precision<fp32>} : vector<32x16xf32>, vector<16x1024xf32>, vector<32x1024xf32> -> vector<32x1024xf32>
    %11 = vector.extract_strided_slice %10 {offsets = [0, 0], sizes = [32, 512], strides = [1, 1]} : vector<32x1024xf32> to vector<32x512xf32>
    %c0_3 = arith.constant 0 : index
    %c0_4 = arith.constant 0 : index
    %c0_5 = arith.constant 0 : index
    %12 = vector.load %arg3[%c0_3, %c0_4, %c0_5] : memref<2x32x512xf32, #tpu.memory_space<vmem>>, vector<1x32x512xf32>
    %13 = vector.shape_cast %12 : vector<1x32x512xf32> to vector<32x512xf32>
    %14 = vector.shape_cast %11 : vector<32x512xf32> to vector<1x32x512xf32>
    tpu.vector_store %arg3[%c0_3, %c0_4, %c0_5], %14 {strides = array<i32>} : memref<2x32x512xf32, #tpu.memory_space<vmem>>, vector<1x32x512xf32>,
    %15 = vector.extract_strided_slice %10 {offsets = [0, 512], sizes = [32, 512], strides = [1, 1]} : vector<32x1024xf32> to vector<32x512xf32>
    %c1 = arith.constant 1 : index
    %c0_6 = arith.constant 0 : index
    %c0_7 = arith.constant 0 : index
    %16 = vector.load %arg3[%c1, %c0_6, %c0_7] : memref<2x32x512xf32, #tpu.memory_space<vmem>>, vector<1x32x512xf32>
    %17 = vector.shape_cast %16 : vector<1x32x512xf32> to vector<32x512xf32>
    %18 = vector.shape_cast %15 : vector<32x512xf32> to vector<1x32x512xf32>
    tpu.vector_store %arg3[%c1, %c0_6, %c0_7], %18 {strides = array<i32>} : memref<2x32x512xf32, #tpu.memory_space<vmem>>, vector<1x32x512xf32>,
    return
  }
  func.func @transform_0(%arg0: i32) -> (i32, i32) {
    %c0_i32 = arith.constant 0 : i32
    %c0_i32_0 = arith.constant 0 : i32
    return %c0_i32, %arg0 : i32, i32
  }
  func.func @transform_1(%arg0: i32) -> (i32, i32) {
    %c0_i32 = arith.constant 0 : i32
    %c0_i32_0 = arith.constant 0 : i32
    %c0_i32_1 = arith.constant 0 : i32
    return %c0_i32, %c0_i32_0 : i32, i32
  }
  func.func @transform_2(%arg0: i32) -> (i32, i32, i32) {
    %c0_i32 = arith.constant 0 : i32
    %c0_i32_0 = arith.constant 0 : i32
    %c0_i32_1 = arith.constant 0 : i32
    return %c0_i32, %c0_i32_0, %arg0 : i32, i32, i32
  }
}

module attributes {stable_mosaic.version = 11 : i64} {
  func.func @_gather_kernel(%arg0: i32, %arg1: memref<2x512xi32, #tpu.memory_space<vmem>>, %arg2: memref<32x16xf32, #tpu.memory_space<vmem>>, %arg3: memref<2x32x512xf32, #tpu.memory_space<vmem>>) attributes {dimension_semantics = [#tpu.dimension_semantics<parallel>], iteration_bounds = array<i64: 1>, scalar_prefetch = 0 : i64, scratch_operands = 0 : i64, tpu.core_type = #tpu.core_type<tc>, window_params = [{transform_indices = @transform_0, window_bounds = array<i64: 2, 512>}, {pipeline_mode = #tpu.pipeline_mode<synchronous>, transform_indices = @transform_1, window_bounds = array<i64: 32, 16>}, {transform_indices = @transform_2, window_bounds = array<i64: 2, 32, 512>}]} {
    %c0 = arith.constant 0 : index
    %c0_0 = arith.constant 0 : index
    %0 = vector.load %arg1[%c0, %c0_0] : memref<2x512xi32, #tpu.memory_space<vmem>>, vector<2x512xi32>
    %1 = vector.extract_strided_slice %0 {offsets = [0, 0], sizes = [1, 512], strides = [1, 1]} : vector<2x512xi32> to vector<1x512xi32>
    %2 = vector.extract_strided_slice %0 {offsets = [1, 0], sizes = [1, 512], strides = [1, 1]} : vector<2x512xi32> to vector<1x512xi32>
    %3 = tpu.concatenate %1, %2 in 1 : vector<1x512xi32>, vector<1x512xi32> -> vector<1x1024xi32>
    %4 = tpu.iota {dimensions = array<i32: 0>} : vector<16x1024xi32>
    %5 = vector.broadcast %3 : vector<1x1024xi32> to vector<16x1024xi32>
    %6 = arith.cmpi eq, %4, %5 : vector<16x1024xi32>
    %7 = arith.extui %6 : vector<16x1024xi1> to vector<16x1024xi32>
    %8 = arith.sitofp %7 : vector<16x1024xi32> to vector<16x1024xf32>
    %c0_1 = arith.constant 0 : index
    %c0_2 = arith.constant 0 : index
    %9 = vector.load %arg2[%c0_1, %c0_2] : memref<32x16xf32, #tpu.memory_space<vmem>>, vector<32x16xf32>
    %cst = arith.constant dense<0.000000e+00> : vector<32x1024xf32>
    %10 = tpu.matmul %9, %8, %cst {dimension_numbers = #tpu.dot_dimension_numbers<[1], [0], [0], [1], [0, 0, 1, 1], [], []>, precision = #tpu.contract_precision<fp32>} : vector<32x16xf32>, vector<16x1024xf32>, vector<32x1024xf32> -> vector<32x1024xf32>
    %11 = vector.extract_strided_slice %10 {offsets = [0, 0], sizes = [32, 512], strides = [1, 1]} : vector<32x1024xf32> to vector<32x512xf32>
    %c0_3 = arith.constant 0 : index
    %c0_4 = arith.constant 0 : index
    %c0_5 = arith.constant 0 : index
    %12 = vector.load %arg3[%c0_3, %c0_4, %c0_5] : memref<2x32x512xf32, #tpu.memory_space<vmem>>, vector<1x32x512xf32>
    %13 = vector.shape_cast %12 : vector<1x32x512xf32> to vector<32x512xf32>
    %14 = vector.shape_cast %11 : vector<32x512xf32> to vector<1x32x512xf32>
    tpu.vector_store %arg3[%c0_3, %c0_4, %c0_5], %14 {strides = array<i32>} : memref<2x32x512xf32, #tpu.memory_space<vmem>>, vector<1x32x512xf32>,
    %15 = vector.extract_strided_slice %10 {offsets = [0, 512], sizes = [32, 512], strides = [1, 1]} : vector<32x1024xf32> to vector<32x512xf32>
    %c1 = arith.constant 1 : index
    %c0_6 = arith.constant 0 : index
    %c0_7 = arith.constant 0 : index
    %16 = vector.load %arg3[%c1, %c0_6, %c0_7] : memref<2x32x512xf32, #tpu.memory_space<vmem>>, vector<1x32x512xf32>
    %17 = vector.shape_cast %16 : vector<1x32x512xf32> to vector<32x512xf32>
    %18 = vector.shape_cast %15 : vector<32x512xf32> to vector<1x32x512xf32>
    tpu.vector_store %arg3[%c1, %c0_6, %c0_7], %18 {strides = array<i32>} : memref<2x32x512xf32, #tpu.memory_space<vmem>>, vector<1x32x512xf32>,
    return
  }
  func.func @transform_0(%arg0: i32) -> (i32, i32) {
    %c0_i32 = arith.constant 0 : i32
    %c0_i32_0 = arith.constant 0 : i32
    return %c0_i32, %arg0 : i32, i32
  }
  func.func @transform_1(%arg0: i32) -> (i32, i32) {
    %c0_i32 = arith.constant 0 : i32
    %c0_i32_0 = arith.constant 0 : i32
    %c0_i32_1 = arith.constant 0 : i32
    return %c0_i32, %c0_i32_0 : i32, i32
  }
  func.func @transform_2(%arg0: i32) -> (i32, i32, i32) {
    %c0_i32 = arith.constant 0 : i32
    %c0_i32_0 = arith.constant 0 : i32
    %c0_i32_1 = arith.constant 0 : i32
    return %c0_i32, %c0_i32_0, %arg0 : i32, i32, i32
  }
}

</mosaic_0001>

<llo_original>
// kernel: fn.1
$region0: #{fn.1}
  #allocation0 [shape = 'u32[]', space=smem, size = 0x4, offset = 0x4, fixed_abs, tag = 'smem constant byte address 0x4 - core index']
  #allocation1 [shape = 'u32[144,128]{1,0:T(1,128)}', space=vmem, size = 0x12000, scoped, tag = 'internal scratch']
  %s0 = inlined_call_operand.vmem [shape: s32[2,512], index: 0, kind: input, shape index: {}]
  %s1 = inlined_call_operand.vmem [shape: f32[32,16], index: 1, kind: input, shape index: {}]
  %s2 = inlined_call_operand.hbm [shape: f32[2,32,512], index: 2, kind: output, shape index: {}]
  %s3 = sld [smem:[#allocation0]]
  $region18: #{fn.1} parent=0
    _
  %s5 = ssub.s32 1, %s3
  %s6 = scalar_select 0, %s5, %s3
  $region1: #{fn.1} parent=0
    #allocation2 [shape = 'u8[131072]{0}', space=vmem, size = 0x20000, scoped, tag = 'output window, operand 0, single buffered']
    #allocation3 [shape = 's32[1]{0}', space=sflag, size = 0x4, scoped, tag = 'scoped memory for fn.1']
    %7 = vsyncpa [#allocation3], 0
    // Predicated region
    $region2: #{fn.1} parent=1 // pred_check
      _
    $region3: #{fn.1} parent=1 // pred_check_branch
      %9 = sbr.rel (0) target = $region5
    $region4: #{fn.1} parent=1 // pred_region
      _
    $region5: #{fn.1} parent=1 // pred_fallthru
      _
    // Predicated region
    $region6: #{fn.1} parent=1 // pred_check
      _
    $region7: #{fn.1} parent=1 // pred_check_branch
      %11 = sbr.rel (0) target = $region9
    $region8: #{fn.1} parent=1 // pred_region
      _
    $region9: #{fn.1} parent=1 // pred_fallthru
      _
    %v12 = vld [vmem:[%s0] sm:$0xff]
    %v13 = vlaneseq
    %v14 = vshrl.u32 %v13, 7
    %v15 = vsub.s32 0, %v14
    %v16 = vrot.slane %v12, %v15
    %v17 = vlaneseq
    %v18 = vshrl.u32 %v17, 7
    %v19 = vsub.s32 2, %v18
    %v20 = vrot.slane %v12, %v19
    %v21 = vlaneseq
    %v22 = vshrl.u32 %v21, 7
    %v23 = vsub.s32 4, %v22
    %v24 = vrot.slane %v12, %v23
    %v25 = vlaneseq
    %v26 = vshrl.u32 %v25, 7
    %v27 = vsub.s32 6, %v26
    %v28 = vrot.slane %v12, %v27
    %v29 = vlaneseq
    %v30 = vshrl.u32 %v29, 7
    %v31 = vsub.s32 1, %v30
    %v32 = vrot.slane %v12, %v31
    %v33 = vlaneseq
    %v34 = vshrl.u32 %v33, 7
    %v35 = vsub.s32 3, %v34
    %v36 = vrot.slane %v12, %v35
    %v37 = vlaneseq
    %v38 = vshrl.u32 %v37, 7
    %v39 = vsub.s32 5, %v38
    %v40 = vrot.slane %v12, %v39
    %v41 = vlaneseq
    %v42 = vshrl.u32 %v41, 7
    %v43 = vsub.s32 7, %v42
    %v44 = vrot.slane %v12, %v43
    %v45 = vlaneseq
    %v46 = vshrl.u32 %v45, 7
    %v47 = vadd.s32 %v46, 8
    %v48 = vlaneseq
    %v49 = vshrl.u32 %v48, 7
    %v50 = vsub.s32 0, %v49
    %v51 = vrot.slane %v16, %v50
    %v52 = vlaneseq
    %v53 = vshrl.u32 %v52, 7
    %v54 = vsub.s32 0, %v53
    %v55 = vrot.slane %v20, %v54
    %v56 = vlaneseq
    %v57 = vshrl.u32 %v56, 7
    %v58 = vsub.s32 0, %v57
    %v59 = vrot.slane %v24, %v58
    %v60 = vlaneseq
    %v61 = vshrl.u32 %v60, 7
    %v62 = vsub.s32 0, %v61
    %v63 = vrot.slane %v28, %v62
    %v64 = vlaneseq
    %v65 = vshrl.u32 %v64, 7
    %v66 = vsub.s32 0, %v65
    %v67 = vrot.slane %v32, %v66
    %v68 = vlaneseq
    %v69 = vshrl.u32 %v68, 7
    %v70 = vsub.s32 0, %v69
    %v71 = vrot.slane %v36, %v70
    %v72 = vlaneseq
    %v73 = vshrl.u32 %v72, 7
    %v74 = vsub.s32 0, %v73
    %v75 = vrot.slane %v40, %v74
    %v76 = vlaneseq
    %v77 = vshrl.u32 %v76, 7
    %v78 = vsub.s32 0, %v77
    %v79 = vrot.slane %v44, %v78
    %vm80 = vcmp.eq.s32.totalorder %v46, %v51
    %vm81 = vcmp.eq.s32.totalorder %v46, %v55
    %vm82 = vcmp.eq.s32.totalorder %v46, %v59
    %vm83 = vcmp.eq.s32.totalorder %v46, %v63
    %vm84 = vcmp.eq.s32.totalorder %v46, %v67
    %vm85 = vcmp.eq.s32.totalorder %v46, %v71
    %vm86 = vcmp.eq.s32.totalorder %v46, %v75
    %vm87 = vcmp.eq.s32.totalorder %v46, %v79
    %vm88 = vcmp.eq.s32.totalorder %v47, %v51
    %vm89 = vcmp.eq.s32.totalorder %v47, %v55
    %vm90 = vcmp.eq.s32.totalorder %v47, %v59
    %vm91 = vcmp.eq.s32.totalorder %v47, %v63
    %vm92 = vcmp.eq.s32.totalorder %v47, %v67
    %vm93 = vcmp.eq.s32.totalorder %v47, %v71
    %vm94 = vcmp.eq.s32.totalorder %v47, %v75
    %vm95 = vcmp.eq.s32.totalorder %v47, %v79
    %v96 = vsel %vm80, 1, 0
    %v97 = vsel %vm81, 1, 0
    %v98 = vsel %vm82, 1, 0
    %v99 = vsel %vm83, 1, 0
    %v100 = vsel %vm84, 1, 0
    %v101 = vsel %vm85, 1, 0
    %v102 = vsel %vm86, 1, 0
    %v103 = vsel %vm87, 1, 0
    %v104 = vsel %vm88, 1, 0
    %v105 = vsel %vm89, 1, 0
    %v106 = vsel %vm90, 1, 0
    %v107 = vsel %vm91, 1, 0
    %v108 = vsel %vm92, 1, 0
    %v109 = vsel %vm93, 1, 0
    %v110 = vsel %vm94, 1, 0
    %v111 = vsel %vm95, 1, 0
    %v112 = vcvt.s32.f32 %v96
    %v113 = vcvt.s32.f32 %v97
    %v114 = vcvt.s32.f32 %v98
    %v115 = vcvt.s32.f32 %v99
    %v116 = vcvt.s32.f32 %v100
    %v117 = vcvt.s32.f32 %v101
    %v118 = vcvt.s32.f32 %v102
    %v119 = vcvt.s32.f32 %v103
    %v120 = vcvt.s32.f32 %v104
    %v121 = vcvt.s32.f32 %v105
    %v122 = vcvt.s32.f32 %v106
    %v123 = vcvt.s32.f32 %v107
    %v124 = vcvt.s32.f32 %v108
    %v125 = vcvt.s32.f32 %v109
    %v126 = vcvt.s32.f32 %v110
    %v127 = vcvt.s32.f32 %v111
    %v128 = vld [vmem:[%s1] sm:$0xff]
    %v129 = vld [vmem:[%s1 + $0x8] sm:$0xff]
    %v130 = vld [vmem:[%s1 + $0x10] sm:$0xff]
    %v131 = vld [vmem:[%s1 + $0x18] sm:$0xff]
    %vm132 = vcmask 130048
    %v134 = vsel %vm132, %v128, 0
    %v137 = vsel %vm132, %v129, 0
    %v140 = vsel %vm132, %v130, 0
    %v143 = vsel %vm132, %v131, 0
    %145 = vmatprep.subr.mxu0 0.0
    %146 = vmatpush1.msra.mxu0 0.0
    %147 = vmatprep.subr.mxu0 0.0
    %148 = vmatpush1.msra.mxu0 0.0
    %149 = vmatprep.subr.mxu0 0.0
    %150 = vmatpush1.msra.mxu0 0.0
    %151 = vmatprep.subr.mxu0 0.0
    %152 = vmatpush1.msra.mxu0 0.0
    %153 = vmatprep.subr.mxu0 0.0
    %154 = vmatpush1.msra.mxu0 0.0
    %155 = vmatprep.subr.mxu0 0.0
    %156 = vmatpush1.msra.mxu0 0.0
    %157 = vmatprep.subr.mxu0 0.0
    %158 = vmatpush1.msra.mxu0 0.0
    %159 = vmatprep.subr.mxu0 0.0
    %160 = vmatpush1.msra.mxu0 0.0
    %161 = vmatprep.subr.mxu0 0.0
    %162 = vmatpush1.msra.mxu0 0.0
    %163 = vmatprep.subr.mxu0 0.0
    %164 = vmatpush1.msra.mxu0 0.0
    %165 = vmatprep.subr.mxu0 0.0
    %166 = vmatpush1.msra.mxu0 0.0
    %167 = vmatprep.subr.mxu0 0.0
    %168 = vmatpush1.msra.mxu0 0.0
    %169 = vmatprep.subr.mxu0 0.0
    %170 = vmatpush1.msra.mxu0 0.0
    %171 = vmatprep.subr.mxu0 0.0
    %172 = vmatpush1.msra.mxu0 0.0
    %v173 = vand.u32 %v121, 4294901760
    %174 = vmatprep.subr.mxu0 %v173
    %v175 = vand.u32 %v120, 4294901760
    %176 = vmatpush1.msra.mxu0 %v175
    %v177 = vand.u32 %v113, 4294901760
    %178 = vmatprep.subr.mxu0 %v177
    %v179 = vand.u32 %v112, 4294901760
    %180 = vmatpush1.msra.mxu0 %v179
    %181 = vmatprep.subr.mxu0 0.0
    %182 = vmatpush2.msra.mxu0 0.0
    %183 = vmatprep.subr.mxu0 0.0
    %184 = vmatpush2.msra.mxu0 0.0
    %185 = vmatprep.subr.mxu0 0.0
    %186 = vmatpush2.msra.mxu0 0.0
    %187 = vmatprep.subr.mxu0 0.0
    %188 = vmatpush2.msra.mxu0 0.0
    %189 = vmatprep.subr.mxu0 0.0
    %190 = vmatpush2.msra.mxu0 0.0
    %191 = vmatprep.subr.mxu0 0.0
    %192 = vmatpush2.msra.mxu0 0.0
    %193 = vmatprep.subr.mxu0 0.0
    %194 = vmatpush2.msra.mxu0 0.0
    %195 = vmatprep.subr.mxu0 0.0
    %196 = vmatpush2.msra.mxu0 0.0
    %197 = vmatprep.subr.mxu0 0.0
    %198 = vmatpush2.msra.mxu0 0.0
    %199 = vmatprep.subr.mxu0 0.0
    %200 = vmatpush2.msra.mxu0 0.0
    %201 = vmatprep.subr.mxu0 0.0
    %202 = vmatpush2.msra.mxu0 0.0
    %203 = vmatprep.subr.mxu0 0.0
    %204 = vmatpush2.msra.mxu0 0.0
    %205 = vmatprep.subr.mxu0 0.0
    %206 = vmatpush2.msra.mxu0 0.0
    %207 = vmatprep.subr.mxu0 0.0
    %208 = vmatpush2.msra.mxu0 0.0
    %209 = vmatprep.subr.mxu0 0.0
    %210 = vmatpush2.msra.mxu0 0.0
    %211 = vmatprep.subr.mxu0 0.0
    %212 = vmatpush2.msra.mxu0 0.0
    %213 = vmatprep.mubr.f32.mxu0 0.0
    %v214 = vand.u32 %v134, 4294901760
    %v215 = vsub.f32 %v134, %v214
    %v216 = vand.u32 %v215, 4294901760
    %v217 = vsub.f32 %v215, %v216
    %v218 = vand.u32 %v217, 4294901760
    %219 = vmatmul.mubr.f32.gmra.mxu0 %v218
    %v220 = vpop.f32.mrf.mxu0
    %v221 = vadd.f32 0.0, %v220
    %v222 = vpop.f32.mrf.mxu0
    %v223 = vadd.f32 0.0, %v222
    %224 = vmatprep.mubr.f32.mxu0 0.0
    %v225 = vand.u32 %v137, 4294901760
    %v226 = vsub.f32 %v137, %v225
    %v227 = vand.u32 %v226, 4294901760
    %v228 = vsub.f32 %v226, %v227
    %v229 = vand.u32 %v228, 4294901760
    %230 = vmatmul.mubr.f32.gmra.mxu0 %v229
    %v231 = vpop.f32.mrf.mxu0
    %v232 = vadd.f32 0.0, %v231
    %v233 = vpop.f32.mrf.mxu0
    %v234 = vadd.f32 0.0, %v233
    %235 = vmatprep.mubr.f32.mxu0 0.0
    %v236 = vand.u32 %v140, 4294901760
    %v237 = vsub.f32 %v140, %v236
    %v238 = vand.u32 %v237, 4294901760
    %v239 = vsub.f32 %v237, %v238
    %v240 = vand.u32 %v239, 4294901760
    %241 = vmatmul.mubr.f32.gmra.mxu0 %v240
    %v242 = vpop.f32.mrf.mxu0
    %v243 = vadd.f32 0.0, %v242
    %v244 = vpop.f32.mrf.mxu0
    %v245 = vadd.f32 0.0, %v244
    %246 = vmatprep.mubr.f32.mxu0 0.0
    %v247 = vand.u32 %v143, 4294901760
    %v248 = vsub.f32 %v143, %v247
    %v249 = vand.u32 %v248, 4294901760
    %v250 = vsub.f32 %v248, %v249
    %v251 = vand.u32 %v250, 4294901760
    %252 = vmatmul.mubr.f32.gmra.mxu0 %v251
    %v253 = vpop.f32.mrf.mxu0
    %v254 = vadd.f32 0.0, %v253
    %v255 = vpop.f32.mrf.mxu0
    %v256 = vadd.f32 0.0, %v255
    %257 = vdwg.mxu0
    %258 = vmatprep.subr.mxu0 0.0
    %259 = vmatpush1.msra.mxu0 0.0
    %260 = vmatprep.subr.mxu0 0.0
    %261 = vmatpush1.msra.mxu0 0.0
    %262 = vmatprep.subr.mxu0 0.0
    %263 = vmatpush1.msra.mxu0 0.0
    %264 = vmatprep.subr.mxu0 0.0
    %265 = vmatpush1.msra.mxu0 0.0
    %266 = vmatprep.subr.mxu0 0.0
    %267 = vmatpush1.msra.mxu0 0.0
    %268 = vmatprep.subr.mxu0 0.0
    %269 = vmatpush1.msra.mxu0 0.0
    %270 = vmatprep.subr.mxu0 0.0
    %271 = vmatpush1.msra.mxu0 0.0
    %272 = vmatprep.subr.mxu0 0.0
    %273 = vmatpush1.msra.mxu0 0.0
    %274 = vmatprep.subr.mxu0 0.0
    %275 = vmatpush1.msra.mxu0 0.0
    %276 = vmatprep.subr.mxu0 0.0
    %277 = vmatpush1.msra.mxu0 0.0
    %278 = vmatprep.subr.mxu0 0.0
    %279 = vmatpush1.msra.mxu0 0.0
    %280 = vmatprep.subr.mxu0 0.0
    %281 = vmatpush1.msra.mxu0 0.0
    %282 = vmatprep.subr.mxu0 0.0
    %283 = vmatpush1.msra.mxu0 0.0
    %284 = vmatprep.subr.mxu0 0.0
    %285 = vmatpush1.msra.mxu0 0.0
    %v286 = vand.u32 %v121, 4294901760
    %v287 = vsub.f32 %v121, %v286
    %v288 = vand.u32 %v287, 4294901760
    %v289 = vsub.f32 %v287, %v288
    %v290 = vand.u32 %v289, 4294901760
    %291 = vmatprep.subr.mxu0 %v290
    %v292 = vand.u32 %v120, 4294901760
    %v293 = vsub.f32 %v120, %v292
    %v294 = vand.u32 %v293, 4294901760
    %v295 = vsub.f32 %v293, %v294
    %v296 = vand.u32 %v295, 4294901760
    %297 = vmatpush1.msra.mxu0 %v296
    %v298 = vand.u32 %v113, 4294901760
    %v299 = vsub.f32 %v113, %v298
    %v300 = vand.u32 %v299, 4294901760
    %v301 = vsub.f32 %v299, %v300
    %v302 = vand.u32 %v301, 4294901760
    %303 = vmatprep.subr.mxu0 %v302
    %v304 = vand.u32 %v112, 4294901760
    %v305 = vsub.f32 %v112, %v304
    %v306 = vand.u32 %v305, 4294901760
    %v307 = vsub.f32 %v305, %v306
    %v308 = vand.u32 %v307, 4294901760
    %309 = vmatpush1.msra.mxu0 %v308
    %310 = vmatprep.subr.mxu0 0.0
    %311 = vmatpush2.msra.mxu0 0.0
    %312 = vmatprep.subr.mxu0 0.0
    %313 = vmatpush2.msra.mxu0 0.0
    %314 = vmatprep.subr.mxu0 0.0
    %315 = vmatpush2.msra.mxu0 0.0
    %316 = vmatprep.subr.mxu0 0.0
    %317 = vmatpush2.msra.mxu0 0.0
    %318 = vmatprep.subr.mxu0 0.0
    %319 = vmatpush2.msra.mxu0 0.0
    %320 = vmatprep.subr.mxu0 0.0
    %321 = vmatpush2.msra.mxu0 0.0
    %322 = vmatprep.subr.mxu0 0.0
    %323 = vmatpush2.msra.mxu0 0.0
    %324 = vmatprep.subr.mxu0 0.0
    %325 = vmatpush2.msra.mxu0 0.0
    %326 = vmatprep.subr.mxu0 0.0
    %327 = vmatpush2.msra.mxu0 0.0
    %328 = vmatprep.subr.mxu0 0.0
    %329 = vmatpush2.msra.mxu0 0.0
    %330 = vmatprep.subr.mxu0 0.0
    %331 = vmatpush2.msra.mxu0 0.0
    %332 = vmatprep.subr.mxu0 0.0
    %333 = vmatpush2.msra.mxu0 0.0
    %334 = vmatprep.subr.mxu0 0.0
    %335 = vmatpush2.msra.mxu0 0.0
    %336 = vmatprep.subr.mxu0 0.0
    %337 = vmatpush2.msra.mxu0 0.0
    %338 = vmatprep.subr.mxu0 0.0
    %339 = vmatpush2.msra.mxu0 0.0
    %340 = vmatprep.subr.mxu0 0.0
    %341 = vmatpush2.msra.mxu0 0.0
    %342 = vmatprep.mubr.f32.mxu0 0.0
    %v343 = vand.u32 %v134, 4294901760
    %344 = vmatmul.mubr.f32.gmra.mxu0 %v343
    %v345 = vpop.f32.mrf.mxu0
    %v346 = vadd.f32 %v221, %v345
    %v347 = vpop.f32.mrf.mxu0
    %v348 = vadd.f32 %v223, %v347
    %349 = vmatprep.mubr.f32.mxu0 0.0
    %v350 = vand.u32 %v137, 4294901760
    %351 = vmatmul.mubr.f32.gmra.mxu0 %v350
    %v352 = vpop.f32.mrf.mxu0
    %v353 = vadd.f32 %v232, %v352
    %v354 = vpop.f32.mrf.mxu0
    %v355 = vadd.f32 %v234, %v354
    %356 = vmatprep.mubr.f32.mxu0 0.0
    %v357 = vand.u32 %v140, 4294901760
    %358 = vmatmul.mubr.f32.gmra.mxu0 %v357
    %v359 = vpop.f32.mrf.mxu0
    %v360 = vadd.f32 %v243, %v359
    %v361 = vpop.f32.mrf.mxu0
    %v362 = vadd.f32 %v245, %v361
    %363 = vmatprep.mubr.f32.mxu0 0.0
    %v364 = vand.u32 %v143, 4294901760
    %365 = vmatmul.mubr.f32.gmra.mxu0 %v364
    %v366 = vpop.f32.mrf.mxu0
    %v367 = vadd.f32 %v254, %v366
    %v368 = vpop.f32.mrf.mxu0
    %v369 = vadd.f32 %v256, %v368
    %370 = vdwg.mxu0
    %371 = vmatprep.subr.mxu0 0.0
    %372 = vmatpush1.msra.mxu0 0.0
    %373 = vmatprep.subr.mxu0 0.0
    %374 = vmatpush1.msra.mxu0 0.0
    %375 = vmatprep.subr.mxu0 0.0
    %376 = vmatpush1.msra.mxu0 0.0
    %377 = vmatprep.subr.mxu0 0.0
    %378 = vmatpush1.msra.mxu0 0.0
    %379 = vmatprep.subr.mxu0 0.0
    %380 = vmatpush1.msra.mxu0 0.0
    %381 = vmatprep.subr.mxu0 0.0
    %382 = vmatpush1.msra.mxu0 0.0
    %383 = vmatprep.subr.mxu0 0.0
    %384 = vmatpush1.msra.mxu0 0.0
    %385 = vmatprep.subr.mxu0 0.0
    %386 = vmatpush1.msra.mxu0 0.0
    %387 = vmatprep.subr.mxu0 0.0
    %388 = vmatpush1.msra.mxu0 0.0
    %389 = vmatprep.subr.mxu0 0.0
    %390 = vmatpush1.msra.mxu0 0.0
    %391 = vmatprep.subr.mxu0 0.0
    %392 = vmatpush1.msra.mxu0 0.0
    %393 = vmatprep.subr.mxu0 0.0
    %394 = vmatpush1.msra.mxu0 0.0
    %395 = vmatprep.subr.mxu0 0.0
    %396 = vmatpush1.msra.mxu0 0.0
    %397 = vmatprep.subr.mxu0 0.0
    %398 = vmatpush1.msra.mxu0 0.0
    %v399 = vand.u32 %v121, 4294901760
    %v400 = vsub.f32 %v121, %v399
    %401 = vmatprep.subr.mxu0 %v400
    %v402 = vand.u32 %v120, 4294901760
    %v403 = vsub.f32 %v120, %v402
    %404 = vmatpush1.msra.mxu0 %v403
    %v405 = vand.u32 %v113, 4294901760
    %v406 = vsub.f32 %v113, %v405
    %407 = vmatprep.subr.mxu0 %v406
    %v408 = vand.u32 %v112, 4294901760
    %v409 = vsub.f32 %v112, %v408
    %410 = vmatpush1.msra.mxu0 %v409
    %411 = vmatprep.subr.mxu0 0.0
    %412 = vmatpush2.msra.mxu0 0.0
    %413 = vmatprep.subr.mxu0 0.0
    %414 = vmatpush2.msra.mxu0 0.0
    %415 = vmatprep.subr.mxu0 0.0
    %416 = vmatpush2.msra.mxu0 0.0
    %417 = vmatprep.subr.mxu0 0.0
    %418 = vmatpush2.msra.mxu0 0.0
    %419 = vmatprep.subr.mxu0 0.0
    %420 = vmatpush2.msra.mxu0 0.0
    %421 = vmatprep.subr.mxu0 0.0
    %422 = vmatpush2.msra.mxu0 0.0
    %423 = vmatprep.subr.mxu0 0.0
    %424 = vmatpush2.msra.mxu0 0.0
    %425 = vmatprep.subr.mxu0 0.0
    %426 = vmatpush2.msra.mxu0 0.0
    %427 = vmatprep.subr.mxu0 0.0
    %428 = vmatpush2.msra.mxu0 0.0
    %429 = vmatprep.subr.mxu0 0.0
    %430 = vmatpush2.msra.mxu0 0.0
    %431 = vmatprep.subr.mxu0 0.0
    %432 = vmatpush2.msra.mxu0 0.0
    %433 = vmatprep.subr.mxu0 0.0
    %434 = vmatpush2.msra.mxu0 0.0
    %435 = vmatprep.subr.mxu0 0.0
    %436 = vmatpush2.msra.mxu0 0.0
    %437 = vmatprep.subr.mxu0 0.0
    %438 = vmatpush2.msra.mxu0 0.0
    %439 = vmatprep.subr.mxu0 0.0
    %440 = vmatpush2.msra.mxu0 0.0
    %441 = vmatprep.subr.mxu0 0.0
    %442 = vmatpush2.msra.mxu0 0.0
    %443 = vmatprep.mubr.f32.mxu0 0.0
    %v444 = vand.u32 %v134, 4294901760
    %v445 = vsub.f32 %v134, %v444
    %446 = vmatmul.mubr.f32.gmra.mxu0 %v445
    %v447 = vpop.f32.mrf.mxu0
    %v448 = vadd.f32 %v346, %v447
    %v449 = vpop.f32.mrf.mxu0
    %v450 = vadd.f32 %v348, %v449
    %451 = vmatprep.mubr.f32.mxu0 0.0
    %v452 = vand.u32 %v137, 4294901760
    %v453 = vsub.f32 %v137, %v452
    %454 = vmatmul.mubr.f32.gmra.mxu0 %v453
    %v455 = vpop.f32.mrf.mxu0
    %v456 = vadd.f32 %v353, %v455
    %v457 = vpop.f32.mrf.mxu0
    %v458 = vadd.f32 %v355, %v457
    %459 = vmatprep.mubr.f32.mxu0 0.0
    %v460 = vand.u32 %v140, 4294901760
    %v461 = vsub.f32 %v140, %v460
    %462 = vmatmul.mubr.f32.gmra.mxu0 %v461
    %v463 = vpop.f32.mrf.mxu0
    %v464 = vadd.f32 %v360, %v463
    %v465 = vpop.f32.mrf.mxu0
    %v466 = vadd.f32 %v362, %v465
    %467 = vmatprep.mubr.f32.mxu0 0.0
    %v468 = vand.u32 %v143, 4294901760
    %v469 = vsub.f32 %v143, %v468
    %470 = vmatmul.mubr.f32.gmra.mxu0 %v469
    %v471 = vpop.f32.mrf.mxu0
    %v472 = vadd.f32 %v367, %v471
    %v473 = vpop.f32.mrf.mxu0
    %v474 = vadd.f32 %v369, %v473
    %475 = vdwg.mxu0
    %476 = vmatprep.subr.mxu0 0.0
    %477 = vmatpush1.msra.mxu0 0.0
    %478 = vmatprep.subr.mxu0 0.0
    %479 = vmatpush1.msra.mxu0 0.0
    %480 = vmatprep.subr.mxu0 0.0
    %481 = vmatpush1.msra.mxu0 0.0
    %482 = vmatprep.subr.mxu0 0.0
    %483 = vmatpush1.msra.mxu0 0.0
    %484 = vmatprep.subr.mxu0 0.0
    %485 = vmatpush1.msra.mxu0 0.0
    %486 = vmatprep.subr.mxu0 0.0
    %487 = vmatpush1.msra.mxu0 0.0
    %488 = vmatprep.subr.mxu0 0.0
    %489 = vmatpush1.msra.mxu0 0.0
    %490 = vmatprep.subr.mxu0 0.0
    %491 = vmatpush1.msra.mxu0 0.0
    %492 = vmatprep.subr.mxu0 0.0
    %493 = vmatpush1.msra.mxu0 0.0
    %494 = vmatprep.subr.mxu0 0.0
    %495 = vmatpush1.msra.mxu0 0.0
    %496 = vmatprep.subr.mxu0 0.0
    %497 = vmatpush1.msra.mxu0 0.0
    %498 = vmatprep.subr.mxu0 0.0
    %499 = vmatpush1.msra.mxu0 0.0
    %500 = vmatprep.subr.mxu0 0.0
    %501 = vmatpush1.msra.mxu0 0.0
    %502 = vmatprep.subr.mxu0 0.0
    %503 = vmatpush1.msra.mxu0 0.0
    %v504 = vand.u32 %v121, 4294901760
    %505 = vmatprep.subr.mxu0 %v504
    %v506 = vand.u32 %v120, 4294901760
    %507 = vmatpush1.msra.mxu0 %v506
    %v508 = vand.u32 %v113, 4294901760
    %509 = vmatprep.subr.mxu0 %v508
    %v510 = vand.u32 %v112, 4294901760
    %511 = vmatpush1.msra.mxu0 %v510
    %512 = vmatprep.subr.mxu0 0.0
    %513 = vmatpush2.msra.mxu0 0.0
    %514 = vmatprep.subr.mxu0 0.0
    %515 = vmatpush2.msra.mxu0 0.0
    %516 = vmatprep.subr.mxu0 0.0
    %517 = vmatpush2.msra.mxu0 0.0
    %518 = vmatprep.subr.mxu0 0.0
    %519 = vmatpush2.msra.mxu0 0.0
    %520 = vmatprep.subr.mxu0 0.0
    %521 = vmatpush2.msra.mxu0 0.0
    %522 = vmatprep.subr.mxu0 0.0
    %523 = vmatpush2.msra.mxu0 0.0
    %524 = vmatprep.subr.mxu0 0.0
    %525 = vmatpush2.msra.mxu0 0.0
    %526 = vmatprep.subr.mxu0 0.0
    %527 = vmatpush2.msra.mxu0 0.0
    %528 = vmatprep.subr.mxu0 0.0
    %529 = vmatpush2.msra.mxu0 0.0
    %530 = vmatprep.subr.mxu0 0.0
    %531 = vmatpush2.msra.mxu0 0.0
    %532 = vmatprep.subr.mxu0 0.0
    %533 = vmatpush2.msra.mxu0 0.0
    %534 = vmatprep.subr.mxu0 0.0
    %535 = vmatpush2.msra.mxu0 0.0
    %536 = vmatprep.subr.mxu0 0.0
    %537 = vmatpush2.msra.mxu0 0.0
    %538 = vmatprep.subr.mxu0 0.0
    %539 = vmatpush2.msra.mxu0 0.0
    %540 = vmatprep.subr.mxu0 0.0
    %541 = vmatpush2.msra.mxu0 0.0
    %542 = vmatprep.subr.mxu0 0.0
    %543 = vmatpush2.msra.mxu0 0.0
    %544 = vmatprep.mubr.f32.mxu0 0.0
    %v545 = vand.u32 %v134, 4294901760
    %v546 = vsub.f32 %v134, %v545
    %v547 = vand.u32 %v546, 4294901760
    %548 = vmatmul.mubr.f32.gmra.mxu0 %v547
    %v549 = vpop.f32.mrf.mxu0
    %v550 = vadd.f32 %v448, %v549
    %v551 = vpop.f32.mrf.mxu0
    %v552 = vadd.f32 %v450, %v551
    %553 = vmatprep.mubr.f32.mxu0 0.0
    %v554 = vand.u32 %v137, 4294901760
    %v555 = vsub.f32 %v137, %v554
    %v556 = vand.u32 %v555, 4294901760
    %557 = vmatmul.mubr.f32.gmra.mxu0 %v556
    %v558 = vpop.f32.mrf.mxu0
    %v559 = vadd.f32 %v456, %v558
    %v560 = vpop.f32.mrf.mxu0
    %v561 = vadd.f32 %v458, %v560
    %562 = vmatprep.mubr.f32.mxu0 0.0
    %v563 = vand.u32 %v140, 4294901760
    %v564 = vsub.f32 %v140, %v563
    %v565 = vand.u32 %v564, 4294901760
    %566 = vmatmul.mubr.f32.gmra.mxu0 %v565
    %v567 = vpop.f32.mrf.mxu0
    %v568 = vadd.f32 %v464, %v567
    %v569 = vpop.f32.mrf.mxu0
    %v570 = vadd.f32 %v466, %v569
    %571 = vmatprep.mubr.f32.mxu0 0.0
    %v572 = vand.u32 %v143, 4294901760
    %v573 = vsub.f32 %v143, %v572
    %v574 = vand.u32 %v573, 4294901760
    %575 = vmatmul.mubr.f32.gmra.mxu0 %v574
    %v576 = vpop.f32.mrf.mxu0
    %v577 = vadd.f32 %v472, %v576
    %v578 = vpop.f32.mrf.mxu0
    %v579 = vadd.f32 %v474, %v578
    %580 = vdwg.mxu0
    %581 = vmatprep.subr.mxu0 0.0
    %582 = vmatpush1.msra.mxu0 0.0
    %583 = vmatprep.subr.mxu0 0.0
    %584 = vmatpush1.msra.mxu0 0.0
    %585 = vmatprep.subr.mxu0 0.0
    %586 = vmatpush1.msra.mxu0 0.0
    %587 = vmatprep.subr.mxu0 0.0
    %588 = vmatpush1.msra.mxu0 0.0
    %589 = vmatprep.subr.mxu0 0.0
    %590 = vmatpush1.msra.mxu0 0.0
    %591 = vmatprep.subr.mxu0 0.0
    %592 = vmatpush1.msra.mxu0 0.0
    %593 = vmatprep.subr.mxu0 0.0
    %594 = vmatpush1.msra.mxu0 0.0
    %595 = vmatprep.subr.mxu0 0.0
    %596 = vmatpush1.msra.mxu0 0.0
    %597 = vmatprep.subr.mxu0 0.0
    %598 = vmatpush1.msra.mxu0 0.0
    %599 = vmatprep.subr.mxu0 0.0
    %600 = vmatpush1.msra.mxu0 0.0
    %601 = vmatprep.subr.mxu0 0.0
    %602 = vmatpush1.msra.mxu0 0.0
    %603 = vmatprep.subr.mxu0 0.0
    %604 = vmatpush1.msra.mxu0 0.0
    %605 = vmatprep.subr.mxu0 0.0
    %606 = vmatpush1.msra.mxu0 0.0
    %607 = vmatprep.subr.mxu0 0.0
    %608 = vmatpush1.msra.mxu0 0.0
    %v609 = vand.u32 %v121, 4294901760
    %v610 = vsub.f32 %v121, %v609
    %v611 = vand.u32 %v610, 4294901760
    %612 = vmatprep.subr.mxu0 %v611
    %v613 = vand.u32 %v120, 4294901760
    %v614 = vsub.f32 %v120, %v613
    %v615 = vand.u32 %v614, 4294901760
    %616 = vmatpush1.msra.mxu0 %v615
    %v617 = vand.u32 %v113, 4294901760
    %v618 = vsub.f32 %v113, %v617
    %v619 = vand.u32 %v618, 4294901760
    %620 = vmatprep.subr.mxu0 %v619
    %v621 = vand.u32 %v112, 4294901760
    %v622 = vsub.f32 %v112, %v621
    %v623 = vand.u32 %v622, 4294901760
    %624 = vmatpush1.msra.mxu0 %v623
    %625 = vmatprep.subr.mxu0 0.0
    %626 = vmatpush2.msra.mxu0 0.0
    %627 = vmatprep.subr.mxu0 0.0
    %628 = vmatpush2.msra.mxu0 0.0
    %629 = vmatprep.subr.mxu0 0.0
    %630 = vmatpush2.msra.mxu0 0.0
    %631 = vmatprep.subr.mxu0 0.0
    %632 = vmatpush2.msra.mxu0 0.0
    %633 = vmatprep.subr.mxu0 0.0
    %634 = vmatpush2.msra.mxu0 0.0
    %635 = vmatprep.subr.mxu0 0.0
    %636 = vmatpush2.msra.mxu0 0.0
    %637 = vmatprep.subr.mxu0 0.0
    %638 = vmatpush2.msra.mxu0 0.0
    %639 = vmatprep.subr.mxu0 0.0
    %640 = vmatpush2.msra.mxu0 0.0
    %641 = vmatprep.subr.mxu0 0.0
    %642 = vmatpush2.msra.mxu0 0.0
    %643 = vmatprep.subr.mxu0 0.0
    %644 = vmatpush2.msra.mxu0 0.0
    %645 = vmatprep.subr.mxu0 0.0
    %646 = vmatpush2.msra.mxu0 0.0
    %647 = vmatprep.subr.mxu0 0.0
    %648 = vmatpush2.msra.mxu0 0.0
    %649 = vmatprep.subr.mxu0 0.0
    %650 = vmatpush2.msra.mxu0 0.0
    %651 = vmatprep.subr.mxu0 0.0
    %652 = vmatpush2.msra.mxu0 0.0
    %653 = vmatprep.subr.mxu0 0.0
    %654 = vmatpush2.msra.mxu0 0.0
    %655 = vmatprep.subr.mxu0 0.0
    %656 = vmatpush2.msra.mxu0 0.0
    %657 = vmatprep.mubr.f32.mxu0 0.0
    %v658 = vand.u32 %v134, 4294901760
    %659 = vmatmul.mubr.f32.gmra.mxu0 %v658
    %v660 = vpop.f32.mrf.mxu0
    %v661 = vadd.f32 %v550, %v660
    %v662 = vpop.f32.mrf.mxu0
    %v663 = vadd.f32 %v552, %v662
    %664 = vmatprep.mubr.f32.mxu0 0.0
    %v665 = vand.u32 %v137, 4294901760
    %666 = vmatmul.mubr.f32.gmra.mxu0 %v665
    %v667 = vpop.f32.mrf.mxu0
    %v668 = vadd.f32 %v559, %v667
    %v669 = vpop.f32.mrf.mxu0
    %v670 = vadd.f32 %v561, %v669
    %671 = vmatprep.mubr.f32.mxu0 0.0
    %v672 = vand.u32 %v140, 4294901760
    %673 = vmatmul.mubr.f32.gmra.mxu0 %v672
    %v674 = vpop.f32.mrf.mxu0
    %v675 = vadd.f32 %v568, %v674
    %v676 = vpop.f32.mrf.mxu0
    %v677 = vadd.f32 %v570, %v676
    %678 = vmatprep.mubr.f32.mxu0 0.0
    %v679 = vand.u32 %v143, 4294901760
    %680 = vmatmul.mubr.f32.gmra.mxu0 %v679
    %v681 = vpop.f32.mrf.mxu0
    %v682 = vadd.f32 %v577, %v681
    %v683 = vpop.f32.mrf.mxu0
    %v684 = vadd.f32 %v579, %v683
    %685 = vdwg.mxu0
    %686 = vmatprep.subr.mxu0 0.0
    %687 = vmatpush1.msra.mxu0 0.0
    %688 = vmatprep.subr.mxu0 0.0
    %689 = vmatpush1.msra.mxu0 0.0
    %690 = vmatprep.subr.mxu0 0.0
    %691 = vmatpush1.msra.mxu0 0.0
    %692 = vmatprep.subr.mxu0 0.0
    %693 = vmatpush1.msra.mxu0 0.0
    %694 = vmatprep.subr.mxu0 0.0
    %695 = vmatpush1.msra.mxu0 0.0
    %696 = vmatprep.subr.mxu0 0.0
    %697 = vmatpush1.msra.mxu0 0.0
    %698 = vmatprep.subr.mxu0 0.0
    %699 = vmatpush1.msra.mxu0 0.0
    %700 = vmatprep.subr.mxu0 0.0
    %701 = vmatpush1.msra.mxu0 0.0
    %702 = vmatprep.subr.mxu0 0.0
    %703 = vmatpush1.msra.mxu0 0.0
    %704 = vmatprep.subr.mxu0 0.0
    %705 = vmatpush1.msra.mxu0 0.0
    %706 = vmatprep.subr.mxu0 0.0
    %707 = vmatpush1.msra.mxu0 0.0
    %708 = vmatprep.subr.mxu0 0.0
    %709 = vmatpush1.msra.mxu0 0.0
    %710 = vmatprep.subr.mxu0 0.0
    %711 = vmatpush1.msra.mxu0 0.0
    %712 = vmatprep.subr.mxu0 0.0
    %713 = vmatpush1.msra.mxu0 0.0
    %v714 = vand.u32 %v121, 4294901760
    %715 = vmatprep.subr.mxu0 %v714
    %v716 = vand.u32 %v120, 4294901760
    %717 = vmatpush1.msra.mxu0 %v716
    %v718 = vand.u32 %v113, 4294901760
    %719 = vmatprep.subr.mxu0 %v718
    %v720 = vand.u32 %v112, 4294901760
    %721 = vmatpush1.msra.mxu0 %v720
    %722 = vmatprep.subr.mxu0 0.0
    %723 = vmatpush2.msra.mxu0 0.0
    %724 = vmatprep.subr.mxu0 0.0
    %725 = vmatpush2.msra.mxu0 0.0
    %726 = vmatprep.subr.mxu0 0.0
    %727 = vmatpush2.msra.mxu0 0.0
    %728 = vmatprep.subr.mxu0 0.0
    %729 = vmatpush2.msra.mxu0 0.0
    %730 = vmatprep.subr.mxu0 0.0
    %731 = vmatpush2.msra.mxu0 0.0
    %732 = vmatprep.subr.mxu0 0.0
    %733 = vmatpush2.msra.mxu0 0.0
    %734 = vmatprep.subr.mxu0 0.0
    %735 = vmatpush2.msra.mxu0 0.0
    %736 = vmatprep.subr.mxu0 0.0
    %737 = vmatpush2.msra.mxu0 0.0
    %738 = vmatprep.subr.mxu0 0.0
    %739 = vmatpush2.msra.mxu0 0.0
    %740 = vmatprep.subr.mxu0 0.0
    %741 = vmatpush2.msra.mxu0 0.0
    %742 = vmatprep.subr.mxu0 0.0
    %743 = vmatpush2.msra.mxu0 0.0
    %744 = vmatprep.subr.mxu0 0.0
    %745 = vmatpush2.msra.mxu0 0.0
    %746 = vmatprep.subr.mxu0 0.0
    %747 = vmatpush2.msra.mxu0 0.0
    %748 = vmatprep.subr.mxu0 0.0
    %749 = vmatpush2.msra.mxu0 0.0
    %750 = vmatprep.subr.mxu0 0.0
    %751 = vmatpush2.msra.mxu0 0.0
    %752 = vmatprep.subr.mxu0 0.0
    %753 = vmatpush2.msra.mxu0 0.0
    %754 = vmatprep.mubr.f32.mxu0 0.0
    %v755 = vand.u32 %v134, 4294901760
    %756 = vmatmul.mubr.f32.gmra.mxu0 %v755
    %v757 = vpop.f32.mrf.mxu0
    %v758 = vadd.f32 %v661, %v757
    %v759 = vpop.f32.mrf.mxu0
    %v760 = vadd.f32 %v663, %v759
    %761 = vmatprep.mubr.f32.mxu0 0.0
    %v762 = vand.u32 %v137, 4294901760
    %763 = vmatmul.mubr.f32.gmra.mxu0 %v762
    %v764 = vpop.f32.mrf.mxu0
    %v765 = vadd.f32 %v668, %v764
    %v766 = vpop.f32.mrf.mxu0
    %v767 = vadd.f32 %v670, %v766
    %768 = vmatprep.mubr.f32.mxu0 0.0
    %v769 = vand.u32 %v140, 4294901760
    %770 = vmatmul.mubr.f32.gmra.mxu0 %v769
    %v771 = vpop.f32.mrf.mxu0
    %v772 = vadd.f32 %v675, %v771
    %v773 = vpop.f32.mrf.mxu0
    %v774 = vadd.f32 %v677, %v773
    %775 = vmatprep.mubr.f32.mxu0 0.0
    %v776 = vand.u32 %v143, 4294901760
    %777 = vmatmul.mubr.f32.gmra.mxu0 %v776
    %v778 = vpop.f32.mrf.mxu0
    %v779 = vadd.f32 %v682, %v778
    %v780 = vpop.f32.mrf.mxu0
    %v781 = vadd.f32 %v684, %v780
    %782 = vdwg.mxu0
    %783 = vmatprep.subr.mxu0 0.0
    %784 = vmatpush1.msra.mxu0 0.0
    %785 = vmatprep.subr.mxu0 0.0
    %786 = vmatpush1.msra.mxu0 0.0
    %787 = vmatprep.subr.mxu0 0.0
    %788 = vmatpush1.msra.mxu0 0.0
    %789 = vmatprep.subr.mxu0 0.0
    %790 = vmatpush1.msra.mxu0 0.0
    %791 = vmatprep.subr.mxu0 0.0
    %792 = vmatpush1.msra.mxu0 0.0
    %793 = vmatprep.subr.mxu0 0.0
    %794 = vmatpush1.msra.mxu0 0.0
    %795 = vmatprep.subr.mxu0 0.0
    %796 = vmatpush1.msra.mxu0 0.0
    %797 = vmatprep.subr.mxu0 0.0
    %798 = vmatpush1.msra.mxu0 0.0
    %799 = vmatprep.subr.mxu0 0.0
    %800 = vmatpush1.msra.mxu0 0.0
    %801 = vmatprep.subr.mxu0 0.0
    %802 = vmatpush1.msra.mxu0 0.0
    %803 = vmatprep.subr.mxu0 0.0
    %804 = vmatpush1.msra.mxu0 0.0
    %805 = vmatprep.subr.mxu0 0.0
    %806 = vmatpush1.msra.mxu0 0.0
    %807 = vmatprep.subr.mxu0 0.0
    %808 = vmatpush1.msra.mxu0 0.0
    %809 = vmatprep.subr.mxu0 0.0
    %810 = vmatpush1.msra.mxu0 0.0
    %v811 = vand.u32 %v123, 4294901760
    %812 = vmatprep.subr.mxu0 %v811
    %v813 = vand.u32 %v122, 4294901760
    %814 = vmatpush1.msra.mxu0 %v813
    %v815 = vand.u32 %v115, 4294901760
    %816 = vmatprep.subr.mxu0 %v815
    %v817 = vand.u32 %v114, 4294901760
    %818 = vmatpush1.msra.mxu0 %v817
    %819 = vmatprep.subr.mxu0 0.0
    %820 = vmatpush2.msra.mxu0 0.0
    %821 = vmatprep.subr.mxu0 0.0
    %822 = vmatpush2.msra.mxu0 0.0
    %823 = vmatprep.subr.mxu0 0.0
    %824 = vmatpush2.msra.mxu0 0.0
    %825 = vmatprep.subr.mxu0 0.0
    %826 = vmatpush2.msra.mxu0 0.0
    %827 = vmatprep.subr.mxu0 0.0
    %828 = vmatpush2.msra.mxu0 0.0
    %829 = vmatprep.subr.mxu0 0.0
    %830 = vmatpush2.msra.mxu0 0.0
    %831 = vmatprep.subr.mxu0 0.0
    %832 = vmatpush2.msra.mxu0 0.0
    %833 = vmatprep.subr.mxu0 0.0
    %834 = vmatpush2.msra.mxu0 0.0
    %835 = vmatprep.subr.mxu0 0.0
    %836 = vmatpush2.msra.mxu0 0.0
    %837 = vmatprep.subr.mxu0 0.0
    %838 = vmatpush2.msra.mxu0 0.0
    %839 = vmatprep.subr.mxu0 0.0
    %840 = vmatpush2.msra.mxu0 0.0
    %841 = vmatprep.subr.mxu0 0.0
    %842 = vmatpush2.msra.mxu0 0.0
    %843 = vmatprep.subr.mxu0 0.0
    %844 = vmatpush2.msra.mxu0 0.0
    %845 = vmatprep.subr.mxu0 0.0
    %846 = vmatpush2.msra.mxu0 0.0
    %847 = vmatprep.subr.mxu0 0.0
    %848 = vmatpush2.msra.mxu0 0.0
    %849 = vmatprep.subr.mxu0 0.0
    %850 = vmatpush2.msra.mxu0 0.0
    %851 = vmatprep.mubr.f32.mxu0 0.0
    %v852 = vand.u32 %v134, 4294901760
    %v853 = vsub.f32 %v134, %v852
    %v854 = vand.u32 %v853, 4294901760
    %v855 = vsub.f32 %v853, %v854
    %v856 = vand.u32 %v855, 4294901760
    %857 = vmatmul.mubr.f32.gmra.mxu0 %v856
    %v858 = vpop.f32.mrf.mxu0
    %v859 = vadd.f32 0.0, %v858
    %v860 = vpop.f32.mrf.mxu0
    %v861 = vadd.f32 0.0, %v860
    %862 = vmatprep.mubr.f32.mxu0 0.0
    %v863 = vand.u32 %v137, 4294901760
    %v864 = vsub.f32 %v137, %v863
    %v865 = vand.u32 %v864, 4294901760
    %v866 = vsub.f32 %v864, %v865
    %v867 = vand.u32 %v866, 4294901760
    %868 = vmatmul.mubr.f32.gmra.mxu0 %v867
    %v869 = vpop.f32.mrf.mxu0
    %v870 = vadd.f32 0.0, %v869
    %v871 = vpop.f32.mrf.mxu0
    %v872 = vadd.f32 0.0, %v871
    %873 = vmatprep.mubr.f32.mxu0 0.0
    %v874 = vand.u32 %v140, 4294901760
    %v875 = vsub.f32 %v140, %v874
    %v876 = vand.u32 %v875, 4294901760
    %v877 = vsub.f32 %v875, %v876
    %v878 = vand.u32 %v877, 4294901760
    %879 = vmatmul.mubr.f32.gmra.mxu0 %v878
    %v880 = vpop.f32.mrf.mxu0
    %v881 = vadd.f32 0.0, %v880
    %v882 = vpop.f32.mrf.mxu0
    %v883 = vadd.f32 0.0, %v882
    %884 = vmatprep.mubr.f32.mxu0 0.0
    %v885 = vand.u32 %v143, 4294901760
    %v886 = vsub.f32 %v143, %v885
    %v887 = vand.u32 %v886, 4294901760
    %v888 = vsub.f32 %v886, %v887
    %v889 = vand.u32 %v888, 4294901760
    %890 = vmatmul.mubr.f32.gmra.mxu0 %v889
    %v891 = vpop.f32.mrf.mxu0
    %v892 = vadd.f32 0.0, %v891
    %v893 = vpop.f32.mrf.mxu0
    %v894 = vadd.f32 0.0, %v893
    %895 = vdwg.mxu0
    %896 = vmatprep.subr.mxu0 0.0
    %897 = vmatpush1.msra.mxu0 0.0
    %898 = vmatprep.subr.mxu0 0.0
    %899 = vmatpush1.msra.mxu0 0.0
    %900 = vmatprep.subr.mxu0 0.0
    %901 = vmatpush1.msra.mxu0 0.0
    %902 = vmatprep.subr.mxu0 0.0
    %903 = vmatpush1.msra.mxu0 0.0
    %904 = vmatprep.subr.mxu0 0.0
    %905 = vmatpush1.msra.mxu0 0.0
    %906 = vmatprep.subr.mxu0 0.0
    %907 = vmatpush1.msra.mxu0 0.0
    %908 = vmatprep.subr.mxu0 0.0
    %909 = vmatpush1.msra.mxu0 0.0
    %910 = vmatprep.subr.mxu0 0.0
    %911 = vmatpush1.msra.mxu0 0.0
    %912 = vmatprep.subr.mxu0 0.0
    %913 = vmatpush1.msra.mxu0 0.0
    %914 = vmatprep.subr.mxu0 0.0
    %915 = vmatpush1.msra.mxu0 0.0
    %916 = vmatprep.subr.mxu0 0.0
    %917 = vmatpush1.msra.mxu0 0.0
    %918 = vmatprep.subr.mxu0 0.0
    %919 = vmatpush1.msra.mxu0 0.0
    %920 = vmatprep.subr.mxu0 0.0
    %921 = vmatpush1.msra.mxu0 0.0
    %922 = vmatprep.subr.mxu0 0.0
    %923 = vmatpush1.msra.mxu0 0.0
    %v924 = vand.u32 %v123, 4294901760
    %v925 = vsub.f32 %v123, %v924
    %v926 = vand.u32 %v925, 4294901760
    %v927 = vsub.f32 %v925, %v926
    %v928 = vand.u32 %v927, 4294901760
    %929 = vmatprep.subr.mxu0 %v928
    %v930 = vand.u32 %v122, 4294901760
    %v931 = vsub.f32 %v122, %v930
    %v932 = vand.u32 %v931, 4294901760
    %v933 = vsub.f32 %v931, %v932
    %v934 = vand.u32 %v933, 4294901760
    %935 = vmatpush1.msra.mxu0 %v934
    %v936 = vand.u32 %v115, 4294901760
    %v937 = vsub.f32 %v115, %v936
    %v938 = vand.u32 %v937, 4294901760
    %v939 = vsub.f32 %v937, %v938
    %v940 = vand.u32 %v939, 4294901760
    %941 = vmatprep.subr.mxu0 %v940
    %v942 = vand.u32 %v114, 4294901760
    %v943 = vsub.f32 %v114, %v942
    %v944 = vand.u32 %v943, 4294901760
    %v945 = vsub.f32 %v943, %v944
    %v946 = vand.u32 %v945, 4294901760
    %947 = vmatpush1.msra.mxu0 %v946
    %948 = vmatprep.subr.mxu0 0.0
    %949 = vmatpush2.msra.mxu0 0.0
    %950 = vmatprep.subr.mxu0 0.0
    %951 = vmatpush2.msra.mxu0 0.0
    %952 = vmatprep.subr.mxu0 0.0
    %953 = vmatpush2.msra.mxu0 0.0
    %954 = vmatprep.subr.mxu0 0.0
    %955 = vmatpush2.msra.mxu0 0.0
    %956 = vmatprep.subr.mxu0 0.0
    %957 = vmatpush2.msra.mxu0 0.0
    %958 = vmatprep.subr.mxu0 0.0
    %959 = vmatpush2.msra.mxu0 0.0
    %960 = vmatprep.subr.mxu0 0.0
    %961 = vmatpush2.msra.mxu0 0.0
    %962 = vmatprep.subr.mxu0 0.0
    %963 = vmatpush2.msra.mxu0 0.0
    %964 = vmatprep.subr.mxu0 0.0
    %965 = vmatpush2.msra.mxu0 0.0
    %966 = vmatprep.subr.mxu0 0.0
    %967 = vmatpush2.msra.mxu0 0.0
    %968 = vmatprep.subr.mxu0 0.0
    %969 = vmatpush2.msra.mxu0 0.0
    %970 = vmatprep.subr.mxu0 0.0
    %971 = vmatpush2.msra.mxu0 0.0
    %972 = vmatprep.subr.mxu0 0.0
    %973 = vmatpush2.msra.mxu0 0.0
    %974 = vmatprep.subr.mxu0 0.0
    %975 = vmatpush2.msra.mxu0 0.0
    %976 = vmatprep.subr.mxu0 0.0
    %977 = vmatpush2.msra.mxu0 0.0
    %978 = vmatprep.subr.mxu0 0.0
    %979 = vmatpush2.msra.mxu0 0.0
    %980 = vmatprep.mubr.f32.mxu0 0.0
    %v981 = vand.u32 %v134, 4294901760
    %982 = vmatmul.mubr.f32.gmra.mxu0 %v981
    %v983 = vpop.f32.mrf.mxu0
    %v984 = vadd.f32 %v859, %v983
    %v985 = vpop.f32.mrf.mxu0
    %v986 = vadd.f32 %v861, %v985
    %987 = vmatprep.mubr.f32.mxu0 0.0
    %v988 = vand.u32 %v137, 4294901760
    %989 = vmatmul.mubr.f32.gmra.mxu0 %v988
    %v990 = vpop.f32.mrf.mxu0
    %v991 = vadd.f32 %v870, %v990
    %v992 = vpop.f32.mrf.mxu0
    %v993 = vadd.f32 %v872, %v992
    %994 = vmatprep.mubr.f32.mxu0 0.0
    %v995 = vand.u32 %v140, 4294901760
    %996 = vmatmul.mubr.f32.gmra.mxu0 %v995
    %v997 = vpop.f32.mrf.mxu0
    %v998 = vadd.f32 %v881, %v997
    %v999 = vpop.f32.mrf.mxu0
    %v1000 = vadd.f32 %v883, %v999
    %1001 = vmatprep.mubr.f32.mxu0 0.0
    %v1002 = vand.u32 %v143, 4294901760
    %1003 = vmatmul.mubr.f32.gmra.mxu0 %v1002
    %v1004 = vpop.f32.mrf.mxu0
    %v1005 = vadd.f32 %v892, %v1004
    %v1006 = vpop.f32.mrf.mxu0
    %v1007 = vadd.f32 %v894, %v1006
    %1008 = vdwg.mxu0
    %1009 = vmatprep.subr.mxu0 0.0
    %1010 = vmatpush1.msra.mxu0 0.0
    %1011 = vmatprep.subr.mxu0 0.0
    %1012 = vmatpush1.msra.mxu0 0.0
    %1013 = vmatprep.subr.mxu0 0.0
    %1014 = vmatpush1.msra.mxu0 0.0
    %1015 = vmatprep.subr.mxu0 0.0
    %1016 = vmatpush1.msra.mxu0 0.0
    %1017 = vmatprep.subr.mxu0 0.0
    %1018 = vmatpush1.msra.mxu0 0.0
    %1019 = vmatprep.subr.mxu0 0.0
    %1020 = vmatpush1.msra.mxu0 0.0
    %1021 = vmatprep.subr.mxu0 0.0
    %1022 = vmatpush1.msra.mxu0 0.0
    %1023 = vmatprep.subr.mxu0 0.0
    %1024 = vmatpush1.msra.mxu0 0.0
    %1025 = vmatprep.subr.mxu0 0.0
    %1026 = vmatpush1.msra.mxu0 0.0
    %1027 = vmatprep.subr.mxu0 0.0
    %1028 = vmatpush1.msra.mxu0 0.0
    %1029 = vmatprep.subr.mxu0 0.0
    %1030 = vmatpush1.msra.mxu0 0.0
    %1031 = vmatprep.subr.mxu0 0.0
    %1032 = vmatpush1.msra.mxu0 0.0
    %1033 = vmatprep.subr.mxu0 0.0
    %1034 = vmatpush1.msra.mxu0 0.0
    %1035 = vmatprep.subr.mxu0 0.0
    %1036 = vmatpush1.msra.mxu0 0.0
    %v1037 = vand.u32 %v123, 4294901760
    %v1038 = vsub.f32 %v123, %v1037
    %1039 = vmatprep.subr.mxu0 %v1038
    %v1040 = vand.u32 %v122, 4294901760
    %v1041 = vsub.f32 %v122, %v1040
    %1042 = vmatpush1.msra.mxu0 %v1041
    %v1043 = vand.u32 %v115, 4294901760
    %v1044 = vsub.f32 %v115, %v1043
    %1045 = vmatprep.subr.mxu0 %v1044
    %v1046 = vand.u32 %v114, 4294901760
    %v1047 = vsub.f32 %v114, %v1046
    %1048 = vmatpush1.msra.mxu0 %v1047
    %1049 = vmatprep.subr.mxu0 0.0
    %1050 = vmatpush2.msra.mxu0 0.0
    %1051 = vmatprep.subr.mxu0 0.0
    %1052 = vmatpush2.msra.mxu0 0.0
    %1053 = vmatprep.subr.mxu0 0.0
    %1054 = vmatpush2.msra.mxu0 0.0
    %1055 = vmatprep.subr.mxu0 0.0
    %1056 = vmatpush2.msra.mxu0 0.0
    %1057 = vmatprep.subr.mxu0 0.0
    %1058 = vmatpush2.msra.mxu0 0.0
    %1059 = vmatprep.subr.mxu0 0.0
    %1060 = vmatpush2.msra.mxu0 0.0
    %1061 = vmatprep.subr.mxu0 0.0
    %1062 = vmatpush2.msra.mxu0 0.0
    %1063 = vmatprep.subr.mxu0 0.0
    %1064 = vmatpush2.msra.mxu0 0.0
    %1065 = vmatprep.subr.mxu0 0.0
    %1066 = vmatpush2.msra.mxu0 0.0
    %1067 = vmatprep.subr.mxu0 0.0
    %1068 = vmatpush2.msra.mxu0 0.0
    %1069 = vmatprep.subr.mxu0 0.0
    %1070 = vmatpush2.msra.mxu0 0.0
    %1071 = vmatprep.subr.mxu0 0.0
    %1072 = vmatpush2.msra.mxu0 0.0
    %1073 = vmatprep.subr.mxu0 0.0
    %1074 = vmatpush2.msra.mxu0 0.0
    %1075 = vmatprep.subr.mxu0 0.0
    %1076 = vmatpush2.msra.mxu0 0.0
    %1077 = vmatprep.subr.mxu0 0.0
    %1078 = vmatpush2.msra.mxu0 0.0
    %1079 = vmatprep.subr.mxu0 0.0
    %1080 = vmatpush2.msra.mxu0 0.0
    %1081 = vmatprep.mubr.f32.mxu0 0.0
    %v1082 = vand.u32 %v134, 4294901760
    %v1083 = vsub.f32 %v134, %v1082
    %1084 = vmatmul.mubr.f32.gmra.mxu0 %v1083
    %v1085 = vpop.f32.mrf.mxu0
    %v1086 = vadd.f32 %v984, %v1085
    %v1087 = vpop.f32.mrf.mxu0
    %v1088 = vadd.f32 %v986, %v1087
    %1089 = vmatprep.mubr.f32.mxu0 0.0
    %v1090 = vand.u32 %v137, 4294901760
    %v1091 = vsub.f32 %v137, %v1090
    %1092 = vmatmul.mubr.f32.gmra.mxu0 %v1091
    %v1093 = vpop.f32.mrf.mxu0
    %v1094 = vadd.f32 %v991, %v1093
    %v1095 = vpop.f32.mrf.mxu0
    %v1096 = vadd.f32 %v993, %v1095
    %1097 = vmatprep.mubr.f32.mxu0 0.0
    %v1098 = vand.u32 %v140, 4294901760
    %v1099 = vsub.f32 %v140, %v1098
    %1100 = vmatmul.mubr.f32.gmra.mxu0 %v1099
    %v1101 = vpop.f32.mrf.mxu0
    %v1102 = vadd.f32 %v998, %v1101
    %v1103 = vpop.f32.mrf.mxu0
    %v1104 = vadd.f32 %v1000, %v1103
    %1105 = vmatprep.mubr.f32.mxu0 0.0
    %v1106 = vand.u32 %v143, 4294901760
    %v1107 = vsub.f32 %v143, %v1106
    %1108 = vmatmul.mubr.f32.gmra.mxu0 %v1107
    %v1109 = vpop.f32.mrf.mxu0
    %v1110 = vadd.f32 %v1005, %v1109
    %v1111 = vpop.f32.mrf.mxu0
    %v1112 = vadd.f32 %v1007, %v1111
    %1113 = vdwg.mxu0
    %1114 = vmatprep.subr.mxu0 0.0
    %1115 = vmatpush1.msra.mxu0 0.0
    %1116 = vmatprep.subr.mxu0 0.0
    %1117 = vmatpush1.msra.mxu0 0.0
    %1118 = vmatprep.subr.mxu0 0.0
    %1119 = vmatpush1.msra.mxu0 0.0
    %1120 = vmatprep.subr.mxu0 0.0
    %1121 = vmatpush1.msra.mxu0 0.0
    %1122 = vmatprep.subr.mxu0 0.0
    %1123 = vmatpush1.msra.mxu0 0.0
    %1124 = vmatprep.subr.mxu0 0.0
    %1125 = vmatpush1.msra.mxu0 0.0
    %1126 = vmatprep.subr.mxu0 0.0
    %1127 = vmatpush1.msra.mxu0 0.0
    %1128 = vmatprep.subr.mxu0 0.0
    %1129 = vmatpush1.msra.mxu0 0.0
    %1130 = vmatprep.subr.mxu0 0.0
    %1131 = vmatpush1.msra.mxu0 0.0
    %1132 = vmatprep.subr.mxu0 0.0
    %1133 = vmatpush1.msra.mxu0 0.0
    %1134 = vmatprep.subr.mxu0 0.0
    %1135 = vmatpush1.msra.mxu0 0.0
    %1136 = vmatprep.subr.mxu0 0.0
    %1137 = vmatpush1.msra.mxu0 0.0
    %1138 = vmatprep.subr.mxu0 0.0
    %1139 = vmatpush1.msra.mxu0 0.0
    %1140 = vmatprep.subr.mxu0 0.0
    %1141 = vmatpush1.msra.mxu0 0.0
    %v1142 = vand.u32 %v123, 4294901760
    %1143 = vmatprep.subr.mxu0 %v1142
    %v1144 = vand.u32 %v122, 4294901760
    %1145 = vmatpush1.msra.mxu0 %v1144
    %v1146 = vand.u32 %v115, 4294901760
    %1147 = vmatprep.subr.mxu0 %v1146
    %v1148 = vand.u32 %v114, 4294901760
    %1149 = vmatpush1.msra.mxu0 %v1148
    %1150 = vmatprep.subr.mxu0 0.0
    %1151 = vmatpush2.msra.mxu0 0.0
    %1152 = vmatprep.subr.mxu0 0.0
    %1153 = vmatpush2.msra.mxu0 0.0
    %1154 = vmatprep.subr.mxu0 0.0
    %1155 = vmatpush2.msra.mxu0 0.0
    %1156 = vmatprep.subr.mxu0 0.0
    %1157 = vmatpush2.msra.mxu0 0.0
    %1158 = vmatprep.subr.mxu0 0.0
    %1159 = vmatpush2.msra.mxu0 0.0
    %1160 = vmatprep.subr.mxu0 0.0
    %1161 = vmatpush2.msra.mxu0 0.0
    %1162 = vmatprep.subr.mxu0 0.0
    %1163 = vmatpush2.msra.mxu0 0.0
    %1164 = vmatprep.subr.mxu0 0.0
    %1165 = vmatpush2.msra.mxu0 0.0
    %1166 = vmatprep.subr.mxu0 0.0
    %1167 = vmatpush2.msra.mxu0 0.0
    %1168 = vmatprep.subr.mxu0 0.0
    %1169 = vmatpush2.msra.mxu0 0.0
    %1170 = vmatprep.subr.mxu0 0.0
    %1171 = vmatpush2.msra.mxu0 0.0
    %1172 = vmatprep.subr.mxu0 0.0
    %1173 = vmatpush2.msra.mxu0 0.0
    %1174 = vmatprep.subr.mxu0 0.0
    %1175 = vmatpush2.msra.mxu0 0.0
    %1176 = vmatprep.subr.mxu0 0.0
    %1177 = vmatpush2.msra.mxu0 0.0
    %1178 = vmatprep.subr.mxu0 0.0
    %1179 = vmatpush2.msra.mxu0 0.0
    %1180 = vmatprep.subr.mxu0 0.0
    %1181 = vmatpush2.msra.mxu0 0.0
    %1182 = vmatprep.mubr.f32.mxu0 0.0
    %v1183 = vand.u32 %v134, 4294901760
    %v1184 = vsub.f32 %v134, %v1183
    %v1185 = vand.u32 %v1184, 4294901760
    %1186 = vmatmul.mubr.f32.gmra.mxu0 %v1185
    %v1187 = vpop.f32.mrf.mxu0
    %v1188 = vadd.f32 %v1086, %v1187
    %v1189 = vpop.f32.mrf.mxu0
    %v1190 = vadd.f32 %v1088, %v1189
    %1191 = vmatprep.mubr.f32.mxu0 0.0
    %v1192 = vand.u32 %v137, 4294901760
    %v1193 = vsub.f32 %v137, %v1192
    %v1194 = vand.u32 %v1193, 4294901760
    %1195 = vmatmul.mubr.f32.gmra.mxu0 %v1194
    %v1196 = vpop.f32.mrf.mxu0
    %v1197 = vadd.f32 %v1094, %v1196
    %v1198 = vpop.f32.mrf.mxu0
    %v1199 = vadd.f32 %v1096, %v1198
    %1200 = vmatprep.mubr.f32.mxu0 0.0
    %v1201 = vand.u32 %v140, 4294901760
    %v1202 = vsub.f32 %v140, %v1201
    %v1203 = vand.u32 %v1202, 4294901760
    %1204 = vmatmul.mubr.f32.gmra.mxu0 %v1203
    %v1205 = vpop.f32.mrf.mxu0
    %v1206 = vadd.f32 %v1102, %v1205
    %v1207 = vpop.f32.mrf.mxu0
    %v1208 = vadd.f32 %v1104, %v1207
    %1209 = vmatprep.mubr.f32.mxu0 0.0
    %v1210 = vand.u32 %v143, 4294901760
    %v1211 = vsub.f32 %v143, %v1210
    %v1212 = vand.u32 %v1211, 4294901760
    %1213 = vmatmul.mubr.f32.gmra.mxu0 %v1212
    %v1214 = vpop.f32.mrf.mxu0
    %v1215 = vadd.f32 %v1110, %v1214
    %v1216 = vpop.f32.mrf.mxu0
    %v1217 = vadd.f32 %v1112, %v1216
    %1218 = vdwg.mxu0
    %1219 = vmatprep.subr.mxu0 0.0
    %1220 = vmatpush1.msra.mxu0 0.0
    %1221 = vmatprep.subr.mxu0 0.0
    %1222 = vmatpush1.msra.mxu0 0.0
    %1223 = vmatprep.subr.mxu0 0.0
    %1224 = vmatpush1.msra.mxu0 0.0
    %1225 = vmatprep.subr.mxu0 0.0
    %1226 = vmatpush1.msra.mxu0 0.0
    %1227 = vmatprep.subr.mxu0 0.0
    %1228 = vmatpush1.msra.mxu0 0.0
    %1229 = vmatprep.subr.mxu0 0.0
    %1230 = vmatpush1.msra.mxu0 0.0
    %1231 = vmatprep.subr.mxu0 0.0
    %1232 = vmatpush1.msra.mxu0 0.0
    %1233 = vmatprep.subr.mxu0 0.0
    %1234 = vmatpush1.msra.mxu0 0.0
    %1235 = vmatprep.subr.mxu0 0.0
    %1236 = vmatpush1.msra.mxu0 0.0
    %1237 = vmatprep.subr.mxu0 0.0
    %1238 = vmatpush1.msra.mxu0 0.0
    %1239 = vmatprep.subr.mxu0 0.0
    %1240 = vmatpush1.msra.mxu0 0.0
    %1241 = vmatprep.subr.mxu0 0.0
    %1242 = vmatpush1.msra.mxu0 0.0
    %1243 = vmatprep.subr.mxu0 0.0
    %1244 = vmatpush1.msra.mxu0 0.0
    %1245 = vmatprep.subr.mxu0 0.0
    %1246 = vmatpush1.msra.mxu0 0.0
    %v1247 = vand.u32 %v123, 4294901760
    %v1248 = vsub.f32 %v123, %v1247
    %v1249 = vand.u32 %v1248, 4294901760
    %1250 = vmatprep.subr.mxu0 %v1249
    %v1251 = vand.u32 %v122, 4294901760
    %v1252 = vsub.f32 %v122, %v1251
    %v1253 = vand.u32 %v1252, 4294901760
    %1254 = vmatpush1.msra.mxu0 %v1253
    %v1255 = vand.u32 %v115, 4294901760
    %v1256 = vsub.f32 %v115, %v1255
    %v1257 = vand.u32 %v1256, 4294901760
    %1258 = vmatprep.subr.mxu0 %v1257
    %v1259 = vand.u32 %v114, 4294901760
    %v1260 = vsub.f32 %v114, %v1259
    %v1261 = vand.u32 %v1260, 4294901760
    %1262 = vmatpush1.msra.mxu0 %v1261
    %1263 = vmatprep.subr.mxu0 0.0
    %1264 = vmatpush2.msra.mxu0 0.0
    %1265 = vmatprep.subr.mxu0 0.0
    %1266 = vmatpush2.msra.mxu0 0.0
    %1267 = vmatprep.subr.mxu0 0.0
    %1268 = vmatpush2.msra.mxu0 0.0
    %1269 = vmatprep.subr.mxu0 0.0
    %1270 = vmatpush2.msra.mxu0 0.0
    %1271 = vmatprep.subr.mxu0 0.0
    %1272 = vmatpush2.msra.mxu0 0.0
    %1273 = vmatprep.subr.mxu0 0.0
    %1274 = vmatpush2.msra.mxu0 0.0
    %1275 = vmatprep.subr.mxu0 0.0
    %1276 = vmatpush2.msra.mxu0 0.0
    %1277 = vmatprep.subr.mxu0 0.0
    %1278 = vmatpush2.msra.mxu0 0.0
    %1279 = vmatprep.subr.mxu0 0.0
    %1280 = vmatpush2.msra.mxu0 0.0
    %1281 = vmatprep.subr.mxu0 0.0
    %1282 = vmatpush2.msra.mxu0 0.0
    %1283 = vmatprep.subr.mxu0 0.0
    %1284 = vmatpush2.msra.mxu0 0.0
    %1285 = vmatprep.subr.mxu0 0.0
    %1286 = vmatpush2.msra.mxu0 0.0
    %1287 = vmatprep.subr.mxu0 0.0
    %1288 = vmatpush2.msra.mxu0 0.0
    %1289 = vmatprep.subr.mxu0 0.0
    %1290 = vmatpush2.msra.mxu0 0.0
    %1291 = vmatprep.subr.mxu0 0.0
    %1292 = vmatpush2.msra.mxu0 0.0
    %1293 = vmatprep.subr.mxu0 0.0
    %1294 = vmatpush2.msra.mxu0 0.0
    %1295 = vmatprep.mubr.f32.mxu0 0.0
    %v1296 = vand.u32 %v134, 4294901760
    %1297 = vmatmul.mubr.f32.gmra.mxu0 %v1296
    %v1298 = vpop.f32.mrf.mxu0
    %v1299 = vadd.f32 %v1188, %v1298
    %v1300 = vpop.f32.mrf.mxu0
    %v1301 = vadd.f32 %v1190, %v1300
    %1302 = vmatprep.mubr.f32.mxu0 0.0
    %v1303 = vand.u32 %v137, 4294901760
    %1304 = vmatmul.mubr.f32.gmra.mxu0 %v1303
    %v1305 = vpop.f32.mrf.mxu0
    %v1306 = vadd.f32 %v1197, %v1305
    %v1307 = vpop.f32.mrf.mxu0
    %v1308 = vadd.f32 %v1199, %v1307
    %1309 = vmatprep.mubr.f32.mxu0 0.0
    %v1310 = vand.u32 %v140, 4294901760
    %1311 = vmatmul.mubr.f32.gmra.mxu0 %v1310
    %v1312 = vpop.f32.mrf.mxu0
    %v1313 = vadd.f32 %v1206, %v1312
    %v1314 = vpop.f32.mrf.mxu0
    %v1315 = vadd.f32 %v1208, %v1314
    %1316 = vmatprep.mubr.f32.mxu0 0.0
    %v1317 = vand.u32 %v143, 4294901760
    %1318 = vmatmul.mubr.f32.gmra.mxu0 %v1317
    %v1319 = vpop.f32.mrf.mxu0
    %v1320 = vadd.f32 %v1215, %v1319
    %v1321 = vpop.f32.mrf.mxu0
    %v1322 = vadd.f32 %v1217, %v1321
    %1323 = vdwg.mxu0
    %1324 = vmatprep.subr.mxu0 0.0
    %1325 = vmatpush1.msra.mxu0 0.0
    %1326 = vmatprep.subr.mxu0 0.0
    %1327 = vmatpush1.msra.mxu0 0.0
    %1328 = vmatprep.subr.mxu0 0.0
    %1329 = vmatpush1.msra.mxu0 0.0
    %1330 = vmatprep.subr.mxu0 0.0
    %1331 = vmatpush1.msra.mxu0 0.0
    %1332 = vmatprep.subr.mxu0 0.0
    %1333 = vmatpush1.msra.mxu0 0.0
    %1334 = vmatprep.subr.mxu0 0.0
    %1335 = vmatpush1.msra.mxu0 0.0
    %1336 = vmatprep.subr.mxu0 0.0
    %1337 = vmatpush1.msra.mxu0 0.0
    %1338 = vmatprep.subr.mxu0 0.0
    %1339 = vmatpush1.msra.mxu0 0.0
    %1340 = vmatprep.subr.mxu0 0.0
    %1341 = vmatpush1.msra.mxu0 0.0
    %1342 = vmatprep.subr.mxu0 0.0
    %1343 = vmatpush1.msra.mxu0 0.0
    %1344 = vmatprep.subr.mxu0 0.0
    %1345 = vmatpush1.msra.mxu0 0.0
    %1346 = vmatprep.subr.mxu0 0.0
    %1347 = vmatpush1.msra.mxu0 0.0
    %1348 = vmatprep.subr.mxu0 0.0
    %1349 = vmatpush1.msra.mxu0 0.0
    %1350 = vmatprep.subr.mxu0 0.0
    %1351 = vmatpush1.msra.mxu0 0.0
    %v1352 = vand.u32 %v123, 4294901760
    %1353 = vmatprep.subr.mxu0 %v1352
    %v1354 = vand.u32 %v122, 4294901760
    %1355 = vmatpush1.msra.mxu0 %v1354
    %v1356 = vand.u32 %v115, 4294901760
    %1357 = vmatprep.subr.mxu0 %v1356
    %v1358 = vand.u32 %v114, 4294901760
    %1359 = vmatpush1.msra.mxu0 %v1358
    %1360 = vmatprep.subr.mxu0 0.0
    %1361 = vmatpush2.msra.mxu0 0.0
    %1362 = vmatprep.subr.mxu0 0.0
    %1363 = vmatpush2.msra.mxu0 0.0
    %1364 = vmatprep.subr.mxu0 0.0
    %1365 = vmatpush2.msra.mxu0 0.0
    %1366 = vmatprep.subr.mxu0 0.0
    %1367 = vmatpush2.msra.mxu0 0.0
    %1368 = vmatprep.subr.mxu0 0.0
    %1369 = vmatpush2.msra.mxu0 0.0
    %1370 = vmatprep.subr.mxu0 0.0
    %1371 = vmatpush2.msra.mxu0 0.0
    %1372 = vmatprep.subr.mxu0 0.0
    %1373 = vmatpush2.msra.mxu0 0.0
    %1374 = vmatprep.subr.mxu0 0.0
    %1375 = vmatpush2.msra.mxu0 0.0
    %1376 = vmatprep.subr.mxu0 0.0
    %1377 = vmatpush2.msra.mxu0 0.0
    %1378 = vmatprep.subr.mxu0 0.0
    %1379 = vmatpush2.msra.mxu0 0.0
    %1380 = vmatprep.subr.mxu0 0.0
    %1381 = vmatpush2.msra.mxu0 0.0
    %1382 = vmatprep.subr.mxu0 0.0
    %1383 = vmatpush2.msra.mxu0 0.0
    %1384 = vmatprep.subr.mxu0 0.0
    %1385 = vmatpush2.msra.mxu0 0.0
    %1386 = vmatprep.subr.mxu0 0.0
    %1387 = vmatpush2.msra.mxu0 0.0
    %1388 = vmatprep.subr.mxu0 0.0
    %1389 = vmatpush2.msra.mxu0 0.0
    %1390 = vmatprep.subr.mxu0 0.0
    %1391 = vmatpush2.msra.mxu0 0.0
    %1392 = vmatprep.mubr.f32.mxu0 0.0
    %v1393 = vand.u32 %v134, 4294901760
    %1394 = vmatmul.mubr.f32.gmra.mxu0 %v1393
    %v1395 = vpop.f32.mrf.mxu0
    %v1396 = vadd.f32 %v1299, %v1395
    %v1397 = vpop.f32.mrf.mxu0
    %v1398 = vadd.f32 %v1301, %v1397
    %1399 = vmatprep.mubr.f32.mxu0 0.0
    %v1400 = vand.u32 %v137, 4294901760
    %1401 = vmatmul.mubr.f32.gmra.mxu0 %v1400
    %v1402 = vpop.f32.mrf.mxu0
    %v1403 = vadd.f32 %v1306, %v1402
    %v1404 = vpop.f32.mrf.mxu0
    %v1405 = vadd.f32 %v1308, %v1404
    %1406 = vmatprep.mubr.f32.mxu0 0.0
    %v1407 = vand.u32 %v140, 4294901760
    %1408 = vmatmul.mubr.f32.gmra.mxu0 %v1407
    %v1409 = vpop.f32.mrf.mxu0
    %v1410 = vadd.f32 %v1313, %v1409
    %v1411 = vpop.f32.mrf.mxu0
    %v1412 = vadd.f32 %v1315, %v1411
    %1413 = vmatprep.mubr.f32.mxu0 0.0
    %v1414 = vand.u32 %v143, 4294901760
    %1415 = vmatmul.mubr.f32.gmra.mxu0 %v1414
    %v1416 = vpop.f32.mrf.mxu0
    %v1417 = vadd.f32 %v1320, %v1416
    %v1418 = vpop.f32.mrf.mxu0
    %v1419 = vadd.f32 %v1322, %v1418
    %1420 = vdwg.mxu0
    %1421 = vmatprep.subr.mxu0 0.0
    %1422 = vmatpush1.msra.mxu0 0.0
    %1423 = vmatprep.subr.mxu0 0.0
    %1424 = vmatpush1.msra.mxu0 0.0
    %1425 = vmatprep.subr.mxu0 0.0
    %1426 = vmatpush1.msra.mxu0 0.0
    %1427 = vmatprep.subr.mxu0 0.0
    %1428 = vmatpush1.msra.mxu0 0.0
    %1429 = vmatprep.subr.mxu0 0.0
    %1430 = vmatpush1.msra.mxu0 0.0
    %1431 = vmatprep.subr.mxu0 0.0
    %1432 = vmatpush1.msra.mxu0 0.0
    %1433 = vmatprep.subr.mxu0 0.0
    %1434 = vmatpush1.msra.mxu0 0.0
    %1435 = vmatprep.subr.mxu0 0.0
    %1436 = vmatpush1.msra.mxu0 0.0
    %1437 = vmatprep.subr.mxu0 0.0
    %1438 = vmatpush1.msra.mxu0 0.0
    %1439 = vmatprep.subr.mxu0 0.0
    %1440 = vmatpush1.msra.mxu0 0.0
    %1441 = vmatprep.subr.mxu0 0.0
    %1442 = vmatpush1.msra.mxu0 0.0
    %1443 = vmatprep.subr.mxu0 0.0
    %1444 = vmatpush1.msra.mxu0 0.0
    %1445 = vmatprep.subr.mxu0 0.0
    %1446 = vmatpush1.msra.mxu0 0.0
    %1447 = vmatprep.subr.mxu0 0.0
    %1448 = vmatpush1.msra.mxu0 0.0
    %v1449 = vand.u32 %v125, 4294901760
    %1450 = vmatprep.subr.mxu0 %v1449
    %v1451 = vand.u32 %v124, 4294901760
    %1452 = vmatpush1.msra.mxu0 %v1451
    %v1453 = vand.u32 %v117, 4294901760
    %1454 = vmatprep.subr.mxu0 %v1453
    %v1455 = vand.u32 %v116, 4294901760
    %1456 = vmatpush1.msra.mxu0 %v1455
    %1457 = vmatprep.subr.mxu0 0.0
    %1458 = vmatpush2.msra.mxu0 0.0
    %1459 = vmatprep.subr.mxu0 0.0
    %1460 = vmatpush2.msra.mxu0 0.0
    %1461 = vmatprep.subr.mxu0 0.0
    %1462 = vmatpush2.msra.mxu0 0.0
    %1463 = vmatprep.subr.mxu0 0.0
    %1464 = vmatpush2.msra.mxu0 0.0
    %1465 = vmatprep.subr.mxu0 0.0
    %1466 = vmatpush2.msra.mxu0 0.0
    %1467 = vmatprep.subr.mxu0 0.0
    %1468 = vmatpush2.msra.mxu0 0.0
    %1469 = vmatprep.subr.mxu0 0.0
    %1470 = vmatpush2.msra.mxu0 0.0
    %1471 = vmatprep.subr.mxu0 0.0
    %1472 = vmatpush2.msra.mxu0 0.0
    %1473 = vmatprep.subr.mxu0 0.0
    %1474 = vmatpush2.msra.mxu0 0.0
    %1475 = vmatprep.subr.mxu0 0.0
    %1476 = vmatpush2.msra.mxu0 0.0
    %1477 = vmatprep.subr.mxu0 0.0
    %1478 = vmatpush2.msra.mxu0 0.0
    %1479 = vmatprep.subr.mxu0 0.0
    %1480 = vmatpush2.msra.mxu0 0.0
    %1481 = vmatprep.subr.mxu0 0.0
    %1482 = vmatpush2.msra.mxu0 0.0
    %1483 = vmatprep.subr.mxu0 0.0
    %1484 = vmatpush2.msra.mxu0 0.0
    %1485 = vmatprep.subr.mxu0 0.0
    %1486 = vmatpush2.msra.mxu0 0.0
    %1487 = vmatprep.subr.mxu0 0.0
    %1488 = vmatpush2.msra.mxu0 0.0
    %1489 = vmatprep.mubr.f32.mxu0 0.0
    %v1490 = vand.u32 %v134, 4294901760
    %v1491 = vsub.f32 %v134, %v1490
    %v1492 = vand.u32 %v1491, 4294901760
    %v1493 = vsub.f32 %v1491, %v1492
    %v1494 = vand.u32 %v1493, 4294901760
    %1495 = vmatmul.mubr.f32.gmra.mxu0 %v1494
    %v1496 = vpop.f32.mrf.mxu0
    %v1497 = vadd.f32 0.0, %v1496
    %v1498 = vpop.f32.mrf.mxu0
    %v1499 = vadd.f32 0.0, %v1498
    %1500 = vmatprep.mubr.f32.mxu0 0.0
    %v1501 = vand.u32 %v137, 4294901760
    %v1502 = vsub.f32 %v137, %v1501
    %v1503 = vand.u32 %v1502, 4294901760
    %v1504 = vsub.f32 %v1502, %v1503
    %v1505 = vand.u32 %v1504, 4294901760
    %1506 = vmatmul.mubr.f32.gmra.mxu0 %v1505
    %v1507 = vpop.f32.mrf.mxu0
    %v1508 = vadd.f32 0.0, %v1507
    %v1509 = vpop.f32.mrf.mxu0
    %v1510 = vadd.f32 0.0, %v1509
    %1511 = vmatprep.mubr.f32.mxu0 0.0
    %v1512 = vand.u32 %v140, 4294901760
    %v1513 = vsub.f32 %v140, %v1512
    %v1514 = vand.u32 %v1513, 4294901760
    %v1515 = vsub.f32 %v1513, %v1514
    %v1516 = vand.u32 %v1515, 4294901760
    %1517 = vmatmul.mubr.f32.gmra.mxu0 %v1516
    %v1518 = vpop.f32.mrf.mxu0
    %v1519 = vadd.f32 0.0, %v1518
    %v1520 = vpop.f32.mrf.mxu0
    %v1521 = vadd.f32 0.0, %v1520
    %1522 = vmatprep.mubr.f32.mxu0 0.0
    %v1523 = vand.u32 %v143, 4294901760
    %v1524 = vsub.f32 %v143, %v1523
    %v1525 = vand.u32 %v1524, 4294901760
    %v1526 = vsub.f32 %v1524, %v1525
    %v1527 = vand.u32 %v1526, 4294901760
    %1528 = vmatmul.mubr.f32.gmra.mxu0 %v1527
    %v1529 = vpop.f32.mrf.mxu0
    %v1530 = vadd.f32 0.0, %v1529
    %v1531 = vpop.f32.mrf.mxu0
    %v1532 = vadd.f32 0.0, %v1531
    %1533 = vdwg.mxu0
    %1534 = vmatprep.subr.mxu0 0.0
    %1535 = vmatpush1.msra.mxu0 0.0
    %1536 = vmatprep.subr.mxu0 0.0
    %1537 = vmatpush1.msra.mxu0 0.0
    %1538 = vmatprep.subr.mxu0 0.0
    %1539 = vmatpush1.msra.mxu0 0.0
    %1540 = vmatprep.subr.mxu0 0.0
    %1541 = vmatpush1.msra.mxu0 0.0
    %1542 = vmatprep.subr.mxu0 0.0
    %1543 = vmatpush1.msra.mxu0 0.0
    %1544 = vmatprep.subr.mxu0 0.0
    %1545 = vmatpush1.msra.mxu0 0.0
    %1546 = vmatprep.subr.mxu0 0.0
    %1547 = vmatpush1.msra.mxu0 0.0
    %1548 = vmatprep.subr.mxu0 0.0
    %1549 = vmatpush1.msra.mxu0 0.0
    %1550 = vmatprep.subr.mxu0 0.0
    %1551 = vmatpush1.msra.mxu0 0.0
    %1552 = vmatprep.subr.mxu0 0.0
    %1553 = vmatpush1.msra.mxu0 0.0
    %1554 = vmatprep.subr.mxu0 0.0
    %1555 = vmatpush1.msra.mxu0 0.0
    %1556 = vmatprep.subr.mxu0 0.0
    %1557 = vmatpush1.msra.mxu0 0.0
    %1558 = vmatprep.subr.mxu0 0.0
    %1559 = vmatpush1.msra.mxu0 0.0
    %1560 = vmatprep.subr.mxu0 0.0
    %1561 = vmatpush1.msra.mxu0 0.0
    %v1562 = vand.u32 %v125, 4294901760
    %v1563 = vsub.f32 %v125, %v1562
    %v1564 = vand.u32 %v1563, 4294901760
    %v1565 = vsub.f32 %v1563, %v1564
    %v1566 = vand.u32 %v1565, 4294901760
    %1567 = vmatprep.subr.mxu0 %v1566
    %v1568 = vand.u32 %v124, 4294901760
    %v1569 = vsub.f32 %v124, %v1568
    %v1570 = vand.u32 %v1569, 4294901760
    %v1571 = vsub.f32 %v1569, %v1570
    %v1572 = vand.u32 %v1571, 4294901760
    %1573 = vmatpush1.msra.mxu0 %v1572
    %v1574 = vand.u32 %v117, 4294901760
    %v1575 = vsub.f32 %v117, %v1574
    %v1576 = vand.u32 %v1575, 4294901760
    %v1577 = vsub.f32 %v1575, %v1576
    %v1578 = vand.u32 %v1577, 4294901760
    %1579 = vmatprep.subr.mxu0 %v1578
    %v1580 = vand.u32 %v116, 4294901760
    %v1581 = vsub.f32 %v116, %v1580
    %v1582 = vand.u32 %v1581, 4294901760
    %v1583 = vsub.f32 %v1581, %v1582
    %v1584 = vand.u32 %v1583, 4294901760
    %1585 = vmatpush1.msra.mxu0 %v1584
    %1586 = vmatprep.subr.mxu0 0.0
    %1587 = vmatpush2.msra.mxu0 0.0
    %1588 = vmatprep.subr.mxu0 0.0
    %1589 = vmatpush2.msra.mxu0 0.0
    %1590 = vmatprep.subr.mxu0 0.0
    %1591 = vmatpush2.msra.mxu0 0.0
    %1592 = vmatprep.subr.mxu0 0.0
    %1593 = vmatpush2.msra.mxu0 0.0
    %1594 = vmatprep.subr.mxu0 0.0
    %1595 = vmatpush2.msra.mxu0 0.0
    %1596 = vmatprep.subr.mxu0 0.0
    %1597 = vmatpush2.msra.mxu0 0.0
    %1598 = vmatprep.subr.mxu0 0.0
    %1599 = vmatpush2.msra.mxu0 0.0
    %1600 = vmatprep.subr.mxu0 0.0
    %1601 = vmatpush2.msra.mxu0 0.0
    %1602 = vmatprep.subr.mxu0 0.0
    %1603 = vmatpush2.msra.mxu0 0.0
    %1604 = vmatprep.subr.mxu0 0.0
    %1605 = vmatpush2.msra.mxu0 0.0
    %1606 = vmatprep.subr.mxu0 0.0
    %1607 = vmatpush2.msra.mxu0 0.0
    %1608 = vmatprep.subr.mxu0 0.0
    %1609 = vmatpush2.msra.mxu0 0.0
    %1610 = vmatprep.subr.mxu0 0.0
    %1611 = vmatpush2.msra.mxu0 0.0
    %1612 = vmatprep.subr.mxu0 0.0
    %1613 = vmatpush2.msra.mxu0 0.0
    %1614 = vmatprep.subr.mxu0 0.0
    %1615 = vmatpush2.msra.mxu0 0.0
    %1616 = vmatprep.subr.mxu0 0.0
    %1617 = vmatpush2.msra.mxu0 0.0
    %1618 = vmatprep.mubr.f32.mxu0 0.0
    %v1619 = vand.u32 %v134, 4294901760
    %1620 = vmatmul.mubr.f32.gmra.mxu0 %v1619
    %v1621 = vpop.f32.mrf.mxu0
    %v1622 = vadd.f32 %v1497, %v1621
    %v1623 = vpop.f32.mrf.mxu0
    %v1624 = vadd.f32 %v1499, %v1623
    %1625 = vmatprep.mubr.f32.mxu0 0.0
    %v1626 = vand.u32 %v137, 4294901760
    %1627 = vmatmul.mubr.f32.gmra.mxu0 %v1626
    %v1628 = vpop.f32.mrf.mxu0
    %v1629 = vadd.f32 %v1508, %v1628
    %v1630 = vpop.f32.mrf.mxu0
    %v1631 = vadd.f32 %v1510, %v1630
    %1632 = vmatprep.mubr.f32.mxu0 0.0
    %v1633 = vand.u32 %v140, 4294901760
    %1634 = vmatmul.mubr.f32.gmra.mxu0 %v1633
    %v1635 = vpop.f32.mrf.mxu0
    %v1636 = vadd.f32 %v1519, %v1635
    %v1637 = vpop.f32.mrf.mxu0
    %v1638 = vadd.f32 %v1521, %v1637
    %1639 = vmatprep.mubr.f32.mxu0 0.0
    %v1640 = vand.u32 %v143, 4294901760
    %1641 = vmatmul.mubr.f32.gmra.mxu0 %v1640
    %v1642 = vpop.f32.mrf.mxu0
    %v1643 = vadd.f32 %v1530, %v1642
    %v1644 = vpop.f32.mrf.mxu0
    %v1645 = vadd.f32 %v1532, %v1644
    %1646 = vdwg.mxu0
    %1647 = vmatprep.subr.mxu0 0.0
    %1648 = vmatpush1.msra.mxu0 0.0
    %1649 = vmatprep.subr.mxu0 0.0
    %1650 = vmatpush1.msra.mxu0 0.0
    %1651 = vmatprep.subr.mxu0 0.0
    %1652 = vmatpush1.msra.mxu0 0.0
    %1653 = vmatprep.subr.mxu0 0.0
    %1654 = vmatpush1.msra.mxu0 0.0
    %1655 = vmatprep.subr.mxu0 0.0
    %1656 = vmatpush1.msra.mxu0 0.0
    %1657 = vmatprep.subr.mxu0 0.0
    %1658 = vmatpush1.msra.mxu0 0.0
    %1659 = vmatprep.subr.mxu0 0.0
    %1660 = vmatpush1.msra.mxu0 0.0
    %1661 = vmatprep.subr.mxu0 0.0
    %1662 = vmatpush1.msra.mxu0 0.0
    %1663 = vmatprep.subr.mxu0 0.0
    %1664 = vmatpush1.msra.mxu0 0.0
    %1665 = vmatprep.subr.mxu0 0.0
    %1666 = vmatpush1.msra.mxu0 0.0
    %1667 = vmatprep.subr.mxu0 0.0
    %1668 = vmatpush1.msra.mxu0 0.0
    %1669 = vmatprep.subr.mxu0 0.0
    %1670 = vmatpush1.msra.mxu0 0.0
    %1671 = vmatprep.subr.mxu0 0.0
    %1672 = vmatpush1.msra.mxu0 0.0
    %1673 = vmatprep.subr.mxu0 0.0
    %1674 = vmatpush1.msra.mxu0 0.0
    %v1675 = vand.u32 %v125, 4294901760
    %v1676 = vsub.f32 %v125, %v1675
    %1677 = vmatprep.subr.mxu0 %v1676
    %v1678 = vand.u32 %v124, 4294901760
    %v1679 = vsub.f32 %v124, %v1678
    %1680 = vmatpush1.msra.mxu0 %v1679
    %v1681 = vand.u32 %v117, 4294901760
    %v1682 = vsub.f32 %v117, %v1681
    %1683 = vmatprep.subr.mxu0 %v1682
    %v1684 = vand.u32 %v116, 4294901760
    %v1685 = vsub.f32 %v116, %v1684
    %1686 = vmatpush1.msra.mxu0 %v1685
    %1687 = vmatprep.subr.mxu0 0.0
    %1688 = vmatpush2.msra.mxu0 0.0
    %1689 = vmatprep.subr.mxu0 0.0
    %1690 = vmatpush2.msra.mxu0 0.0
    %1691 = vmatprep.subr.mxu0 0.0
    %1692 = vmatpush2.msra.mxu0 0.0
    %1693 = vmatprep.subr.mxu0 0.0
    %1694 = vmatpush2.msra.mxu0 0.0
    %1695 = vmatprep.subr.mxu0 0.0
    %1696 = vmatpush2.msra.mxu0 0.0
    %1697 = vmatprep.subr.mxu0 0.0
    %1698 = vmatpush2.msra.mxu0 0.0
    %1699 = vmatprep.subr.mxu0 0.0
    %1700 = vmatpush2.msra.mxu0 0.0
    %1701 = vmatprep.subr.mxu0 0.0
    %1702 = vmatpush2.msra.mxu0 0.0
    %1703 = vmatprep.subr.mxu0 0.0
    %1704 = vmatpush2.msra.mxu0 0.0
    %1705 = vmatprep.subr.mxu0 0.0
    %1706 = vmatpush2.msra.mxu0 0.0
    %1707 = vmatprep.subr.mxu0 0.0
    %1708 = vmatpush2.msra.mxu0 0.0
    %1709 = vmatprep.subr.mxu0 0.0
    %1710 = vmatpush2.msra.mxu0 0.0
    %1711 = vmatprep.subr.mxu0 0.0
    %1712 = vmatpush2.msra.mxu0 0.0
    %1713 = vmatprep.subr.mxu0 0.0
    %1714 = vmatpush2.msra.mxu0 0.0
    %1715 = vmatprep.subr.mxu0 0.0
    %1716 = vmatpush2.msra.mxu0 0.0
    %1717 = vmatprep.subr.mxu0 0.0
    %1718 = vmatpush2.msra.mxu0 0.0
    %1719 = vmatprep.mubr.f32.mxu0 0.0
    %v1720 = vand.u32 %v134, 4294901760
    %v1721 = vsub.f32 %v134, %v1720
    %1722 = vmatmul.mubr.f32.gmra.mxu0 %v1721
    %v1723 = vpop.f32.mrf.mxu0
    %v1724 = vadd.f32 %v1622, %v1723
    %v1725 = vpop.f32.mrf.mxu0
    %v1726 = vadd.f32 %v1624, %v1725
    %1727 = vmatprep.mubr.f32.mxu0 0.0
    %v1728 = vand.u32 %v137, 4294901760
    %v1729 = vsub.f32 %v137, %v1728
    %1730 = vmatmul.mubr.f32.gmra.mxu0 %v1729
    %v1731 = vpop.f32.mrf.mxu0
    %v1732 = vadd.f32 %v1629, %v1731
    %v1733 = vpop.f32.mrf.mxu0
    %v1734 = vadd.f32 %v1631, %v1733
    %1735 = vmatprep.mubr.f32.mxu0 0.0
    %v1736 = vand.u32 %v140, 4294901760
    %v1737 = vsub.f32 %v140, %v1736
    %1738 = vmatmul.mubr.f32.gmra.mxu0 %v1737
    %v1739 = vpop.f32.mrf.mxu0
    %v1740 = vadd.f32 %v1636, %v1739
    %v1741 = vpop.f32.mrf.mxu0
    %v1742 = vadd.f32 %v1638, %v1741
    %1743 = vmatprep.mubr.f32.mxu0 0.0
    %v1744 = vand.u32 %v143, 4294901760
    %v1745 = vsub.f32 %v143, %v1744
    %1746 = vmatmul.mubr.f32.gmra.mxu0 %v1745
    %v1747 = vpop.f32.mrf.mxu0
    %v1748 = vadd.f32 %v1643, %v1747
    %v1749 = vpop.f32.mrf.mxu0
    %v1750 = vadd.f32 %v1645, %v1749
    %1751 = vdwg.mxu0
    %1752 = vmatprep.subr.mxu0 0.0
    %1753 = vmatpush1.msra.mxu0 0.0
    %1754 = vmatprep.subr.mxu0 0.0
    %1755 = vmatpush1.msra.mxu0 0.0
    %1756 = vmatprep.subr.mxu0 0.0
    %1757 = vmatpush1.msra.mxu0 0.0
    %1758 = vmatprep.subr.mxu0 0.0
    %1759 = vmatpush1.msra.mxu0 0.0
    %1760 = vmatprep.subr.mxu0 0.0
    %1761 = vmatpush1.msra.mxu0 0.0
    %1762 = vmatprep.subr.mxu0 0.0
    %1763 = vmatpush1.msra.mxu0 0.0
    %1764 = vmatprep.subr.mxu0 0.0
    %1765 = vmatpush1.msra.mxu0 0.0
    %1766 = vmatprep.subr.mxu0 0.0
    %1767 = vmatpush1.msra.mxu0 0.0
    %1768 = vmatprep.subr.mxu0 0.0
    %1769 = vmatpush1.msra.mxu0 0.0
    %1770 = vmatprep.subr.mxu0 0.0
    %1771 = vmatpush1.msra.mxu0 0.0
    %1772 = vmatprep.subr.mxu0 0.0
    %1773 = vmatpush1.msra.mxu0 0.0
    %1774 = vmatprep.subr.mxu0 0.0
    %1775 = vmatpush1.msra.mxu0 0.0
    %1776 = vmatprep.subr.mxu0 0.0
    %1777 = vmatpush1.msra.mxu0 0.0
    %1778 = vmatprep.subr.mxu0 0.0
    %1779 = vmatpush1.msra.mxu0 0.0
    %v1780 = vand.u32 %v125, 4294901760
    %1781 = vmatprep.subr.mxu0 %v1780
    %v1782 = vand.u32 %v124, 4294901760
    %1783 = vmatpush1.msra.mxu0 %v1782
    %v1784 = vand.u32 %v117, 4294901760
    %1785 = vmatprep.subr.mxu0 %v1784
    %v1786 = vand.u32 %v116, 4294901760
    %1787 = vmatpush1.msra.mxu0 %v1786
    %1788 = vmatprep.subr.mxu0 0.0
    %1789 = vmatpush2.msra.mxu0 0.0
    %1790 = vmatprep.subr.mxu0 0.0
    %1791 = vmatpush2.msra.mxu0 0.0
    %1792 = vmatprep.subr.mxu0 0.0
    %1793 = vmatpush2.msra.mxu0 0.0
    %1794 = vmatprep.subr.mxu0 0.0
    %1795 = vmatpush2.msra.mxu0 0.0
    %1796 = vmatprep.subr.mxu0 0.0
    %1797 = vmatpush2.msra.mxu0 0.0
    %1798 = vmatprep.subr.mxu0 0.0
    %1799 = vmatpush2.msra.mxu0 0.0
    %1800 = vmatprep.subr.mxu0 0.0
    %1801 = vmatpush2.msra.mxu0 0.0
    %1802 = vmatprep.subr.mxu0 0.0
    %1803 = vmatpush2.msra.mxu0 0.0
    %1804 = vmatprep.subr.mxu0 0.0
    %1805 = vmatpush2.msra.mxu0 0.0
    %1806 = vmatprep.subr.mxu0 0.0
    %1807 = vmatpush2.msra.mxu0 0.0
    %1808 = vmatprep.subr.mxu0 0.0
    %1809 = vmatpush2.msra.mxu0 0.0
    %1810 = vmatprep.subr.mxu0 0.0
    %1811 = vmatpush2.msra.mxu0 0.0
    %1812 = vmatprep.subr.mxu0 0.0
    %1813 = vmatpush2.msra.mxu0 0.0
    %1814 = vmatprep.subr.mxu0 0.0
    %1815 = vmatpush2.msra.mxu0 0.0
    %1816 = vmatprep.subr.mxu0 0.0
    %1817 = vmatpush2.msra.mxu0 0.0
    %1818 = vmatprep.subr.mxu0 0.0
    %1819 = vmatpush2.msra.mxu0 0.0
    %1820 = vmatprep.mubr.f32.mxu0 0.0
    %v1821 = vand.u32 %v134, 4294901760
    %v1822 = vsub.f32 %v134, %v1821
    %v1823 = vand.u32 %v1822, 4294901760
    %1824 = vmatmul.mubr.f32.gmra.mxu0 %v1823
    %v1825 = vpop.f32.mrf.mxu0
    %v1826 = vadd.f32 %v1724, %v1825
    %v1827 = vpop.f32.mrf.mxu0
    %v1828 = vadd.f32 %v1726, %v1827
    %1829 = vmatprep.mubr.f32.mxu0 0.0
    %v1830 = vand.u32 %v137, 4294901760
    %v1831 = vsub.f32 %v137, %v1830
    %v1832 = vand.u32 %v1831, 4294901760
    %1833 = vmatmul.mubr.f32.gmra.mxu0 %v1832
    %v1834 = vpop.f32.mrf.mxu0
    %v1835 = vadd.f32 %v1732, %v1834
    %v1836 = vpop.f32.mrf.mxu0
    %v1837 = vadd.f32 %v1734, %v1836
    %1838 = vmatprep.mubr.f32.mxu0 0.0
    %v1839 = vand.u32 %v140, 4294901760
    %v1840 = vsub.f32 %v140, %v1839
    %v1841 = vand.u32 %v1840, 4294901760
    %1842 = vmatmul.mubr.f32.gmra.mxu0 %v1841
    %v1843 = vpop.f32.mrf.mxu0
    %v1844 = vadd.f32 %v1740, %v1843
    %v1845 = vpop.f32.mrf.mxu0
    %v1846 = vadd.f32 %v1742, %v1845
    %1847 = vmatprep.mubr.f32.mxu0 0.0
    %v1848 = vand.u32 %v143, 4294901760
    %v1849 = vsub.f32 %v143, %v1848
    %v1850 = vand.u32 %v1849, 4294901760
    %1851 = vmatmul.mubr.f32.gmra.mxu0 %v1850
    %v1852 = vpop.f32.mrf.mxu0
    %v1853 = vadd.f32 %v1748, %v1852
    %v1854 = vpop.f32.mrf.mxu0
    %v1855 = vadd.f32 %v1750, %v1854
    %1856 = vdwg.mxu0
    %1857 = vmatprep.subr.mxu0 0.0
    %1858 = vmatpush1.msra.mxu0 0.0
    %1859 = vmatprep.subr.mxu0 0.0
    %1860 = vmatpush1.msra.mxu0 0.0
    %1861 = vmatprep.subr.mxu0 0.0
    %1862 = vmatpush1.msra.mxu0 0.0
    %1863 = vmatprep.subr.mxu0 0.0
    %1864 = vmatpush1.msra.mxu0 0.0
    %1865 = vmatprep.subr.mxu0 0.0
    %1866 = vmatpush1.msra.mxu0 0.0
    %1867 = vmatprep.subr.mxu0 0.0
    %1868 = vmatpush1.msra.mxu0 0.0
    %1869 = vmatprep.subr.mxu0 0.0
    %1870 = vmatpush1.msra.mxu0 0.0
    %1871 = vmatprep.subr.mxu0 0.0
    %1872 = vmatpush1.msra.mxu0 0.0
    %1873 = vmatprep.subr.mxu0 0.0
    %1874 = vmatpush1.msra.mxu0 0.0
    %1875 = vmatprep.subr.mxu0 0.0
    %1876 = vmatpush1.msra.mxu0 0.0
    %1877 = vmatprep.subr.mxu0 0.0
    %1878 = vmatpush1.msra.mxu0 0.0
    %1879 = vmatprep.subr.mxu0 0.0
    %1880 = vmatpush1.msra.mxu0 0.0
    %1881 = vmatprep.subr.mxu0 0.0
    %1882 = vmatpush1.msra.mxu0 0.0
    %1883 = vmatprep.subr.mxu0 0.0
    %1884 = vmatpush1.msra.mxu0 0.0
    %v1885 = vand.u32 %v125, 4294901760
    %v1886 = vsub.f32 %v125, %v1885
    %v1887 = vand.u32 %v1886, 4294901760
    %1888 = vmatprep.subr.mxu0 %v1887
    %v1889 = vand.u32 %v124, 4294901760
    %v1890 = vsub.f32 %v124, %v1889
    %v1891 = vand.u32 %v1890, 4294901760
    %1892 = vmatpush1.msra.mxu0 %v1891
    %v1893 = vand.u32 %v117, 4294901760
    %v1894 = vsub.f32 %v117, %v1893
    %v1895 = vand.u32 %v1894, 4294901760
    %1896 = vmatprep.subr.mxu0 %v1895
    %v1897 = vand.u32 %v116, 4294901760
    %v1898 = vsub.f32 %v116, %v1897
    %v1899 = vand.u32 %v1898, 4294901760
    %1900 = vmatpush1.msra.mxu0 %v1899
    %1901 = vmatprep.subr.mxu0 0.0
    %1902 = vmatpush2.msra.mxu0 0.0
    %1903 = vmatprep.subr.mxu0 0.0
    %1904 = vmatpush2.msra.mxu0 0.0
    %1905 = vmatprep.subr.mxu0 0.0
    %1906 = vmatpush2.msra.mxu0 0.0
    %1907 = vmatprep.subr.mxu0 0.0
    %1908 = vmatpush2.msra.mxu0 0.0
    %1909 = vmatprep.subr.mxu0 0.0
    %1910 = vmatpush2.msra.mxu0 0.0
    %1911 = vmatprep.subr.mxu0 0.0
    %1912 = vmatpush2.msra.mxu0 0.0
    %1913 = vmatprep.subr.mxu0 0.0
    %1914 = vmatpush2.msra.mxu0 0.0
    %1915 = vmatprep.subr.mxu0 0.0
    %1916 = vmatpush2.msra.mxu0 0.0
    %1917 = vmatprep.subr.mxu0 0.0
    %1918 = vmatpush2.msra.mxu0 0.0
    %1919 = vmatprep.subr.mxu0 0.0
    %1920 = vmatpush2.msra.mxu0 0.0
    %1921 = vmatprep.subr.mxu0 0.0
    %1922 = vmatpush2.msra.mxu0 0.0
    %1923 = vmatprep.subr.mxu0 0.0
    %1924 = vmatpush2.msra.mxu0 0.0
    %1925 = vmatprep.subr.mxu0 0.0
    %1926 = vmatpush2.msra.mxu0 0.0
    %1927 = vmatprep.subr.mxu0 0.0
    %1928 = vmatpush2.msra.mxu0 0.0
    %1929 = vmatprep.subr.mxu0 0.0
    %1930 = vmatpush2.msra.mxu0 0.0
    %1931 = vmatprep.subr.mxu0 0.0
    %1932 = vmatpush2.msra.mxu0 0.0
    %1933 = vmatprep.mubr.f32.mxu0 0.0
    %v1934 = vand.u32 %v134, 4294901760
    %1935 = vmatmul.mubr.f32.gmra.mxu0 %v1934
    %v1936 = vpop.f32.mrf.mxu0
    %v1937 = vadd.f32 %v1826, %v1936
    %v1938 = vpop.f32.mrf.mxu0
    %v1939 = vadd.f32 %v1828, %v1938
    %1940 = vmatprep.mubr.f32.mxu0 0.0
    %v1941 = vand.u32 %v137, 4294901760
    %1942 = vmatmul.mubr.f32.gmra.mxu0 %v1941
    %v1943 = vpop.f32.mrf.mxu0
    %v1944 = vadd.f32 %v1835, %v1943
    %v1945 = vpop.f32.mrf.mxu0
    %v1946 = vadd.f32 %v1837, %v1945
    %1947 = vmatprep.mubr.f32.mxu0 0.0
    %v1948 = vand.u32 %v140, 4294901760
    %1949 = vmatmul.mubr.f32.gmra.mxu0 %v1948
    %v1950 = vpop.f32.mrf.mxu0
    %v1951 = vadd.f32 %v1844, %v1950
    %v1952 = vpop.f32.mrf.mxu0
    %v1953 = vadd.f32 %v1846, %v1952
    %1954 = vmatprep.mubr.f32.mxu0 0.0
    %v1955 = vand.u32 %v143, 4294901760
    %1956 = vmatmul.mubr.f32.gmra.mxu0 %v1955
    %v1957 = vpop.f32.mrf.mxu0
    %v1958 = vadd.f32 %v1853, %v1957
    %v1959 = vpop.f32.mrf.mxu0
    %v1960 = vadd.f32 %v1855, %v1959
    %1961 = vdwg.mxu0
    %1962 = vmatprep.subr.mxu0 0.0
    %1963 = vmatpush1.msra.mxu0 0.0
    %1964 = vmatprep.subr.mxu0 0.0
    %1965 = vmatpush1.msra.mxu0 0.0
    %1966 = vmatprep.subr.mxu0 0.0
    %1967 = vmatpush1.msra.mxu0 0.0
    %1968 = vmatprep.subr.mxu0 0.0
    %1969 = vmatpush1.msra.mxu0 0.0
    %1970 = vmatprep.subr.mxu0 0.0
    %1971 = vmatpush1.msra.mxu0 0.0
    %1972 = vmatprep.subr.mxu0 0.0
    %1973 = vmatpush1.msra.mxu0 0.0
    %1974 = vmatprep.subr.mxu0 0.0
    %1975 = vmatpush1.msra.mxu0 0.0
    %1976 = vmatprep.subr.mxu0 0.0
    %1977 = vmatpush1.msra.mxu0 0.0
    %1978 = vmatprep.subr.mxu0 0.0
    %1979 = vmatpush1.msra.mxu0 0.0
    %1980 = vmatprep.subr.mxu0 0.0
    %1981 = vmatpush1.msra.mxu0 0.0
    %1982 = vmatprep.subr.mxu0 0.0
    %1983 = vmatpush1.msra.mxu0 0.0
    %1984 = vmatprep.subr.mxu0 0.0
    %1985 = vmatpush1.msra.mxu0 0.0
    %1986 = vmatprep.subr.mxu0 0.0
    %1987 = vmatpush1.msra.mxu0 0.0
    %1988 = vmatprep.subr.mxu0 0.0
    %1989 = vmatpush1.msra.mxu0 0.0
    %v1990 = vand.u32 %v125, 4294901760
    %1991 = vmatprep.subr.mxu0 %v1990
    %v1992 = vand.u32 %v124, 4294901760
    %1993 = vmatpush1.msra.mxu0 %v1992
    %v1994 = vand.u32 %v117, 4294901760
    %1995 = vmatprep.subr.mxu0 %v1994
    %v1996 = vand.u32 %v116, 4294901760
    %1997 = vmatpush1.msra.mxu0 %v1996
    %1998 = vmatprep.subr.mxu0 0.0
    %1999 = vmatpush2.msra.mxu0 0.0
    %2000 = vmatprep.subr.mxu0 0.0
    %2001 = vmatpush2.msra.mxu0 0.0
    %2002 = vmatprep.subr.mxu0 0.0
    %2003 = vmatpush2.msra.mxu0 0.0
    %2004 = vmatprep.subr.mxu0 0.0
    %2005 = vmatpush2.msra.mxu0 0.0
    %2006 = vmatprep.subr.mxu0 0.0
    %2007 = vmatpush2.msra.mxu0 0.0
    %2008 = vmatprep.subr.mxu0 0.0
    %2009 = vmatpush2.msra.mxu0 0.0
    %2010 = vmatprep.subr.mxu0 0.0
    %2011 = vmatpush2.msra.mxu0 0.0
    %2012 = vmatprep.subr.mxu0 0.0
    %2013 = vmatpush2.msra.mxu0 0.0
    %2014 = vmatprep.subr.mxu0 0.0
    %2015 = vmatpush2.msra.mxu0 0.0
    %2016 = vmatprep.subr.mxu0 0.0
    %2017 = vmatpush2.msra.mxu0 0.0
    %2018 = vmatprep.subr.mxu0 0.0
    %2019 = vmatpush2.msra.mxu0 0.0
    %2020 = vmatprep.subr.mxu0 0.0
    %2021 = vmatpush2.msra.mxu0 0.0
    %2022 = vmatprep.subr.mxu0 0.0
    %2023 = vmatpush2.msra.mxu0 0.0
    %2024 = vmatprep.subr.mxu0 0.0
    %2025 = vmatpush2.msra.mxu0 0.0
    %2026 = vmatprep.subr.mxu0 0.0
    %2027 = vmatpush2.msra.mxu0 0.0
    %2028 = vmatprep.subr.mxu0 0.0
    %2029 = vmatpush2.msra.mxu0 0.0
    %2030 = vmatprep.mubr.f32.mxu0 0.0
    %v2031 = vand.u32 %v134, 4294901760
    %2032 = vmatmul.mubr.f32.gmra.mxu0 %v2031
    %v2033 = vpop.f32.mrf.mxu0
    %v2034 = vadd.f32 %v1937, %v2033
    %v2035 = vpop.f32.mrf.mxu0
    %v2036 = vadd.f32 %v1939, %v2035
    %2037 = vmatprep.mubr.f32.mxu0 0.0
    %v2038 = vand.u32 %v137, 4294901760
    %2039 = vmatmul.mubr.f32.gmra.mxu0 %v2038
    %v2040 = vpop.f32.mrf.mxu0
    %v2041 = vadd.f32 %v1944, %v2040
    %v2042 = vpop.f32.mrf.mxu0
    %v2043 = vadd.f32 %v1946, %v2042
    %2044 = vmatprep.mubr.f32.mxu0 0.0
    %v2045 = vand.u32 %v140, 4294901760
    %2046 = vmatmul.mubr.f32.gmra.mxu0 %v2045
    %v2047 = vpop.f32.mrf.mxu0
    %v2048 = vadd.f32 %v1951, %v2047
    %v2049 = vpop.f32.mrf.mxu0
    %v2050 = vadd.f32 %v1953, %v2049
    %2051 = vmatprep.mubr.f32.mxu0 0.0
    %v2052 = vand.u32 %v143, 4294901760
    %2053 = vmatmul.mubr.f32.gmra.mxu0 %v2052
    %v2054 = vpop.f32.mrf.mxu0
    %v2055 = vadd.f32 %v1958, %v2054
    %v2056 = vpop.f32.mrf.mxu0
    %v2057 = vadd.f32 %v1960, %v2056
    %2058 = vdwg.mxu0
    %2059 = vmatprep.subr.mxu0 0.0
    %2060 = vmatpush1.msra.mxu0 0.0
    %2061 = vmatprep.subr.mxu0 0.0
    %2062 = vmatpush1.msra.mxu0 0.0
    %2063 = vmatprep.subr.mxu0 0.0
    %2064 = vmatpush1.msra.mxu0 0.0
    %2065 = vmatprep.subr.mxu0 0.0
    %2066 = vmatpush1.msra.mxu0 0.0
    %2067 = vmatprep.subr.mxu0 0.0
    %2068 = vmatpush1.msra.mxu0 0.0
    %2069 = vmatprep.subr.mxu0 0.0
    %2070 = vmatpush1.msra.mxu0 0.0
    %2071 = vmatprep.subr.mxu0 0.0
    %2072 = vmatpush1.msra.mxu0 0.0
    %2073 = vmatprep.subr.mxu0 0.0
    %2074 = vmatpush1.msra.mxu0 0.0
    %2075 = vmatprep.subr.mxu0 0.0
    %2076 = vmatpush1.msra.mxu0 0.0
    %2077 = vmatprep.subr.mxu0 0.0
    %2078 = vmatpush1.msra.mxu0 0.0
    %2079 = vmatprep.subr.mxu0 0.0
    %2080 = vmatpush1.msra.mxu0 0.0
    %2081 = vmatprep.subr.mxu0 0.0
    %2082 = vmatpush1.msra.mxu0 0.0
    %2083 = vmatprep.subr.mxu0 0.0
    %2084 = vmatpush1.msra.mxu0 0.0
    %2085 = vmatprep.subr.mxu0 0.0
    %2086 = vmatpush1.msra.mxu0 0.0
    %v2087 = vand.u32 %v127, 4294901760
    %2088 = vmatprep.subr.mxu0 %v2087
    %v2089 = vand.u32 %v126, 4294901760
    %2090 = vmatpush1.msra.mxu0 %v2089
    %v2091 = vand.u32 %v119, 4294901760
    %2092 = vmatprep.subr.mxu0 %v2091
    %v2093 = vand.u32 %v118, 4294901760
    %2094 = vmatpush1.msra.mxu0 %v2093
    %2095 = vmatprep.subr.mxu0 0.0
    %2096 = vmatpush2.msra.mxu0 0.0
    %2097 = vmatprep.subr.mxu0 0.0
    %2098 = vmatpush2.msra.mxu0 0.0
    %2099 = vmatprep.subr.mxu0 0.0
    %2100 = vmatpush2.msra.mxu0 0.0
    %2101 = vmatprep.subr.mxu0 0.0
    %2102 = vmatpush2.msra.mxu0 0.0
    %2103 = vmatprep.subr.mxu0 0.0
    %2104 = vmatpush2.msra.mxu0 0.0
    %2105 = vmatprep.subr.mxu0 0.0
    %2106 = vmatpush2.msra.mxu0 0.0
    %2107 = vmatprep.subr.mxu0 0.0
    %2108 = vmatpush2.msra.mxu0 0.0
    %2109 = vmatprep.subr.mxu0 0.0
    %2110 = vmatpush2.msra.mxu0 0.0
    %2111 = vmatprep.subr.mxu0 0.0
    %2112 = vmatpush2.msra.mxu0 0.0
    %2113 = vmatprep.subr.mxu0 0.0
    %2114 = vmatpush2.msra.mxu0 0.0
    %2115 = vmatprep.subr.mxu0 0.0
    %2116 = vmatpush2.msra.mxu0 0.0
    %2117 = vmatprep.subr.mxu0 0.0
    %2118 = vmatpush2.msra.mxu0 0.0
    %2119 = vmatprep.subr.mxu0 0.0
    %2120 = vmatpush2.msra.mxu0 0.0
    %2121 = vmatprep.subr.mxu0 0.0
    %2122 = vmatpush2.msra.mxu0 0.0
    %2123 = vmatprep.subr.mxu0 0.0
    %2124 = vmatpush2.msra.mxu0 0.0
    %2125 = vmatprep.subr.mxu0 0.0
    %2126 = vmatpush2.msra.mxu0 0.0
    %2127 = vmatprep.mubr.f32.mxu0 0.0
    %v2128 = vand.u32 %v134, 4294901760
    %v2129 = vsub.f32 %v134, %v2128
    %v2130 = vand.u32 %v2129, 4294901760
    %v2131 = vsub.f32 %v2129, %v2130
    %v2132 = vand.u32 %v2131, 4294901760
    %2133 = vmatmul.mubr.f32.gmra.mxu0 %v2132
    %v2134 = vpop.f32.mrf.mxu0
    %v2135 = vadd.f32 0.0, %v2134
    %v2136 = vpop.f32.mrf.mxu0
    %v2137 = vadd.f32 0.0, %v2136
    %2138 = vmatprep.mubr.f32.mxu0 0.0
    %v2139 = vand.u32 %v137, 4294901760
    %v2140 = vsub.f32 %v137, %v2139
    %v2141 = vand.u32 %v2140, 4294901760
    %v2142 = vsub.f32 %v2140, %v2141
    %v2143 = vand.u32 %v2142, 4294901760
    %2144 = vmatmul.mubr.f32.gmra.mxu0 %v2143
    %v2145 = vpop.f32.mrf.mxu0
    %v2146 = vadd.f32 0.0, %v2145
    %v2147 = vpop.f32.mrf.mxu0
    %v2148 = vadd.f32 0.0, %v2147
    %2149 = vmatprep.mubr.f32.mxu0 0.0
    %v2150 = vand.u32 %v140, 4294901760
    %v2151 = vsub.f32 %v140, %v2150
    %v2152 = vand.u32 %v2151, 4294901760
    %v2153 = vsub.f32 %v2151, %v2152
    %v2154 = vand.u32 %v2153, 4294901760
    %2155 = vmatmul.mubr.f32.gmra.mxu0 %v2154
    %v2156 = vpop.f32.mrf.mxu0
    %v2157 = vadd.f32 0.0, %v2156
    %v2158 = vpop.f32.mrf.mxu0
    %v2159 = vadd.f32 0.0, %v2158
    %2160 = vmatprep.mubr.f32.mxu0 0.0
    %v2161 = vand.u32 %v143, 4294901760
    %v2162 = vsub.f32 %v143, %v2161
    %v2163 = vand.u32 %v2162, 4294901760
    %v2164 = vsub.f32 %v2162, %v2163
    %v2165 = vand.u32 %v2164, 4294901760
    %2166 = vmatmul.mubr.f32.gmra.mxu0 %v2165
    %v2167 = vpop.f32.mrf.mxu0
    %v2168 = vadd.f32 0.0, %v2167
    %v2169 = vpop.f32.mrf.mxu0
    %v2170 = vadd.f32 0.0, %v2169
    %2171 = vdwg.mxu0
    %2172 = vmatprep.subr.mxu0 0.0
    %2173 = vmatpush1.msra.mxu0 0.0
    %2174 = vmatprep.subr.mxu0 0.0
    %2175 = vmatpush1.msra.mxu0 0.0
    %2176 = vmatprep.subr.mxu0 0.0
    %2177 = vmatpush1.msra.mxu0 0.0
    %2178 = vmatprep.subr.mxu0 0.0
    %2179 = vmatpush1.msra.mxu0 0.0
    %2180 = vmatprep.subr.mxu0 0.0
    %2181 = vmatpush1.msra.mxu0 0.0
    %2182 = vmatprep.subr.mxu0 0.0
    %2183 = vmatpush1.msra.mxu0 0.0
    %2184 = vmatprep.subr.mxu0 0.0
    %2185 = vmatpush1.msra.mxu0 0.0
    %2186 = vmatprep.subr.mxu0 0.0
    %2187 = vmatpush1.msra.mxu0 0.0
    %2188 = vmatprep.subr.mxu0 0.0
    %2189 = vmatpush1.msra.mxu0 0.0
    %2190 = vmatprep.subr.mxu0 0.0
    %2191 = vmatpush1.msra.mxu0 0.0
    %2192 = vmatprep.subr.mxu0 0.0
    %2193 = vmatpush1.msra.mxu0 0.0
    %2194 = vmatprep.subr.mxu0 0.0
    %2195 = vmatpush1.msra.mxu0 0.0
    %2196 = vmatprep.subr.mxu0 0.0
    %2197 = vmatpush1.msra.mxu0 0.0
    %2198 = vmatprep.subr.mxu0 0.0
    %2199 = vmatpush1.msra.mxu0 0.0
    %v2200 = vand.u32 %v127, 4294901760
    %v2201 = vsub.f32 %v127, %v2200
    %v2202 = vand.u32 %v2201, 4294901760
    %v2203 = vsub.f32 %v2201, %v2202
    %v2204 = vand.u32 %v2203, 4294901760
    %2205 = vmatprep.subr.mxu0 %v2204
    %v2206 = vand.u32 %v126, 4294901760
    %v2207 = vsub.f32 %v126, %v2206
    %v2208 = vand.u32 %v2207, 4294901760
    %v2209 = vsub.f32 %v2207, %v2208
    %v2210 = vand.u32 %v2209, 4294901760
    %2211 = vmatpush1.msra.mxu0 %v2210
    %v2212 = vand.u32 %v119, 4294901760
    %v2213 = vsub.f32 %v119, %v2212
    %v2214 = vand.u32 %v2213, 4294901760
    %v2215 = vsub.f32 %v2213, %v2214
    %v2216 = vand.u32 %v2215, 4294901760
    %2217 = vmatprep.subr.mxu0 %v2216
    %v2218 = vand.u32 %v118, 4294901760
    %v2219 = vsub.f32 %v118, %v2218
    %v2220 = vand.u32 %v2219, 4294901760
    %v2221 = vsub.f32 %v2219, %v2220
    %v2222 = vand.u32 %v2221, 4294901760
    %2223 = vmatpush1.msra.mxu0 %v2222
    %2224 = vmatprep.subr.mxu0 0.0
    %2225 = vmatpush2.msra.mxu0 0.0
    %2226 = vmatprep.subr.mxu0 0.0
    %2227 = vmatpush2.msra.mxu0 0.0
    %2228 = vmatprep.subr.mxu0 0.0
    %2229 = vmatpush2.msra.mxu0 0.0
    %2230 = vmatprep.subr.mxu0 0.0
    %2231 = vmatpush2.msra.mxu0 0.0
    %2232 = vmatprep.subr.mxu0 0.0
    %2233 = vmatpush2.msra.mxu0 0.0
    %2234 = vmatprep.subr.mxu0 0.0
    %2235 = vmatpush2.msra.mxu0 0.0
    %2236 = vmatprep.subr.mxu0 0.0
    %2237 = vmatpush2.msra.mxu0 0.0
    %2238 = vmatprep.subr.mxu0 0.0
    %2239 = vmatpush2.msra.mxu0 0.0
    %2240 = vmatprep.subr.mxu0 0.0
    %2241 = vmatpush2.msra.mxu0 0.0
    %2242 = vmatprep.subr.mxu0 0.0
    %2243 = vmatpush2.msra.mxu0 0.0
    %2244 = vmatprep.subr.mxu0 0.0
    %2245 = vmatpush2.msra.mxu0 0.0
    %2246 = vmatprep.subr.mxu0 0.0
    %2247 = vmatpush2.msra.mxu0 0.0
    %2248 = vmatprep.subr.mxu0 0.0
    %2249 = vmatpush2.msra.mxu0 0.0
    %2250 = vmatprep.subr.mxu0 0.0
    %2251 = vmatpush2.msra.mxu0 0.0
    %2252 = vmatprep.subr.mxu0 0.0
    %2253 = vmatpush2.msra.mxu0 0.0
    %2254 = vmatprep.subr.mxu0 0.0
    %2255 = vmatpush2.msra.mxu0 0.0
    %2256 = vmatprep.mubr.f32.mxu0 0.0
    %v2257 = vand.u32 %v134, 4294901760
    %2258 = vmatmul.mubr.f32.gmra.mxu0 %v2257
    %v2259 = vpop.f32.mrf.mxu0
    %v2260 = vadd.f32 %v2135, %v2259
    %v2261 = vpop.f32.mrf.mxu0
    %v2262 = vadd.f32 %v2137, %v2261
    %2263 = vmatprep.mubr.f32.mxu0 0.0
    %v2264 = vand.u32 %v137, 4294901760
    %2265 = vmatmul.mubr.f32.gmra.mxu0 %v2264
    %v2266 = vpop.f32.mrf.mxu0
    %v2267 = vadd.f32 %v2146, %v2266
    %v2268 = vpop.f32.mrf.mxu0
    %v2269 = vadd.f32 %v2148, %v2268
    %2270 = vmatprep.mubr.f32.mxu0 0.0
    %v2271 = vand.u32 %v140, 4294901760
    %2272 = vmatmul.mubr.f32.gmra.mxu0 %v2271
    %v2273 = vpop.f32.mrf.mxu0
    %v2274 = vadd.f32 %v2157, %v2273
    %v2275 = vpop.f32.mrf.mxu0
    %v2276 = vadd.f32 %v2159, %v2275
    %2277 = vmatprep.mubr.f32.mxu0 0.0
    %v2278 = vand.u32 %v143, 4294901760
    %2279 = vmatmul.mubr.f32.gmra.mxu0 %v2278
    %v2280 = vpop.f32.mrf.mxu0
    %v2281 = vadd.f32 %v2168, %v2280
    %v2282 = vpop.f32.mrf.mxu0
    %v2283 = vadd.f32 %v2170, %v2282
    %2284 = vdwg.mxu0
    %2285 = vmatprep.subr.mxu0 0.0
    %2286 = vmatpush1.msra.mxu0 0.0
    %2287 = vmatprep.subr.mxu0 0.0
    %2288 = vmatpush1.msra.mxu0 0.0
    %2289 = vmatprep.subr.mxu0 0.0
    %2290 = vmatpush1.msra.mxu0 0.0
    %2291 = vmatprep.subr.mxu0 0.0
    %2292 = vmatpush1.msra.mxu0 0.0
    %2293 = vmatprep.subr.mxu0 0.0
    %2294 = vmatpush1.msra.mxu0 0.0
    %2295 = vmatprep.subr.mxu0 0.0
    %2296 = vmatpush1.msra.mxu0 0.0
    %2297 = vmatprep.subr.mxu0 0.0
    %2298 = vmatpush1.msra.mxu0 0.0
    %2299 = vmatprep.subr.mxu0 0.0
    %2300 = vmatpush1.msra.mxu0 0.0
    %2301 = vmatprep.subr.mxu0 0.0
    %2302 = vmatpush1.msra.mxu0 0.0
    %2303 = vmatprep.subr.mxu0 0.0
    %2304 = vmatpush1.msra.mxu0 0.0
    %2305 = vmatprep.subr.mxu0 0.0
    %2306 = vmatpush1.msra.mxu0 0.0
    %2307 = vmatprep.subr.mxu0 0.0
    %2308 = vmatpush1.msra.mxu0 0.0
    %2309 = vmatprep.subr.mxu0 0.0
    %2310 = vmatpush1.msra.mxu0 0.0
    %2311 = vmatprep.subr.mxu0 0.0
    %2312 = vmatpush1.msra.mxu0 0.0
    %v2313 = vand.u32 %v127, 4294901760
    %v2314 = vsub.f32 %v127, %v2313
    %2315 = vmatprep.subr.mxu0 %v2314
    %v2316 = vand.u32 %v126, 4294901760
    %v2317 = vsub.f32 %v126, %v2316
    %2318 = vmatpush1.msra.mxu0 %v2317
    %v2319 = vand.u32 %v119, 4294901760
    %v2320 = vsub.f32 %v119, %v2319
    %2321 = vmatprep.subr.mxu0 %v2320
    %v2322 = vand.u32 %v118, 4294901760
    %v2323 = vsub.f32 %v118, %v2322
    %2324 = vmatpush1.msra.mxu0 %v2323
    %2325 = vmatprep.subr.mxu0 0.0
    %2326 = vmatpush2.msra.mxu0 0.0
    %2327 = vmatprep.subr.mxu0 0.0
    %2328 = vmatpush2.msra.mxu0 0.0
    %2329 = vmatprep.subr.mxu0 0.0
    %2330 = vmatpush2.msra.mxu0 0.0
    %2331 = vmatprep.subr.mxu0 0.0
    %2332 = vmatpush2.msra.mxu0 0.0
    %2333 = vmatprep.subr.mxu0 0.0
    %2334 = vmatpush2.msra.mxu0 0.0
    %2335 = vmatprep.subr.mxu0 0.0
    %2336 = vmatpush2.msra.mxu0 0.0
    %2337 = vmatprep.subr.mxu0 0.0
    %2338 = vmatpush2.msra.mxu0 0.0
    %2339 = vmatprep.subr.mxu0 0.0
    %2340 = vmatpush2.msra.mxu0 0.0
    %2341 = vmatprep.subr.mxu0 0.0
    %2342 = vmatpush2.msra.mxu0 0.0
    %2343 = vmatprep.subr.mxu0 0.0
    %2344 = vmatpush2.msra.mxu0 0.0
    %2345 = vmatprep.subr.mxu0 0.0
    %2346 = vmatpush2.msra.mxu0 0.0
    %2347 = vmatprep.subr.mxu0 0.0
    %2348 = vmatpush2.msra.mxu0 0.0
    %2349 = vmatprep.subr.mxu0 0.0
    %2350 = vmatpush2.msra.mxu0 0.0
    %2351 = vmatprep.subr.mxu0 0.0
    %2352 = vmatpush2.msra.mxu0 0.0
    %2353 = vmatprep.subr.mxu0 0.0
    %2354 = vmatpush2.msra.mxu0 0.0
    %2355 = vmatprep.subr.mxu0 0.0
    %2356 = vmatpush2.msra.mxu0 0.0
    %2357 = vmatprep.mubr.f32.mxu0 0.0
    %v2358 = vand.u32 %v134, 4294901760
    %v2359 = vsub.f32 %v134, %v2358
    %2360 = vmatmul.mubr.f32.gmra.mxu0 %v2359
    %v2361 = vpop.f32.mrf.mxu0
    %v2362 = vadd.f32 %v2260, %v2361
    %v2363 = vpop.f32.mrf.mxu0
    %v2364 = vadd.f32 %v2262, %v2363
    %2365 = vmatprep.mubr.f32.mxu0 0.0
    %v2366 = vand.u32 %v137, 4294901760
    %v2367 = vsub.f32 %v137, %v2366
    %2368 = vmatmul.mubr.f32.gmra.mxu0 %v2367
    %v2369 = vpop.f32.mrf.mxu0
    %v2370 = vadd.f32 %v2267, %v2369
    %v2371 = vpop.f32.mrf.mxu0
    %v2372 = vadd.f32 %v2269, %v2371
    %2373 = vmatprep.mubr.f32.mxu0 0.0
    %v2374 = vand.u32 %v140, 4294901760
    %v2375 = vsub.f32 %v140, %v2374
    %2376 = vmatmul.mubr.f32.gmra.mxu0 %v2375
    %v2377 = vpop.f32.mrf.mxu0
    %v2378 = vadd.f32 %v2274, %v2377
    %v2379 = vpop.f32.mrf.mxu0
    %v2380 = vadd.f32 %v2276, %v2379
    %2381 = vmatprep.mubr.f32.mxu0 0.0
    %v2382 = vand.u32 %v143, 4294901760
    %v2383 = vsub.f32 %v143, %v2382
    %2384 = vmatmul.mubr.f32.gmra.mxu0 %v2383
    %v2385 = vpop.f32.mrf.mxu0
    %v2386 = vadd.f32 %v2281, %v2385
    %v2387 = vpop.f32.mrf.mxu0
    %v2388 = vadd.f32 %v2283, %v2387
    %2389 = vdwg.mxu0
    %2390 = vmatprep.subr.mxu0 0.0
    %2391 = vmatpush1.msra.mxu0 0.0
    %2392 = vmatprep.subr.mxu0 0.0
    %2393 = vmatpush1.msra.mxu0 0.0
    %2394 = vmatprep.subr.mxu0 0.0
    %2395 = vmatpush1.msra.mxu0 0.0
    %2396 = vmatprep.subr.mxu0 0.0
    %2397 = vmatpush1.msra.mxu0 0.0
    %2398 = vmatprep.subr.mxu0 0.0
    %2399 = vmatpush1.msra.mxu0 0.0
    %2400 = vmatprep.subr.mxu0 0.0
    %2401 = vmatpush1.msra.mxu0 0.0
    %2402 = vmatprep.subr.mxu0 0.0
    %2403 = vmatpush1.msra.mxu0 0.0
    %2404 = vmatprep.subr.mxu0 0.0
    %2405 = vmatpush1.msra.mxu0 0.0
    %2406 = vmatprep.subr.mxu0 0.0
    %2407 = vmatpush1.msra.mxu0 0.0
    %2408 = vmatprep.subr.mxu0 0.0
    %2409 = vmatpush1.msra.mxu0 0.0
    %2410 = vmatprep.subr.mxu0 0.0
    %2411 = vmatpush1.msra.mxu0 0.0
    %2412 = vmatprep.subr.mxu0 0.0
    %2413 = vmatpush1.msra.mxu0 0.0
    %2414 = vmatprep.subr.mxu0 0.0
    %2415 = vmatpush1.msra.mxu0 0.0
    %2416 = vmatprep.subr.mxu0 0.0
    %2417 = vmatpush1.msra.mxu0 0.0
    %v2418 = vand.u32 %v127, 4294901760
    %2419 = vmatprep.subr.mxu0 %v2418
    %v2420 = vand.u32 %v126, 4294901760
    %2421 = vmatpush1.msra.mxu0 %v2420
    %v2422 = vand.u32 %v119, 4294901760
    %2423 = vmatprep.subr.mxu0 %v2422
    %v2424 = vand.u32 %v118, 4294901760
    %2425 = vmatpush1.msra.mxu0 %v2424
    %2426 = vmatprep.subr.mxu0 0.0
    %2427 = vmatpush2.msra.mxu0 0.0
    %2428 = vmatprep.subr.mxu0 0.0
    %2429 = vmatpush2.msra.mxu0 0.0
    %2430 = vmatprep.subr.mxu0 0.0
    %2431 = vmatpush2.msra.mxu0 0.0
    %2432 = vmatprep.subr.mxu0 0.0
    %2433 = vmatpush2.msra.mxu0 0.0
    %2434 = vmatprep.subr.mxu0 0.0
    %2435 = vmatpush2.msra.mxu0 0.0
    %2436 = vmatprep.subr.mxu0 0.0
    %2437 = vmatpush2.msra.mxu0 0.0
    %2438 = vmatprep.subr.mxu0 0.0
    %2439 = vmatpush2.msra.mxu0 0.0
    %2440 = vmatprep.subr.mxu0 0.0
    %2441 = vmatpush2.msra.mxu0 0.0
    %2442 = vmatprep.subr.mxu0 0.0
    %2443 = vmatpush2.msra.mxu0 0.0
    %2444 = vmatprep.subr.mxu0 0.0
    %2445 = vmatpush2.msra.mxu0 0.0
    %2446 = vmatprep.subr.mxu0 0.0
    %2447 = vmatpush2.msra.mxu0 0.0
    %2448 = vmatprep.subr.mxu0 0.0
    %2449 = vmatpush2.msra.mxu0 0.0
    %2450 = vmatprep.subr.mxu0 0.0
    %2451 = vmatpush2.msra.mxu0 0.0
    %2452 = vmatprep.subr.mxu0 0.0
    %2453 = vmatpush2.msra.mxu0 0.0
    %2454 = vmatprep.subr.mxu0 0.0
    %2455 = vmatpush2.msra.mxu0 0.0
    %2456 = vmatprep.subr.mxu0 0.0
    %2457 = vmatpush2.msra.mxu0 0.0
    %2458 = vmatprep.mubr.f32.mxu0 0.0
    %v2459 = vand.u32 %v134, 4294901760
    %v2460 = vsub.f32 %v134, %v2459
    %v2461 = vand.u32 %v2460, 4294901760
    %2462 = vmatmul.mubr.f32.gmra.mxu0 %v2461
    %v2463 = vpop.f32.mrf.mxu0
    %v2464 = vadd.f32 %v2362, %v2463
    %v2465 = vpop.f32.mrf.mxu0
    %v2466 = vadd.f32 %v2364, %v2465
    %2467 = vmatprep.mubr.f32.mxu0 0.0
    %v2468 = vand.u32 %v137, 4294901760
    %v2469 = vsub.f32 %v137, %v2468
    %v2470 = vand.u32 %v2469, 4294901760
    %2471 = vmatmul.mubr.f32.gmra.mxu0 %v2470
    %v2472 = vpop.f32.mrf.mxu0
    %v2473 = vadd.f32 %v2370, %v2472
    %v2474 = vpop.f32.mrf.mxu0
    %v2475 = vadd.f32 %v2372, %v2474
    %2476 = vmatprep.mubr.f32.mxu0 0.0
    %v2477 = vand.u32 %v140, 4294901760
    %v2478 = vsub.f32 %v140, %v2477
    %v2479 = vand.u32 %v2478, 4294901760
    %2480 = vmatmul.mubr.f32.gmra.mxu0 %v2479
    %v2481 = vpop.f32.mrf.mxu0
    %v2482 = vadd.f32 %v2378, %v2481
    %v2483 = vpop.f32.mrf.mxu0
    %v2484 = vadd.f32 %v2380, %v2483
    %2485 = vmatprep.mubr.f32.mxu0 0.0
    %v2486 = vand.u32 %v143, 4294901760
    %v2487 = vsub.f32 %v143, %v2486
    %v2488 = vand.u32 %v2487, 4294901760
    %2489 = vmatmul.mubr.f32.gmra.mxu0 %v2488
    %v2490 = vpop.f32.mrf.mxu0
    %v2491 = vadd.f32 %v2386, %v2490
    %v2492 = vpop.f32.mrf.mxu0
    %v2493 = vadd.f32 %v2388, %v2492
    %2494 = vdwg.mxu0
    %2495 = vmatprep.subr.mxu0 0.0
    %2496 = vmatpush1.msra.mxu0 0.0
    %2497 = vmatprep.subr.mxu0 0.0
    %2498 = vmatpush1.msra.mxu0 0.0
    %2499 = vmatprep.subr.mxu0 0.0
    %2500 = vmatpush1.msra.mxu0 0.0
    %2501 = vmatprep.subr.mxu0 0.0
    %2502 = vmatpush1.msra.mxu0 0.0
    %2503 = vmatprep.subr.mxu0 0.0
    %2504 = vmatpush1.msra.mxu0 0.0
    %2505 = vmatprep.subr.mxu0 0.0
    %2506 = vmatpush1.msra.mxu0 0.0
    %2507 = vmatprep.subr.mxu0 0.0
    %2508 = vmatpush1.msra.mxu0 0.0
    %2509 = vmatprep.subr.mxu0 0.0
    %2510 = vmatpush1.msra.mxu0 0.0
    %2511 = vmatprep.subr.mxu0 0.0
    %2512 = vmatpush1.msra.mxu0 0.0
    %2513 = vmatprep.subr.mxu0 0.0
    %2514 = vmatpush1.msra.mxu0 0.0
    %2515 = vmatprep.subr.mxu0 0.0
    %2516 = vmatpush1.msra.mxu0 0.0
    %2517 = vmatprep.subr.mxu0 0.0
    %2518 = vmatpush1.msra.mxu0 0.0
    %2519 = vmatprep.subr.mxu0 0.0
    %2520 = vmatpush1.msra.mxu0 0.0
    %2521 = vmatprep.subr.mxu0 0.0
    %2522 = vmatpush1.msra.mxu0 0.0
    %v2523 = vand.u32 %v127, 4294901760
    %v2524 = vsub.f32 %v127, %v2523
    %v2525 = vand.u32 %v2524, 4294901760
    %2526 = vmatprep.subr.mxu0 %v2525
    %v2527 = vand.u32 %v126, 4294901760
    %v2528 = vsub.f32 %v126, %v2527
    %v2529 = vand.u32 %v2528, 4294901760
    %2530 = vmatpush1.msra.mxu0 %v2529
    %v2531 = vand.u32 %v119, 4294901760
    %v2532 = vsub.f32 %v119, %v2531
    %v2533 = vand.u32 %v2532, 4294901760
    %2534 = vmatprep.subr.mxu0 %v2533
    %v2535 = vand.u32 %v118, 4294901760
    %v2536 = vsub.f32 %v118, %v2535
    %v2537 = vand.u32 %v2536, 4294901760
    %2538 = vmatpush1.msra.mxu0 %v2537
    %2539 = vmatprep.subr.mxu0 0.0
    %2540 = vmatpush2.msra.mxu0 0.0
    %2541 = vmatprep.subr.mxu0 0.0
    %2542 = vmatpush2.msra.mxu0 0.0
    %2543 = vmatprep.subr.mxu0 0.0
    %2544 = vmatpush2.msra.mxu0 0.0
    %2545 = vmatprep.subr.mxu0 0.0
    %2546 = vmatpush2.msra.mxu0 0.0
    %2547 = vmatprep.subr.mxu0 0.0
    %2548 = vmatpush2.msra.mxu0 0.0
    %2549 = vmatprep.subr.mxu0 0.0
    %2550 = vmatpush2.msra.mxu0 0.0
    %2551 = vmatprep.subr.mxu0 0.0
    %2552 = vmatpush2.msra.mxu0 0.0
    %2553 = vmatprep.subr.mxu0 0.0
    %2554 = vmatpush2.msra.mxu0 0.0
    %2555 = vmatprep.subr.mxu0 0.0
    %2556 = vmatpush2.msra.mxu0 0.0
    %2557 = vmatprep.subr.mxu0 0.0
    %2558 = vmatpush2.msra.mxu0 0.0
    %2559 = vmatprep.subr.mxu0 0.0
    %2560 = vmatpush2.msra.mxu0 0.0
    %2561 = vmatprep.subr.mxu0 0.0
    %2562 = vmatpush2.msra.mxu0 0.0
    %2563 = vmatprep.subr.mxu0 0.0
    %2564 = vmatpush2.msra.mxu0 0.0
    %2565 = vmatprep.subr.mxu0 0.0
    %2566 = vmatpush2.msra.mxu0 0.0
    %2567 = vmatprep.subr.mxu0 0.0
    %2568 = vmatpush2.msra.mxu0 0.0
    %2569 = vmatprep.subr.mxu0 0.0
    %2570 = vmatpush2.msra.mxu0 0.0
    %2571 = vmatprep.mubr.f32.mxu0 0.0
    %v2572 = vand.u32 %v134, 4294901760
    %2573 = vmatmul.mubr.f32.gmra.mxu0 %v2572
    %v2574 = vpop.f32.mrf.mxu0
    %v2575 = vadd.f32 %v2464, %v2574
    %v2576 = vpop.f32.mrf.mxu0
    %v2577 = vadd.f32 %v2466, %v2576
    %2578 = vmatprep.mubr.f32.mxu0 0.0
    %v2579 = vand.u32 %v137, 4294901760
    %2580 = vmatmul.mubr.f32.gmra.mxu0 %v2579
    %v2581 = vpop.f32.mrf.mxu0
    %v2582 = vadd.f32 %v2473, %v2581
    %v2583 = vpop.f32.mrf.mxu0
    %v2584 = vadd.f32 %v2475, %v2583
    %2585 = vmatprep.mubr.f32.mxu0 0.0
    %v2586 = vand.u32 %v140, 4294901760
    %2587 = vmatmul.mubr.f32.gmra.mxu0 %v2586
    %v2588 = vpop.f32.mrf.mxu0
    %v2589 = vadd.f32 %v2482, %v2588
    %v2590 = vpop.f32.mrf.mxu0
    %v2591 = vadd.f32 %v2484, %v2590
    %2592 = vmatprep.mubr.f32.mxu0 0.0
    %v2593 = vand.u32 %v143, 4294901760
    %2594 = vmatmul.mubr.f32.gmra.mxu0 %v2593
    %v2595 = vpop.f32.mrf.mxu0
    %v2596 = vadd.f32 %v2491, %v2595
    %v2597 = vpop.f32.mrf.mxu0
    %v2598 = vadd.f32 %v2493, %v2597
    %2599 = vdwg.mxu0
    %2600 = vmatprep.subr.mxu0 0.0
    %2601 = vmatpush1.msra.mxu0 0.0
    %2602 = vmatprep.subr.mxu0 0.0
    %2603 = vmatpush1.msra.mxu0 0.0
    %2604 = vmatprep.subr.mxu0 0.0
    %2605 = vmatpush1.msra.mxu0 0.0
    %2606 = vmatprep.subr.mxu0 0.0
    %2607 = vmatpush1.msra.mxu0 0.0
    %2608 = vmatprep.subr.mxu0 0.0
    %2609 = vmatpush1.msra.mxu0 0.0
    %2610 = vmatprep.subr.mxu0 0.0
    %2611 = vmatpush1.msra.mxu0 0.0
    %2612 = vmatprep.subr.mxu0 0.0
    %2613 = vmatpush1.msra.mxu0 0.0
    %2614 = vmatprep.subr.mxu0 0.0
    %2615 = vmatpush1.msra.mxu0 0.0
    %2616 = vmatprep.subr.mxu0 0.0
    %2617 = vmatpush1.msra.mxu0 0.0
    %2618 = vmatprep.subr.mxu0 0.0
    %2619 = vmatpush1.msra.mxu0 0.0
    %2620 = vmatprep.subr.mxu0 0.0
    %2621 = vmatpush1.msra.mxu0 0.0
    %2622 = vmatprep.subr.mxu0 0.0
    %2623 = vmatpush1.msra.mxu0 0.0
    %2624 = vmatprep.subr.mxu0 0.0
    %2625 = vmatpush1.msra.mxu0 0.0
    %2626 = vmatprep.subr.mxu0 0.0
    %2627 = vmatpush1.msra.mxu0 0.0
    %v2628 = vand.u32 %v127, 4294901760
    %2629 = vmatprep.subr.mxu0 %v2628
    %v2630 = vand.u32 %v126, 4294901760
    %2631 = vmatpush1.msra.mxu0 %v2630
    %v2632 = vand.u32 %v119, 4294901760
    %2633 = vmatprep.subr.mxu0 %v2632
    %v2634 = vand.u32 %v118, 4294901760
    %2635 = vmatpush1.msra.mxu0 %v2634
    %2636 = vmatprep.subr.mxu0 0.0
    %2637 = vmatpush2.msra.mxu0 0.0
    %2638 = vmatprep.subr.mxu0 0.0
    %2639 = vmatpush2.msra.mxu0 0.0
    %2640 = vmatprep.subr.mxu0 0.0
    %2641 = vmatpush2.msra.mxu0 0.0
    %2642 = vmatprep.subr.mxu0 0.0
    %2643 = vmatpush2.msra.mxu0 0.0
    %2644 = vmatprep.subr.mxu0 0.0
    %2645 = vmatpush2.msra.mxu0 0.0
    %2646 = vmatprep.subr.mxu0 0.0
    %2647 = vmatpush2.msra.mxu0 0.0
    %2648 = vmatprep.subr.mxu0 0.0
    %2649 = vmatpush2.msra.mxu0 0.0
    %2650 = vmatprep.subr.mxu0 0.0
    %2651 = vmatpush2.msra.mxu0 0.0
    %2652 = vmatprep.subr.mxu0 0.0
    %2653 = vmatpush2.msra.mxu0 0.0
    %2654 = vmatprep.subr.mxu0 0.0
    %2655 = vmatpush2.msra.mxu0 0.0
    %2656 = vmatprep.subr.mxu0 0.0
    %2657 = vmatpush2.msra.mxu0 0.0
    %2658 = vmatprep.subr.mxu0 0.0
    %2659 = vmatpush2.msra.mxu0 0.0
    %2660 = vmatprep.subr.mxu0 0.0
    %2661 = vmatpush2.msra.mxu0 0.0
    %2662 = vmatprep.subr.mxu0 0.0
    %2663 = vmatpush2.msra.mxu0 0.0
    %2664 = vmatprep.subr.mxu0 0.0
    %2665 = vmatpush2.msra.mxu0 0.0
    %2666 = vmatprep.subr.mxu0 0.0
    %2667 = vmatpush2.msra.mxu0 0.0
    %2668 = vmatprep.mubr.f32.mxu0 0.0
    %v2669 = vand.u32 %v134, 4294901760
    %2670 = vmatmul.mubr.f32.gmra.mxu0 %v2669
    %v2671 = vpop.f32.mrf.mxu0
    %v2672 = vadd.f32 %v2575, %v2671
    %v2673 = vpop.f32.mrf.mxu0
    %v2674 = vadd.f32 %v2577, %v2673
    %2675 = vmatprep.mubr.f32.mxu0 0.0
    %v2676 = vand.u32 %v137, 4294901760
    %2677 = vmatmul.mubr.f32.gmra.mxu0 %v2676
    %v2678 = vpop.f32.mrf.mxu0
    %v2679 = vadd.f32 %v2582, %v2678
    %v2680 = vpop.f32.mrf.mxu0
    %v2681 = vadd.f32 %v2584, %v2680
    %2682 = vmatprep.mubr.f32.mxu0 0.0
    %v2683 = vand.u32 %v140, 4294901760
    %2684 = vmatmul.mubr.f32.gmra.mxu0 %v2683
    %v2685 = vpop.f32.mrf.mxu0
    %v2686 = vadd.f32 %v2589, %v2685
    %v2687 = vpop.f32.mrf.mxu0
    %v2688 = vadd.f32 %v2591, %v2687
    %2689 = vmatprep.mubr.f32.mxu0 0.0
    %v2690 = vand.u32 %v143, 4294901760
    %2691 = vmatmul.mubr.f32.gmra.mxu0 %v2690
    %v2692 = vpop.f32.mrf.mxu0
    %v2693 = vadd.f32 %v2596, %v2692
    %v2694 = vpop.f32.mrf.mxu0
    %v2695 = vadd.f32 %v2598, %v2694
    %2696 = vdwg.mxu0
    %2697 = vst [vmem:[#allocation2] sm:$0xff] %v758
    %2698 = vst [vmem:[#allocation2 + $0x8] sm:$0xff] %v760
    %2699 = vst [vmem:[#allocation2 + $0x10] sm:$0xff] %v1396
    %2700 = vst [vmem:[#allocation2 + $0x18] sm:$0xff] %v1398
    %2701 = vst [vmem:[#allocation2 + $0x20] sm:$0xff] %v765
    %2702 = vst [vmem:[#allocation2 + $0x28] sm:$0xff] %v767
    %2703 = vst [vmem:[#allocation2 + $0x30] sm:$0xff] %v1403
    %2704 = vst [vmem:[#allocation2 + $0x38] sm:$0xff] %v1405
    %2705 = vst [vmem:[#allocation2 + $0x40] sm:$0xff] %v772
    %2706 = vst [vmem:[#allocation2 + $0x48] sm:$0xff] %v774
    %2707 = vst [vmem:[#allocation2 + $0x50] sm:$0xff] %v1410
    %2708 = vst [vmem:[#allocation2 + $0x58] sm:$0xff] %v1412
    %2709 = vst [vmem:[#allocation2 + $0x60] sm:$0xff] %v779
    %2710 = vst [vmem:[#allocation2 + $0x68] sm:$0xff] %v781
    %2711 = vst [vmem:[#allocation2 + $0x70] sm:$0xff] %v1417
    %2712 = vst [vmem:[#allocation2 + $0x78] sm:$0xff] %v1419
    %s2713 = scalar_lea.vmem [#allocation2], 128
    %2714 = vst [vmem:[%s2713] sm:$0xff] %v2034
    %2715 = vst [vmem:[%s2713 + $0x8] sm:$0xff] %v2036
    %2716 = vst [vmem:[%s2713 + $0x10] sm:$0xff] %v2672
    %2717 = vst [vmem:[%s2713 + $0x18] sm:$0xff] %v2674
    %2718 = vst [vmem:[%s2713 + $0x20] sm:$0xff] %v2041
    %2719 = vst [vmem:[%s2713 + $0x28] sm:$0xff] %v2043
    %2720 = vst [vmem:[%s2713 + $0x30] sm:$0xff] %v2679
    %2721 = vst [vmem:[%s2713 + $0x38] sm:$0xff] %v2681
    %2722 = vst [vmem:[%s2713 + $0x40] sm:$0xff] %v2048
    %2723 = vst [vmem:[%s2713 + $0x48] sm:$0xff] %v2050
    %2724 = vst [vmem:[%s2713 + $0x50] sm:$0xff] %v2686
    %2725 = vst [vmem:[%s2713 + $0x58] sm:$0xff] %v2688
    %2726 = vst [vmem:[%s2713 + $0x60] sm:$0xff] %v2055
    %2727 = vst [vmem:[%s2713 + $0x68] sm:$0xff] %v2057
    %2728 = vst [vmem:[%s2713 + $0x70] sm:$0xff] %v2693
    %2729 = vst [vmem:[%s2713 + $0x78] sm:$0xff] %v2695
    // Predicated region
    $region10: #{fn.1} parent=1 // pred_check
      _
    $region11: #{fn.1} parent=1 // pred_check_branch
      %2731 = sbr.rel (0) target = $region13
    $region12: #{fn.1} parent=1 // pred_region
      %s2733 = ssub.s32 4096, 4096
      %2734 = vsyncadd [#allocation3], %s2733
      %s2735 = sshll.u32 [#allocation2], 4
      %s2736 = int_to_ptr.vmem [resolvable:$true] %s2735
      %2741 = dma.vmem_to_hbm [thread:$0]  %s2736, 4096, %s2, [#allocation3], 512, 512, 32
    $region13: #{fn.1} parent=1 // pred_fallthru
      _
    // Predicated region
    $region14: #{fn.1} parent=1 // pred_check
      _
    $region15: #{fn.1} parent=1 // pred_check_branch
      %2743 = sbr.rel (0) target = $region17
    $region16: #{fn.1} parent=1 // pred_region
      %2744 = dma.done [#allocation3], 4096
    $region17: #{fn.1} parent=1 // pred_fallthru
      _
    %2745 = vsyncpa [#allocation3], 1

// kernel: fn.1
$region0: #{fn.1}
  #allocation0 [shape = 'u32[]', space=smem, size = 0x4, offset = 0x4, fixed_abs, tag = 'smem constant byte address 0x4 - core index']
  #allocation1 [shape = 'u32[144,128]{1,0:T(1,128)}', space=vmem, size = 0x12000, scoped, tag = 'internal scratch']
  %s0 = inlined_call_operand.vmem [shape: s32[2,512], index: 0, kind: input, shape index: {}]
  %s1 = inlined_call_operand.vmem [shape: f32[32,16], index: 1, kind: input, shape index: {}]
  %s2 = inlined_call_operand.hbm [shape: f32[2,32,512], index: 2, kind: output, shape index: {}]
  %s3 = sld [smem:[#allocation0]]
  $region18: #{fn.1} parent=0
    _
  %s5 = ssub.s32 1, %s3
  %s6 = scalar_select 0, %s5, %s3
  $region1: #{fn.1} parent=0
    #allocation2 [shape = 'u8[131072]{0}', space=vmem, size = 0x20000, scoped, tag = 'output window, operand 0, single buffered']
    #allocation3 [shape = 's32[1]{0}', space=sflag, size = 0x4, scoped, tag = 'scoped memory for fn.1']
    %7 = vsyncpa [#allocation3], 0
    // Predicated region
    $region2: #{fn.1} parent=1 // pred_check
      _
    $region3: #{fn.1} parent=1 // pred_check_branch
      %9 = sbr.rel (0) target = $region5
    $region4: #{fn.1} parent=1 // pred_region
      _
    $region5: #{fn.1} parent=1 // pred_fallthru
      _
    // Predicated region
    $region6: #{fn.1} parent=1 // pred_check
      _
    $region7: #{fn.1} parent=1 // pred_check_branch
      %11 = sbr.rel (0) target = $region9
    $region8: #{fn.1} parent=1 // pred_region
      _
    $region9: #{fn.1} parent=1 // pred_fallthru
      _
    %v12 = vld [vmem:[%s0] sm:$0xff]
    %v13 = vlaneseq
    %v14 = vshrl.u32 %v13, 7
    %v15 = vsub.s32 0, %v14
    %v16 = vrot.slane %v12, %v15
    %v17 = vlaneseq
    %v18 = vshrl.u32 %v17, 7
    %v19 = vsub.s32 2, %v18
    %v20 = vrot.slane %v12, %v19
    %v21 = vlaneseq
    %v22 = vshrl.u32 %v21, 7
    %v23 = vsub.s32 4, %v22
    %v24 = vrot.slane %v12, %v23
    %v25 = vlaneseq
    %v26 = vshrl.u32 %v25, 7
    %v27 = vsub.s32 6, %v26
    %v28 = vrot.slane %v12, %v27
    %v29 = vlaneseq
    %v30 = vshrl.u32 %v29, 7
    %v31 = vsub.s32 1, %v30
    %v32 = vrot.slane %v12, %v31
    %v33 = vlaneseq
    %v34 = vshrl.u32 %v33, 7
    %v35 = vsub.s32 3, %v34
    %v36 = vrot.slane %v12, %v35
    %v37 = vlaneseq
    %v38 = vshrl.u32 %v37, 7
    %v39 = vsub.s32 5, %v38
    %v40 = vrot.slane %v12, %v39
    %v41 = vlaneseq
    %v42 = vshrl.u32 %v41, 7
    %v43 = vsub.s32 7, %v42
    %v44 = vrot.slane %v12, %v43
    %v45 = vlaneseq
    %v46 = vshrl.u32 %v45, 7
    %v47 = vadd.s32 %v46, 8
    %v48 = vlaneseq
    %v49 = vshrl.u32 %v48, 7
    %v50 = vsub.s32 0, %v49
    %v51 = vrot.slane %v16, %v50
    %v52 = vlaneseq
    %v53 = vshrl.u32 %v52, 7
    %v54 = vsub.s32 0, %v53
    %v55 = vrot.slane %v20, %v54
    %v56 = vlaneseq
    %v57 = vshrl.u32 %v56, 7
    %v58 = vsub.s32 0, %v57
    %v59 = vrot.slane %v24, %v58
    %v60 = vlaneseq
    %v61 = vshrl.u32 %v60, 7
    %v62 = vsub.s32 0, %v61
    %v63 = vrot.slane %v28, %v62
    %v64 = vlaneseq
    %v65 = vshrl.u32 %v64, 7
    %v66 = vsub.s32 0, %v65
    %v67 = vrot.slane %v32, %v66
    %v68 = vlaneseq
    %v69 = vshrl.u32 %v68, 7
    %v70 = vsub.s32 0, %v69
    %v71 = vrot.slane %v36, %v70
    %v72 = vlaneseq
    %v73 = vshrl.u32 %v72, 7
    %v74 = vsub.s32 0, %v73
    %v75 = vrot.slane %v40, %v74
    %v76 = vlaneseq
    %v77 = vshrl.u32 %v76, 7
    %v78 = vsub.s32 0, %v77
    %v79 = vrot.slane %v44, %v78
    %vm80 = vcmp.eq.s32.totalorder %v46, %v51
    %vm81 = vcmp.eq.s32.totalorder %v46, %v55
    %vm82 = vcmp.eq.s32.totalorder %v46, %v59
    %vm83 = vcmp.eq.s32.totalorder %v46, %v63
    %vm84 = vcmp.eq.s32.totalorder %v46, %v67
    %vm85 = vcmp.eq.s32.totalorder %v46, %v71
    %vm86 = vcmp.eq.s32.totalorder %v46, %v75
    %vm87 = vcmp.eq.s32.totalorder %v46, %v79
    %vm88 = vcmp.eq.s32.totalorder %v47, %v51
    %vm89 = vcmp.eq.s32.totalorder %v47, %v55
    %vm90 = vcmp.eq.s32.totalorder %v47, %v59
    %vm91 = vcmp.eq.s32.totalorder %v47, %v63
    %vm92 = vcmp.eq.s32.totalorder %v47, %v67
    %vm93 = vcmp.eq.s32.totalorder %v47, %v71
    %vm94 = vcmp.eq.s32.totalorder %v47, %v75
    %vm95 = vcmp.eq.s32.totalorder %v47, %v79
    %v96 = vsel %vm80, 1, 0
    %v97 = vsel %vm81, 1, 0
    %v98 = vsel %vm82, 1, 0
    %v99 = vsel %vm83, 1, 0
    %v100 = vsel %vm84, 1, 0
    %v101 = vsel %vm85, 1, 0
    %v102 = vsel %vm86, 1, 0
    %v103 = vsel %vm87, 1, 0
    %v104 = vsel %vm88, 1, 0
    %v105 = vsel %vm89, 1, 0
    %v106 = vsel %vm90, 1, 0
    %v107 = vsel %vm91, 1, 0
    %v108 = vsel %vm92, 1, 0
    %v109 = vsel %vm93, 1, 0
    %v110 = vsel %vm94, 1, 0
    %v111 = vsel %vm95, 1, 0
    %v112 = vcvt.s32.f32 %v96
    %v113 = vcvt.s32.f32 %v97
    %v114 = vcvt.s32.f32 %v98
    %v115 = vcvt.s32.f32 %v99
    %v116 = vcvt.s32.f32 %v100
    %v117 = vcvt.s32.f32 %v101
    %v118 = vcvt.s32.f32 %v102
    %v119 = vcvt.s32.f32 %v103
    %v120 = vcvt.s32.f32 %v104
    %v121 = vcvt.s32.f32 %v105
    %v122 = vcvt.s32.f32 %v106
    %v123 = vcvt.s32.f32 %v107
    %v124 = vcvt.s32.f32 %v108
    %v125 = vcvt.s32.f32 %v109
    %v126 = vcvt.s32.f32 %v110
    %v127 = vcvt.s32.f32 %v111
    %v128 = vld [vmem:[%s1] sm:$0xff]
    %v129 = vld [vmem:[%s1 + $0x8] sm:$0xff]
    %v130 = vld [vmem:[%s1 + $0x10] sm:$0xff]
    %v131 = vld [vmem:[%s1 + $0x18] sm:$0xff]
    %vm132 = vcmask 130048
    %v134 = vsel %vm132, %v128, 0
    %v137 = vsel %vm132, %v129, 0
    %v140 = vsel %vm132, %v130, 0
    %v143 = vsel %vm132, %v131, 0
    %145 = vmatprep.subr.mxu0 0.0
    %146 = vmatpush1.msra.mxu0 0.0
    %147 = vmatprep.subr.mxu0 0.0
    %148 = vmatpush1.msra.mxu0 0.0
    %149 = vmatprep.subr.mxu0 0.0
    %150 = vmatpush1.msra.mxu0 0.0
    %151 = vmatprep.subr.mxu0 0.0
    %152 = vmatpush1.msra.mxu0 0.0
    %153 = vmatprep.subr.mxu0 0.0
    %154 = vmatpush1.msra.mxu0 0.0
    %155 = vmatprep.subr.mxu0 0.0
    %156 = vmatpush1.msra.mxu0 0.0
    %157 = vmatprep.subr.mxu0 0.0
    %158 = vmatpush1.msra.mxu0 0.0
    %159 = vmatprep.subr.mxu0 0.0
    %160 = vmatpush1.msra.mxu0 0.0
    %161 = vmatprep.subr.mxu0 0.0
    %162 = vmatpush1.msra.mxu0 0.0
    %163 = vmatprep.subr.mxu0 0.0
    %164 = vmatpush1.msra.mxu0 0.0
    %165 = vmatprep.subr.mxu0 0.0
    %166 = vmatpush1.msra.mxu0 0.0
    %167 = vmatprep.subr.mxu0 0.0
    %168 = vmatpush1.msra.mxu0 0.0
    %169 = vmatprep.subr.mxu0 0.0
    %170 = vmatpush1.msra.mxu0 0.0
    %171 = vmatprep.subr.mxu0 0.0
    %172 = vmatpush1.msra.mxu0 0.0
    %v173 = vand.u32 %v121, 4294901760
    %174 = vmatprep.subr.mxu0 %v173
    %v175 = vand.u32 %v120, 4294901760
    %176 = vmatpush1.msra.mxu0 %v175
    %v177 = vand.u32 %v113, 4294901760
    %178 = vmatprep.subr.mxu0 %v177
    %v179 = vand.u32 %v112, 4294901760
    %180 = vmatpush1.msra.mxu0 %v179
    %181 = vmatprep.subr.mxu0 0.0
    %182 = vmatpush2.msra.mxu0 0.0
    %183 = vmatprep.subr.mxu0 0.0
    %184 = vmatpush2.msra.mxu0 0.0
    %185 = vmatprep.subr.mxu0 0.0
    %186 = vmatpush2.msra.mxu0 0.0
    %187 = vmatprep.subr.mxu0 0.0
    %188 = vmatpush2.msra.mxu0 0.0
    %189 = vmatprep.subr.mxu0 0.0
    %190 = vmatpush2.msra.mxu0 0.0
    %191 = vmatprep.subr.mxu0 0.0
    %192 = vmatpush2.msra.mxu0 0.0
    %193 = vmatprep.subr.mxu0 0.0
    %194 = vmatpush2.msra.mxu0 0.0
    %195 = vmatprep.subr.mxu0 0.0
    %196 = vmatpush2.msra.mxu0 0.0
    %197 = vmatprep.subr.mxu0 0.0
    %198 = vmatpush2.msra.mxu0 0.0
    %199 = vmatprep.subr.mxu0 0.0
    %200 = vmatpush2.msra.mxu0 0.0
    %201 = vmatprep.subr.mxu0 0.0
    %202 = vmatpush2.msra.mxu0 0.0
    %203 = vmatprep.subr.mxu0 0.0
    %204 = vmatpush2.msra.mxu0 0.0
    %205 = vmatprep.subr.mxu0 0.0
    %206 = vmatpush2.msra.mxu0 0.0
    %207 = vmatprep.subr.mxu0 0.0
    %208 = vmatpush2.msra.mxu0 0.0
    %209 = vmatprep.subr.mxu0 0.0
    %210 = vmatpush2.msra.mxu0 0.0
    %211 = vmatprep.subr.mxu0 0.0
    %212 = vmatpush2.msra.mxu0 0.0
    %213 = vmatprep.mubr.f32.mxu0 0.0
    %v214 = vand.u32 %v134, 4294901760
    %v215 = vsub.f32 %v134, %v214
    %v216 = vand.u32 %v215, 4294901760
    %v217 = vsub.f32 %v215, %v216
    %v218 = vand.u32 %v217, 4294901760
    %219 = vmatmul.mubr.f32.gmra.mxu0 %v218
    %v220 = vpop.f32.mrf.mxu0
    %v221 = vadd.f32 0.0, %v220
    %v222 = vpop.f32.mrf.mxu0
    %v223 = vadd.f32 0.0, %v222
    %224 = vmatprep.mubr.f32.mxu0 0.0
    %v225 = vand.u32 %v137, 4294901760
    %v226 = vsub.f32 %v137, %v225
    %v227 = vand.u32 %v226, 4294901760
    %v228 = vsub.f32 %v226, %v227
    %v229 = vand.u32 %v228, 4294901760
    %230 = vmatmul.mubr.f32.gmra.mxu0 %v229
    %v231 = vpop.f32.mrf.mxu0
    %v232 = vadd.f32 0.0, %v231
    %v233 = vpop.f32.mrf.mxu0
    %v234 = vadd.f32 0.0, %v233
    %235 = vmatprep.mubr.f32.mxu0 0.0
    %v236 = vand.u32 %v140, 4294901760
    %v237 = vsub.f32 %v140, %v236
    %v238 = vand.u32 %v237, 4294901760
    %v239 = vsub.f32 %v237, %v238
    %v240 = vand.u32 %v239, 4294901760
    %241 = vmatmul.mubr.f32.gmra.mxu0 %v240
    %v242 = vpop.f32.mrf.mxu0
    %v243 = vadd.f32 0.0, %v242
    %v244 = vpop.f32.mrf.mxu0
    %v245 = vadd.f32 0.0, %v244
    %246 = vmatprep.mubr.f32.mxu0 0.0
    %v247 = vand.u32 %v143, 4294901760
    %v248 = vsub.f32 %v143, %v247
    %v249 = vand.u32 %v248, 4294901760
    %v250 = vsub.f32 %v248, %v249
    %v251 = vand.u32 %v250, 4294901760
    %252 = vmatmul.mubr.f32.gmra.mxu0 %v251
    %v253 = vpop.f32.mrf.mxu0
    %v254 = vadd.f32 0.0, %v253
    %v255 = vpop.f32.mrf.mxu0
    %v256 = vadd.f32 0.0, %v255
    %257 = vdwg.mxu0
    %258 = vmatprep.subr.mxu0 0.0
    %259 = vmatpush1.msra.mxu0 0.0
    %260 = vmatprep.subr.mxu0 0.0
    %261 = vmatpush1.msra.mxu0 0.0
    %262 = vmatprep.subr.mxu0 0.0
    %263 = vmatpush1.msra.mxu0 0.0
    %264 = vmatprep.subr.mxu0 0.0
    %265 = vmatpush1.msra.mxu0 0.0
    %266 = vmatprep.subr.mxu0 0.0
    %267 = vmatpush1.msra.mxu0 0.0
    %268 = vmatprep.subr.mxu0 0.0
    %269 = vmatpush1.msra.mxu0 0.0
    %270 = vmatprep.subr.mxu0 0.0
    %271 = vmatpush1.msra.mxu0 0.0
    %272 = vmatprep.subr.mxu0 0.0
    %273 = vmatpush1.msra.mxu0 0.0
    %274 = vmatprep.subr.mxu0 0.0
    %275 = vmatpush1.msra.mxu0 0.0
    %276 = vmatprep.subr.mxu0 0.0
    %277 = vmatpush1.msra.mxu0 0.0
    %278 = vmatprep.subr.mxu0 0.0
    %279 = vmatpush1.msra.mxu0 0.0
    %280 = vmatprep.subr.mxu0 0.0
    %281 = vmatpush1.msra.mxu0 0.0
    %282 = vmatprep.subr.mxu0 0.0
    %283 = vmatpush1.msra.mxu0 0.0
    %284 = vmatprep.subr.mxu0 0.0
    %285 = vmatpush1.msra.mxu0 0.0
    %v286 = vand.u32 %v121, 4294901760
    %v287 = vsub.f32 %v121, %v286
    %v288 = vand.u32 %v287, 4294901760
    %v289 = vsub.f32 %v287, %v288
    %v290 = vand.u32 %v289, 4294901760
    %291 = vmatprep.subr.mxu0 %v290
    %v292 = vand.u32 %v120, 4294901760
    %v293 = vsub.f32 %v120, %v292
    %v294 = vand.u32 %v293, 4294901760
    %v295 = vsub.f32 %v293, %v294
    %v296 = vand.u32 %v295, 4294901760
    %297 = vmatpush1.msra.mxu0 %v296
    %v298 = vand.u32 %v113, 4294901760
    %v299 = vsub.f32 %v113, %v298
    %v300 = vand.u32 %v299, 4294901760
    %v301 = vsub.f32 %v299, %v300
    %v302 = vand.u32 %v301, 4294901760
    %303 = vmatprep.subr.mxu0 %v302
    %v304 = vand.u32 %v112, 4294901760
    %v305 = vsub.f32 %v112, %v304
    %v306 = vand.u32 %v305, 4294901760
    %v307 = vsub.f32 %v305, %v306
    %v308 = vand.u32 %v307, 4294901760
    %309 = vmatpush1.msra.mxu0 %v308
    %310 = vmatprep.subr.mxu0 0.0
    %311 = vmatpush2.msra.mxu0 0.0
    %312 = vmatprep.subr.mxu0 0.0
    %313 = vmatpush2.msra.mxu0 0.0
    %314 = vmatprep.subr.mxu0 0.0
    %315 = vmatpush2.msra.mxu0 0.0
    %316 = vmatprep.subr.mxu0 0.0
    %317 = vmatpush2.msra.mxu0 0.0
    %318 = vmatprep.subr.mxu0 0.0
    %319 = vmatpush2.msra.mxu0 0.0
    %320 = vmatprep.subr.mxu0 0.0
    %321 = vmatpush2.msra.mxu0 0.0
    %322 = vmatprep.subr.mxu0 0.0
    %323 = vmatpush2.msra.mxu0 0.0
    %324 = vmatprep.subr.mxu0 0.0
    %325 = vmatpush2.msra.mxu0 0.0
    %326 = vmatprep.subr.mxu0 0.0
    %327 = vmatpush2.msra.mxu0 0.0
    %328 = vmatprep.subr.mxu0 0.0
    %329 = vmatpush2.msra.mxu0 0.0
    %330 = vmatprep.subr.mxu0 0.0
    %331 = vmatpush2.msra.mxu0 0.0
    %332 = vmatprep.subr.mxu0 0.0
    %333 = vmatpush2.msra.mxu0 0.0
    %334 = vmatprep.subr.mxu0 0.0
    %335 = vmatpush2.msra.mxu0 0.0
    %336 = vmatprep.subr.mxu0 0.0
    %337 = vmatpush2.msra.mxu0 0.0
    %338 = vmatprep.subr.mxu0 0.0
    %339 = vmatpush2.msra.mxu0 0.0
    %340 = vmatprep.subr.mxu0 0.0
    %341 = vmatpush2.msra.mxu0 0.0
    %342 = vmatprep.mubr.f32.mxu0 0.0
    %v343 = vand.u32 %v134, 4294901760
    %344 = vmatmul.mubr.f32.gmra.mxu0 %v343
    %v345 = vpop.f32.mrf.mxu0
    %v346 = vadd.f32 %v221, %v345
    %v347 = vpop.f32.mrf.mxu0
    %v348 = vadd.f32 %v223, %v347
    %349 = vmatprep.mubr.f32.mxu0 0.0
    %v350 = vand.u32 %v137, 4294901760
    %351 = vmatmul.mubr.f32.gmra.mxu0 %v350
    %v352 = vpop.f32.mrf.mxu0
    %v353 = vadd.f32 %v232, %v352
    %v354 = vpop.f32.mrf.mxu0
    %v355 = vadd.f32 %v234, %v354
    %356 = vmatprep.mubr.f32.mxu0 0.0
    %v357 = vand.u32 %v140, 4294901760
    %358 = vmatmul.mubr.f32.gmra.mxu0 %v357
    %v359 = vpop.f32.mrf.mxu0
    %v360 = vadd.f32 %v243, %v359
    %v361 = vpop.f32.mrf.mxu0
    %v362 = vadd.f32 %v245, %v361
    %363 = vmatprep.mubr.f32.mxu0 0.0
    %v364 = vand.u32 %v143, 4294901760
    %365 = vmatmul.mubr.f32.gmra.mxu0 %v364
    %v366 = vpop.f32.mrf.mxu0
    %v367 = vadd.f32 %v254, %v366
    %v368 = vpop.f32.mrf.mxu0
    %v369 = vadd.f32 %v256, %v368
    %370 = vdwg.mxu0
    %371 = vmatprep.subr.mxu0 0.0
    %372 = vmatpush1.msra.mxu0 0.0
    %373 = vmatprep.subr.mxu0 0.0
    %374 = vmatpush1.msra.mxu0 0.0
    %375 = vmatprep.subr.mxu0 0.0
    %376 = vmatpush1.msra.mxu0 0.0
    %377 = vmatprep.subr.mxu0 0.0
    %378 = vmatpush1.msra.mxu0 0.0
    %379 = vmatprep.subr.mxu0 0.0
    %380 = vmatpush1.msra.mxu0 0.0
    %381 = vmatprep.subr.mxu0 0.0
    %382 = vmatpush1.msra.mxu0 0.0
    %383 = vmatprep.subr.mxu0 0.0
    %384 = vmatpush1.msra.mxu0 0.0
    %385 = vmatprep.subr.mxu0 0.0
    %386 = vmatpush1.msra.mxu0 0.0
    %387 = vmatprep.subr.mxu0 0.0
    %388 = vmatpush1.msra.mxu0 0.0
    %389 = vmatprep.subr.mxu0 0.0
    %390 = vmatpush1.msra.mxu0 0.0
    %391 = vmatprep.subr.mxu0 0.0
    %392 = vmatpush1.msra.mxu0 0.0
    %393 = vmatprep.subr.mxu0 0.0
    %394 = vmatpush1.msra.mxu0 0.0
    %395 = vmatprep.subr.mxu0 0.0
    %396 = vmatpush1.msra.mxu0 0.0
    %397 = vmatprep.subr.mxu0 0.0
    %398 = vmatpush1.msra.mxu0 0.0
    %v399 = vand.u32 %v121, 4294901760
    %v400 = vsub.f32 %v121, %v399
    %401 = vmatprep.subr.mxu0 %v400
    %v402 = vand.u32 %v120, 4294901760
    %v403 = vsub.f32 %v120, %v402
    %404 = vmatpush1.msra.mxu0 %v403
    %v405 = vand.u32 %v113, 4294901760
    %v406 = vsub.f32 %v113, %v405
    %407 = vmatprep.subr.mxu0 %v406
    %v408 = vand.u32 %v112, 4294901760
    %v409 = vsub.f32 %v112, %v408
    %410 = vmatpush1.msra.mxu0 %v409
    %411 = vmatprep.subr.mxu0 0.0
    %412 = vmatpush2.msra.mxu0 0.0
    %413 = vmatprep.subr.mxu0 0.0
    %414 = vmatpush2.msra.mxu0 0.0
    %415 = vmatprep.subr.mxu0 0.0
    %416 = vmatpush2.msra.mxu0 0.0
    %417 = vmatprep.subr.mxu0 0.0
    %418 = vmatpush2.msra.mxu0 0.0
    %419 = vmatprep.subr.mxu0 0.0
    %420 = vmatpush2.msra.mxu0 0.0
    %421 = vmatprep.subr.mxu0 0.0
    %422 = vmatpush2.msra.mxu0 0.0
    %423 = vmatprep.subr.mxu0 0.0
    %424 = vmatpush2.msra.mxu0 0.0
    %425 = vmatprep.subr.mxu0 0.0
    %426 = vmatpush2.msra.mxu0 0.0
    %427 = vmatprep.subr.mxu0 0.0
    %428 = vmatpush2.msra.mxu0 0.0
    %429 = vmatprep.subr.mxu0 0.0
    %430 = vmatpush2.msra.mxu0 0.0
    %431 = vmatprep.subr.mxu0 0.0
    %432 = vmatpush2.msra.mxu0 0.0
    %433 = vmatprep.subr.mxu0 0.0
    %434 = vmatpush2.msra.mxu0 0.0
    %435 = vmatprep.subr.mxu0 0.0
    %436 = vmatpush2.msra.mxu0 0.0
    %437 = vmatprep.subr.mxu0 0.0
    %438 = vmatpush2.msra.mxu0 0.0
    %439 = vmatprep.subr.mxu0 0.0
    %440 = vmatpush2.msra.mxu0 0.0
    %441 = vmatprep.subr.mxu0 0.0
    %442 = vmatpush2.msra.mxu0 0.0
    %443 = vmatprep.mubr.f32.mxu0 0.0
    %v444 = vand.u32 %v134, 4294901760
    %v445 = vsub.f32 %v134, %v444
    %446 = vmatmul.mubr.f32.gmra.mxu0 %v445
    %v447 = vpop.f32.mrf.mxu0
    %v448 = vadd.f32 %v346, %v447
    %v449 = vpop.f32.mrf.mxu0
    %v450 = vadd.f32 %v348, %v449
    %451 = vmatprep.mubr.f32.mxu0 0.0
    %v452 = vand.u32 %v137, 4294901760
    %v453 = vsub.f32 %v137, %v452
    %454 = vmatmul.mubr.f32.gmra.mxu0 %v453
    %v455 = vpop.f32.mrf.mxu0
    %v456 = vadd.f32 %v353, %v455
    %v457 = vpop.f32.mrf.mxu0
    %v458 = vadd.f32 %v355, %v457
    %459 = vmatprep.mubr.f32.mxu0 0.0
    %v460 = vand.u32 %v140, 4294901760
    %v461 = vsub.f32 %v140, %v460
    %462 = vmatmul.mubr.f32.gmra.mxu0 %v461
    %v463 = vpop.f32.mrf.mxu0
    %v464 = vadd.f32 %v360, %v463
    %v465 = vpop.f32.mrf.mxu0
    %v466 = vadd.f32 %v362, %v465
    %467 = vmatprep.mubr.f32.mxu0 0.0
    %v468 = vand.u32 %v143, 4294901760
    %v469 = vsub.f32 %v143, %v468
    %470 = vmatmul.mubr.f32.gmra.mxu0 %v469
    %v471 = vpop.f32.mrf.mxu0
    %v472 = vadd.f32 %v367, %v471
    %v473 = vpop.f32.mrf.mxu0
    %v474 = vadd.f32 %v369, %v473
    %475 = vdwg.mxu0
    %476 = vmatprep.subr.mxu0 0.0
    %477 = vmatpush1.msra.mxu0 0.0
    %478 = vmatprep.subr.mxu0 0.0
    %479 = vmatpush1.msra.mxu0 0.0
    %480 = vmatprep.subr.mxu0 0.0
    %481 = vmatpush1.msra.mxu0 0.0
    %482 = vmatprep.subr.mxu0 0.0
    %483 = vmatpush1.msra.mxu0 0.0
    %484 = vmatprep.subr.mxu0 0.0
    %485 = vmatpush1.msra.mxu0 0.0
    %486 = vmatprep.subr.mxu0 0.0
    %487 = vmatpush1.msra.mxu0 0.0
    %488 = vmatprep.subr.mxu0 0.0
    %489 = vmatpush1.msra.mxu0 0.0
    %490 = vmatprep.subr.mxu0 0.0
    %491 = vmatpush1.msra.mxu0 0.0
    %492 = vmatprep.subr.mxu0 0.0
    %493 = vmatpush1.msra.mxu0 0.0
    %494 = vmatprep.subr.mxu0 0.0
    %495 = vmatpush1.msra.mxu0 0.0
    %496 = vmatprep.subr.mxu0 0.0
    %497 = vmatpush1.msra.mxu0 0.0
    %498 = vmatprep.subr.mxu0 0.0
    %499 = vmatpush1.msra.mxu0 0.0
    %500 = vmatprep.subr.mxu0 0.0
    %501 = vmatpush1.msra.mxu0 0.0
    %502 = vmatprep.subr.mxu0 0.0
    %503 = vmatpush1.msra.mxu0 0.0
    %v504 = vand.u32 %v121, 4294901760
    %505 = vmatprep.subr.mxu0 %v504
    %v506 = vand.u32 %v120, 4294901760
    %507 = vmatpush1.msra.mxu0 %v506
    %v508 = vand.u32 %v113, 4294901760
    %509 = vmatprep.subr.mxu0 %v508
    %v510 = vand.u32 %v112, 4294901760
    %511 = vmatpush1.msra.mxu0 %v510
    %512 = vmatprep.subr.mxu0 0.0
    %513 = vmatpush2.msra.mxu0 0.0
    %514 = vmatprep.subr.mxu0 0.0
    %515 = vmatpush2.msra.mxu0 0.0
    %516 = vmatprep.subr.mxu0 0.0
    %517 = vmatpush2.msra.mxu0 0.0
    %518 = vmatprep.subr.mxu0 0.0
    %519 = vmatpush2.msra.mxu0 0.0
    %520 = vmatprep.subr.mxu0 0.0
    %521 = vmatpush2.msra.mxu0 0.0
    %522 = vmatprep.subr.mxu0 0.0
    %523 = vmatpush2.msra.mxu0 0.0
    %524 = vmatprep.subr.mxu0 0.0
    %525 = vmatpush2.msra.mxu0 0.0
    %526 = vmatprep.subr.mxu0 0.0
    %527 = vmatpush2.msra.mxu0 0.0
    %528 = vmatprep.subr.mxu0 0.0
    %529 = vmatpush2.msra.mxu0 0.0
    %530 = vmatprep.subr.mxu0 0.0
    %531 = vmatpush2.msra.mxu0 0.0
    %532 = vmatprep.subr.mxu0 0.0
    %533 = vmatpush2.msra.mxu0 0.0
    %534 = vmatprep.subr.mxu0 0.0
    %535 = vmatpush2.msra.mxu0 0.0
    %536 = vmatprep.subr.mxu0 0.0
    %537 = vmatpush2.msra.mxu0 0.0
    %538 = vmatprep.subr.mxu0 0.0
    %539 = vmatpush2.msra.mxu0 0.0
    %540 = vmatprep.subr.mxu0 0.0
    %541 = vmatpush2.msra.mxu0 0.0
    %542 = vmatprep.subr.mxu0 0.0
    %543 = vmatpush2.msra.mxu0 0.0
    %544 = vmatprep.mubr.f32.mxu0 0.0
    %v545 = vand.u32 %v134, 4294901760
    %v546 = vsub.f32 %v134, %v545
    %v547 = vand.u32 %v546, 4294901760
    %548 = vmatmul.mubr.f32.gmra.mxu0 %v547
    %v549 = vpop.f32.mrf.mxu0
    %v550 = vadd.f32 %v448, %v549
    %v551 = vpop.f32.mrf.mxu0
    %v552 = vadd.f32 %v450, %v551
    %553 = vmatprep.mubr.f32.mxu0 0.0
    %v554 = vand.u32 %v137, 4294901760
    %v555 = vsub.f32 %v137, %v554
    %v556 = vand.u32 %v555, 4294901760
    %557 = vmatmul.mubr.f32.gmra.mxu0 %v556
    %v558 = vpop.f32.mrf.mxu0
    %v559 = vadd.f32 %v456, %v558
    %v560 = vpop.f32.mrf.mxu0
    %v561 = vadd.f32 %v458, %v560
    %562 = vmatprep.mubr.f32.mxu0 0.0
    %v563 = vand.u32 %v140, 4294901760
    %v564 = vsub.f32 %v140, %v563
    %v565 = vand.u32 %v564, 4294901760
    %566 = vmatmul.mubr.f32.gmra.mxu0 %v565
    %v567 = vpop.f32.mrf.mxu0
    %v568 = vadd.f32 %v464, %v567
    %v569 = vpop.f32.mrf.mxu0
    %v570 = vadd.f32 %v466, %v569
    %571 = vmatprep.mubr.f32.mxu0 0.0
    %v572 = vand.u32 %v143, 4294901760
    %v573 = vsub.f32 %v143, %v572
    %v574 = vand.u32 %v573, 4294901760
    %575 = vmatmul.mubr.f32.gmra.mxu0 %v574
    %v576 = vpop.f32.mrf.mxu0
    %v577 = vadd.f32 %v472, %v576
    %v578 = vpop.f32.mrf.mxu0
    %v579 = vadd.f32 %v474, %v578
    %580 = vdwg.mxu0
    %581 = vmatprep.subr.mxu0 0.0
    %582 = vmatpush1.msra.mxu0 0.0
    %583 = vmatprep.subr.mxu0 0.0
    %584 = vmatpush1.msra.mxu0 0.0
    %585 = vmatprep.subr.mxu0 0.0
    %586 = vmatpush1.msra.mxu0 0.0
    %587 = vmatprep.subr.mxu0 0.0
    %588 = vmatpush1.msra.mxu0 0.0
    %589 = vmatprep.subr.mxu0 0.0
    %590 = vmatpush1.msra.mxu0 0.0
    %591 = vmatprep.subr.mxu0 0.0
    %592 = vmatpush1.msra.mxu0 0.0
    %593 = vmatprep.subr.mxu0 0.0
    %594 = vmatpush1.msra.mxu0 0.0
    %595 = vmatprep.subr.mxu0 0.0
    %596 = vmatpush1.msra.mxu0 0.0
    %597 = vmatprep.subr.mxu0 0.0
    %598 = vmatpush1.msra.mxu0 0.0
    %599 = vmatprep.subr.mxu0 0.0
    %600 = vmatpush1.msra.mxu0 0.0
    %601 = vmatprep.subr.mxu0 0.0
    %602 = vmatpush1.msra.mxu0 0.0
    %603 = vmatprep.subr.mxu0 0.0
    %604 = vmatpush1.msra.mxu0 0.0
    %605 = vmatprep.subr.mxu0 0.0
    %606 = vmatpush1.msra.mxu0 0.0
    %607 = vmatprep.subr.mxu0 0.0
    %608 = vmatpush1.msra.mxu0 0.0
    %v609 = vand.u32 %v121, 4294901760
    %v610 = vsub.f32 %v121, %v609
    %v611 = vand.u32 %v610, 4294901760
    %612 = vmatprep.subr.mxu0 %v611
    %v613 = vand.u32 %v120, 4294901760
    %v614 = vsub.f32 %v120, %v613
    %v615 = vand.u32 %v614, 4294901760
    %616 = vmatpush1.msra.mxu0 %v615
    %v617 = vand.u32 %v113, 4294901760
    %v618 = vsub.f32 %v113, %v617
    %v619 = vand.u32 %v618, 4294901760
    %620 = vmatprep.subr.mxu0 %v619
    %v621 = vand.u32 %v112, 4294901760
    %v622 = vsub.f32 %v112, %v621
    %v623 = vand.u32 %v622, 4294901760
    %624 = vmatpush1.msra.mxu0 %v623
    %625 = vmatprep.subr.mxu0 0.0
    %626 = vmatpush2.msra.mxu0 0.0
    %627 = vmatprep.subr.mxu0 0.0
    %628 = vmatpush2.msra.mxu0 0.0
    %629 = vmatprep.subr.mxu0 0.0
    %630 = vmatpush2.msra.mxu0 0.0
    %631 = vmatprep.subr.mxu0 0.0
    %632 = vmatpush2.msra.mxu0 0.0
    %633 = vmatprep.subr.mxu0 0.0
    %634 = vmatpush2.msra.mxu0 0.0
    %635 = vmatprep.subr.mxu0 0.0
    %636 = vmatpush2.msra.mxu0 0.0
    %637 = vmatprep.subr.mxu0 0.0
    %638 = vmatpush2.msra.mxu0 0.0
    %639 = vmatprep.subr.mxu0 0.0
    %640 = vmatpush2.msra.mxu0 0.0
    %641 = vmatprep.subr.mxu0 0.0
    %642 = vmatpush2.msra.mxu0 0.0
    %643 = vmatprep.subr.mxu0 0.0
    %644 = vmatpush2.msra.mxu0 0.0
    %645 = vmatprep.subr.mxu0 0.0
    %646 = vmatpush2.msra.mxu0 0.0
    %647 = vmatprep.subr.mxu0 0.0
    %648 = vmatpush2.msra.mxu0 0.0
    %649 = vmatprep.subr.mxu0 0.0
    %650 = vmatpush2.msra.mxu0 0.0
    %651 = vmatprep.subr.mxu0 0.0
    %652 = vmatpush2.msra.mxu0 0.0
    %653 = vmatprep.subr.mxu0 0.0
    %654 = vmatpush2.msra.mxu0 0.0
    %655 = vmatprep.subr.mxu0 0.0
    %656 = vmatpush2.msra.mxu0 0.0
    %657 = vmatprep.mubr.f32.mxu0 0.0
    %v658 = vand.u32 %v134, 4294901760
    %659 = vmatmul.mubr.f32.gmra.mxu0 %v658
    %v660 = vpop.f32.mrf.mxu0
    %v661 = vadd.f32 %v550, %v660
    %v662 = vpop.f32.mrf.mxu0
    %v663 = vadd.f32 %v552, %v662
    %664 = vmatprep.mubr.f32.mxu0 0.0
    %v665 = vand.u32 %v137, 4294901760
    %666 = vmatmul.mubr.f32.gmra.mxu0 %v665
    %v667 = vpop.f32.mrf.mxu0
    %v668 = vadd.f32 %v559, %v667
    %v669 = vpop.f32.mrf.mxu0
    %v670 = vadd.f32 %v561, %v669
    %671 = vmatprep.mubr.f32.mxu0 0.0
    %v672 = vand.u32 %v140, 4294901760
    %673 = vmatmul.mubr.f32.gmra.mxu0 %v672
    %v674 = vpop.f32.mrf.mxu0
    %v675 = vadd.f32 %v568, %v674
    %v676 = vpop.f32.mrf.mxu0
    %v677 = vadd.f32 %v570, %v676
    %678 = vmatprep.mubr.f32.mxu0 0.0
    %v679 = vand.u32 %v143, 4294901760
    %680 = vmatmul.mubr.f32.gmra.mxu0 %v679
    %v681 = vpop.f32.mrf.mxu0
    %v682 = vadd.f32 %v577, %v681
    %v683 = vpop.f32.mrf.mxu0
    %v684 = vadd.f32 %v579, %v683
    %685 = vdwg.mxu0
    %686 = vmatprep.subr.mxu0 0.0
    %687 = vmatpush1.msra.mxu0 0.0
    %688 = vmatprep.subr.mxu0 0.0
    %689 = vmatpush1.msra.mxu0 0.0
    %690 = vmatprep.subr.mxu0 0.0
    %691 = vmatpush1.msra.mxu0 0.0
    %692 = vmatprep.subr.mxu0 0.0
    %693 = vmatpush1.msra.mxu0 0.0
    %694 = vmatprep.subr.mxu0 0.0
    %695 = vmatpush1.msra.mxu0 0.0
    %696 = vmatprep.subr.mxu0 0.0
    %697 = vmatpush1.msra.mxu0 0.0
    %698 = vmatprep.subr.mxu0 0.0
    %699 = vmatpush1.msra.mxu0 0.0
    %700 = vmatprep.subr.mxu0 0.0
    %701 = vmatpush1.msra.mxu0 0.0
    %702 = vmatprep.subr.mxu0 0.0
    %703 = vmatpush1.msra.mxu0 0.0
    %704 = vmatprep.subr.mxu0 0.0
    %705 = vmatpush1.msra.mxu0 0.0
    %706 = vmatprep.subr.mxu0 0.0
    %707 = vmatpush1.msra.mxu0 0.0
    %708 = vmatprep.subr.mxu0 0.0
    %709 = vmatpush1.msra.mxu0 0.0
    %710 = vmatprep.subr.mxu0 0.0
    %711 = vmatpush1.msra.mxu0 0.0
    %712 = vmatprep.subr.mxu0 0.0
    %713 = vmatpush1.msra.mxu0 0.0
    %v714 = vand.u32 %v121, 4294901760
    %715 = vmatprep.subr.mxu0 %v714
    %v716 = vand.u32 %v120, 4294901760
    %717 = vmatpush1.msra.mxu0 %v716
    %v718 = vand.u32 %v113, 4294901760
    %719 = vmatprep.subr.mxu0 %v718
    %v720 = vand.u32 %v112, 4294901760
    %721 = vmatpush1.msra.mxu0 %v720
    %722 = vmatprep.subr.mxu0 0.0
    %723 = vmatpush2.msra.mxu0 0.0
    %724 = vmatprep.subr.mxu0 0.0
    %725 = vmatpush2.msra.mxu0 0.0
    %726 = vmatprep.subr.mxu0 0.0
    %727 = vmatpush2.msra.mxu0 0.0
    %728 = vmatprep.subr.mxu0 0.0
    %729 = vmatpush2.msra.mxu0 0.0
    %730 = vmatprep.subr.mxu0 0.0
    %731 = vmatpush2.msra.mxu0 0.0
    %732 = vmatprep.subr.mxu0 0.0
    %733 = vmatpush2.msra.mxu0 0.0
    %734 = vmatprep.subr.mxu0 0.0
    %735 = vmatpush2.msra.mxu0 0.0
    %736 = vmatprep.subr.mxu0 0.0
    %737 = vmatpush2.msra.mxu0 0.0
    %738 = vmatprep.subr.mxu0 0.0
    %739 = vmatpush2.msra.mxu0 0.0
    %740 = vmatprep.subr.mxu0 0.0
    %741 = vmatpush2.msra.mxu0 0.0
    %742 = vmatprep.subr.mxu0 0.0
    %743 = vmatpush2.msra.mxu0 0.0
    %744 = vmatprep.subr.mxu0 0.0
    %745 = vmatpush2.msra.mxu0 0.0
    %746 = vmatprep.subr.mxu0 0.0
    %747 = vmatpush2.msra.mxu0 0.0
    %748 = vmatprep.subr.mxu0 0.0
    %749 = vmatpush2.msra.mxu0 0.0
    %750 = vmatprep.subr.mxu0 0.0
    %751 = vmatpush2.msra.mxu0 0.0
    %752 = vmatprep.subr.mxu0 0.0
    %753 = vmatpush2.msra.mxu0 0.0
    %754 = vmatprep.mubr.f32.mxu0 0.0
    %v755 = vand.u32 %v134, 4294901760
    %756 = vmatmul.mubr.f32.gmra.mxu0 %v755
    %v757 = vpop.f32.mrf.mxu0
    %v758 = vadd.f32 %v661, %v757
    %v759 = vpop.f32.mrf.mxu0
    %v760 = vadd.f32 %v663, %v759
    %761 = vmatprep.mubr.f32.mxu0 0.0
    %v762 = vand.u32 %v137, 4294901760
    %763 = vmatmul.mubr.f32.gmra.mxu0 %v762
    %v764 = vpop.f32.mrf.mxu0
    %v765 = vadd.f32 %v668, %v764
    %v766 = vpop.f32.mrf.mxu0
    %v767 = vadd.f32 %v670, %v766
    %768 = vmatprep.mubr.f32.mxu0 0.0
    %v769 = vand.u32 %v140, 4294901760
    %770 = vmatmul.mubr.f32.gmra.mxu0 %v769
    %v771 = vpop.f32.mrf.mxu0
    %v772 = vadd.f32 %v675, %v771
    %v773 = vpop.f32.mrf.mxu0
    %v774 = vadd.f32 %v677, %v773
    %775 = vmatprep.mubr.f32.mxu0 0.0
    %v776 = vand.u32 %v143, 4294901760
    %777 = vmatmul.mubr.f32.gmra.mxu0 %v776
    %v778 = vpop.f32.mrf.mxu0
    %v779 = vadd.f32 %v682, %v778
    %v780 = vpop.f32.mrf.mxu0
    %v781 = vadd.f32 %v684, %v780
    %782 = vdwg.mxu0
    %783 = vmatprep.subr.mxu0 0.0
    %784 = vmatpush1.msra.mxu0 0.0
    %785 = vmatprep.subr.mxu0 0.0
    %786 = vmatpush1.msra.mxu0 0.0
    %787 = vmatprep.subr.mxu0 0.0
    %788 = vmatpush1.msra.mxu0 0.0
    %789 = vmatprep.subr.mxu0 0.0
    %790 = vmatpush1.msra.mxu0 0.0
    %791 = vmatprep.subr.mxu0 0.0
    %792 = vmatpush1.msra.mxu0 0.0
    %793 = vmatprep.subr.mxu0 0.0
    %794 = vmatpush1.msra.mxu0 0.0
    %795 = vmatprep.subr.mxu0 0.0
    %796 = vmatpush1.msra.mxu0 0.0
    %797 = vmatprep.subr.mxu0 0.0
    %798 = vmatpush1.msra.mxu0 0.0
    %799 = vmatprep.subr.mxu0 0.0
    %800 = vmatpush1.msra.mxu0 0.0
    %801 = vmatprep.subr.mxu0 0.0
    %802 = vmatpush1.msra.mxu0 0.0
    %803 = vmatprep.subr.mxu0 0.0
    %804 = vmatpush1.msra.mxu0 0.0
    %805 = vmatprep.subr.mxu0 0.0
    %806 = vmatpush1.msra.mxu0 0.0
    %807 = vmatprep.subr.mxu0 0.0
    %808 = vmatpush1.msra.mxu0 0.0
    %809 = vmatprep.subr.mxu0 0.0
    %810 = vmatpush1.msra.mxu0 0.0
    %v811 = vand.u32 %v123, 4294901760
    %812 = vmatprep.subr.mxu0 %v811
    %v813 = vand.u32 %v122, 4294901760
    %814 = vmatpush1.msra.mxu0 %v813
    %v815 = vand.u32 %v115, 4294901760
    %816 = vmatprep.subr.mxu0 %v815
    %v817 = vand.u32 %v114, 4294901760
    %818 = vmatpush1.msra.mxu0 %v817
    %819 = vmatprep.subr.mxu0 0.0
    %820 = vmatpush2.msra.mxu0 0.0
    %821 = vmatprep.subr.mxu0 0.0
    %822 = vmatpush2.msra.mxu0 0.0
    %823 = vmatprep.subr.mxu0 0.0
    %824 = vmatpush2.msra.mxu0 0.0
    %825 = vmatprep.subr.mxu0 0.0
    %826 = vmatpush2.msra.mxu0 0.0
    %827 = vmatprep.subr.mxu0 0.0
    %828 = vmatpush2.msra.mxu0 0.0
    %829 = vmatprep.subr.mxu0 0.0
    %830 = vmatpush2.msra.mxu0 0.0
    %831 = vmatprep.subr.mxu0 0.0
    %832 = vmatpush2.msra.mxu0 0.0
    %833 = vmatprep.subr.mxu0 0.0
    %834 = vmatpush2.msra.mxu0 0.0
    %835 = vmatprep.subr.mxu0 0.0
    %836 = vmatpush2.msra.mxu0 0.0
    %837 = vmatprep.subr.mxu0 0.0
    %838 = vmatpush2.msra.mxu0 0.0
    %839 = vmatprep.subr.mxu0 0.0
    %840 = vmatpush2.msra.mxu0 0.0
    %841 = vmatprep.subr.mxu0 0.0
    %842 = vmatpush2.msra.mxu0 0.0
    %843 = vmatprep.subr.mxu0 0.0
    %844 = vmatpush2.msra.mxu0 0.0
    %845 = vmatprep.subr.mxu0 0.0
    %846 = vmatpush2.msra.mxu0 0.0
    %847 = vmatprep.subr.mxu0 0.0
    %848 = vmatpush2.msra.mxu0 0.0
    %849 = vmatprep.subr.mxu0 0.0
    %850 = vmatpush2.msra.mxu0 0.0
    %851 = vmatprep.mubr.f32.mxu0 0.0
    %v852 = vand.u32 %v134, 4294901760
    %v853 = vsub.f32 %v134, %v852
    %v854 = vand.u32 %v853, 4294901760
    %v855 = vsub.f32 %v853, %v854
    %v856 = vand.u32 %v855, 4294901760
    %857 = vmatmul.mubr.f32.gmra.mxu0 %v856
    %v858 = vpop.f32.mrf.mxu0
    %v859 = vadd.f32 0.0, %v858
    %v860 = vpop.f32.mrf.mxu0
    %v861 = vadd.f32 0.0, %v860
    %862 = vmatprep.mubr.f32.mxu0 0.0
    %v863 = vand.u32 %v137, 4294901760
    %v864 = vsub.f32 %v137, %v863
    %v865 = vand.u32 %v864, 4294901760
    %v866 = vsub.f32 %v864, %v865
    %v867 = vand.u32 %v866, 4294901760
    %868 = vmatmul.mubr.f32.gmra.mxu0 %v867
    %v869 = vpop.f32.mrf.mxu0
    %v870 = vadd.f32 0.0, %v869
    %v871 = vpop.f32.mrf.mxu0
    %v872 = vadd.f32 0.0, %v871
    %873 = vmatprep.mubr.f32.mxu0 0.0
    %v874 = vand.u32 %v140, 4294901760
    %v875 = vsub.f32 %v140, %v874
    %v876 = vand.u32 %v875, 4294901760
    %v877 = vsub.f32 %v875, %v876
    %v878 = vand.u32 %v877, 4294901760
    %879 = vmatmul.mubr.f32.gmra.mxu0 %v878
    %v880 = vpop.f32.mrf.mxu0
    %v881 = vadd.f32 0.0, %v880
    %v882 = vpop.f32.mrf.mxu0
    %v883 = vadd.f32 0.0, %v882
    %884 = vmatprep.mubr.f32.mxu0 0.0
    %v885 = vand.u32 %v143, 4294901760
    %v886 = vsub.f32 %v143, %v885
    %v887 = vand.u32 %v886, 4294901760
    %v888 = vsub.f32 %v886, %v887
    %v889 = vand.u32 %v888, 4294901760
    %890 = vmatmul.mubr.f32.gmra.mxu0 %v889
    %v891 = vpop.f32.mrf.mxu0
    %v892 = vadd.f32 0.0, %v891
    %v893 = vpop.f32.mrf.mxu0
    %v894 = vadd.f32 0.0, %v893
    %895 = vdwg.mxu0
    %896 = vmatprep.subr.mxu0 0.0
    %897 = vmatpush1.msra.mxu0 0.0
    %898 = vmatprep.subr.mxu0 0.0
    %899 = vmatpush1.msra.mxu0 0.0
    %900 = vmatprep.subr.mxu0 0.0
    %901 = vmatpush1.msra.mxu0 0.0
    %902 = vmatprep.subr.mxu0 0.0
    %903 = vmatpush1.msra.mxu0 0.0
    %904 = vmatprep.subr.mxu0 0.0
    %905 = vmatpush1.msra.mxu0 0.0
    %906 = vmatprep.subr.mxu0 0.0
    %907 = vmatpush1.msra.mxu0 0.0
    %908 = vmatprep.subr.mxu0 0.0
    %909 = vmatpush1.msra.mxu0 0.0
    %910 = vmatprep.subr.mxu0 0.0
    %911 = vmatpush1.msra.mxu0 0.0
    %912 = vmatprep.subr.mxu0 0.0
    %913 = vmatpush1.msra.mxu0 0.0
    %914 = vmatprep.subr.mxu0 0.0
    %915 = vmatpush1.msra.mxu0 0.0
    %916 = vmatprep.subr.mxu0 0.0
    %917 = vmatpush1.msra.mxu0 0.0
    %918 = vmatprep.subr.mxu0 0.0
    %919 = vmatpush1.msra.mxu0 0.0
    %920 = vmatprep.subr.mxu0 0.0
    %921 = vmatpush1.msra.mxu0 0.0
    %922 = vmatprep.subr.mxu0 0.0
    %923 = vmatpush1.msra.mxu0 0.0
    %v924 = vand.u32 %v123, 4294901760
    %v925 = vsub.f32 %v123, %v924
    %v926 = vand.u32 %v925, 4294901760
    %v927 = vsub.f32 %v925, %v926
    %v928 = vand.u32 %v927, 4294901760
    %929 = vmatprep.subr.mxu0 %v928
    %v930 = vand.u32 %v122, 4294901760
    %v931 = vsub.f32 %v122, %v930
    %v932 = vand.u32 %v931, 4294901760
    %v933 = vsub.f32 %v931, %v932
    %v934 = vand.u32 %v933, 4294901760
    %935 = vmatpush1.msra.mxu0 %v934
    %v936 = vand.u32 %v115, 4294901760
    %v937 = vsub.f32 %v115, %v936
    %v938 = vand.u32 %v937, 4294901760
    %v939 = vsub.f32 %v937, %v938
    %v940 = vand.u32 %v939, 4294901760
    %941 = vmatprep.subr.mxu0 %v940
    %v942 = vand.u32 %v114, 4294901760
    %v943 = vsub.f32 %v114, %v942
    %v944 = vand.u32 %v943, 4294901760
    %v945 = vsub.f32 %v943, %v944
    %v946 = vand.u32 %v945, 4294901760
    %947 = vmatpush1.msra.mxu0 %v946
    %948 = vmatprep.subr.mxu0 0.0
    %949 = vmatpush2.msra.mxu0 0.0
    %950 = vmatprep.subr.mxu0 0.0
    %951 = vmatpush2.msra.mxu0 0.0
    %952 = vmatprep.subr.mxu0 0.0
    %953 = vmatpush2.msra.mxu0 0.0
    %954 = vmatprep.subr.mxu0 0.0
    %955 = vmatpush2.msra.mxu0 0.0
    %956 = vmatprep.subr.mxu0 0.0
    %957 = vmatpush2.msra.mxu0 0.0
    %958 = vmatprep.subr.mxu0 0.0
    %959 = vmatpush2.msra.mxu0 0.0
    %960 = vmatprep.subr.mxu0 0.0
    %961 = vmatpush2.msra.mxu0 0.0
    %962 = vmatprep.subr.mxu0 0.0
    %963 = vmatpush2.msra.mxu0 0.0
    %964 = vmatprep.subr.mxu0 0.0
    %965 = vmatpush2.msra.mxu0 0.0
    %966 = vmatprep.subr.mxu0 0.0
    %967 = vmatpush2.msra.mxu0 0.0
    %968 = vmatprep.subr.mxu0 0.0
    %969 = vmatpush2.msra.mxu0 0.0
    %970 = vmatprep.subr.mxu0 0.0
    %971 = vmatpush2.msra.mxu0 0.0
    %972 = vmatprep.subr.mxu0 0.0
    %973 = vmatpush2.msra.mxu0 0.0
    %974 = vmatprep.subr.mxu0 0.0
    %975 = vmatpush2.msra.mxu0 0.0
    %976 = vmatprep.subr.mxu0 0.0
    %977 = vmatpush2.msra.mxu0 0.0
    %978 = vmatprep.subr.mxu0 0.0
    %979 = vmatpush2.msra.mxu0 0.0
    %980 = vmatprep.mubr.f32.mxu0 0.0
    %v981 = vand.u32 %v134, 4294901760
    %982 = vmatmul.mubr.f32.gmra.mxu0 %v981
    %v983 = vpop.f32.mrf.mxu0
    %v984 = vadd.f32 %v859, %v983
    %v985 = vpop.f32.mrf.mxu0
    %v986 = vadd.f32 %v861, %v985
    %987 = vmatprep.mubr.f32.mxu0 0.0
    %v988 = vand.u32 %v137, 4294901760
    %989 = vmatmul.mubr.f32.gmra.mxu0 %v988
    %v990 = vpop.f32.mrf.mxu0
    %v991 = vadd.f32 %v870, %v990
    %v992 = vpop.f32.mrf.mxu0
    %v993 = vadd.f32 %v872, %v992
    %994 = vmatprep.mubr.f32.mxu0 0.0
    %v995 = vand.u32 %v140, 4294901760
    %996 = vmatmul.mubr.f32.gmra.mxu0 %v995
    %v997 = vpop.f32.mrf.mxu0
    %v998 = vadd.f32 %v881, %v997
    %v999 = vpop.f32.mrf.mxu0
    %v1000 = vadd.f32 %v883, %v999
    %1001 = vmatprep.mubr.f32.mxu0 0.0
    %v1002 = vand.u32 %v143, 4294901760
    %1003 = vmatmul.mubr.f32.gmra.mxu0 %v1002
    %v1004 = vpop.f32.mrf.mxu0
    %v1005 = vadd.f32 %v892, %v1004
    %v1006 = vpop.f32.mrf.mxu0
    %v1007 = vadd.f32 %v894, %v1006
    %1008 = vdwg.mxu0
    %1009 = vmatprep.subr.mxu0 0.0
    %1010 = vmatpush1.msra.mxu0 0.0
    %1011 = vmatprep.subr.mxu0 0.0
    %1012 = vmatpush1.msra.mxu0 0.0
    %1013 = vmatprep.subr.mxu0 0.0
    %1014 = vmatpush1.msra.mxu0 0.0
    %1015 = vmatprep.subr.mxu0 0.0
    %1016 = vmatpush1.msra.mxu0 0.0
    %1017 = vmatprep.subr.mxu0 0.0
    %1018 = vmatpush1.msra.mxu0 0.0
    %1019 = vmatprep.subr.mxu0 0.0
    %1020 = vmatpush1.msra.mxu0 0.0
    %1021 = vmatprep.subr.mxu0 0.0
    %1022 = vmatpush1.msra.mxu0 0.0
    %1023 = vmatprep.subr.mxu0 0.0
    %1024 = vmatpush1.msra.mxu0 0.0
    %1025 = vmatprep.subr.mxu0 0.0
    %1026 = vmatpush1.msra.mxu0 0.0
    %1027 = vmatprep.subr.mxu0 0.0
    %1028 = vmatpush1.msra.mxu0 0.0
    %1029 = vmatprep.subr.mxu0 0.0
    %1030 = vmatpush1.msra.mxu0 0.0
    %1031 = vmatprep.subr.mxu0 0.0
    %1032 = vmatpush1.msra.mxu0 0.0
    %1033 = vmatprep.subr.mxu0 0.0
    %1034 = vmatpush1.msra.mxu0 0.0
    %1035 = vmatprep.subr.mxu0 0.0
    %1036 = vmatpush1.msra.mxu0 0.0
    %v1037 = vand.u32 %v123, 4294901760
    %v1038 = vsub.f32 %v123, %v1037
    %1039 = vmatprep.subr.mxu0 %v1038
    %v1040 = vand.u32 %v122, 4294901760
    %v1041 = vsub.f32 %v122, %v1040
    %1042 = vmatpush1.msra.mxu0 %v1041
    %v1043 = vand.u32 %v115, 4294901760
    %v1044 = vsub.f32 %v115, %v1043
    %1045 = vmatprep.subr.mxu0 %v1044
    %v1046 = vand.u32 %v114, 4294901760
    %v1047 = vsub.f32 %v114, %v1046
    %1048 = vmatpush1.msra.mxu0 %v1047
    %1049 = vmatprep.subr.mxu0 0.0
    %1050 = vmatpush2.msra.mxu0 0.0
    %1051 = vmatprep.subr.mxu0 0.0
    %1052 = vmatpush2.msra.mxu0 0.0
    %1053 = vmatprep.subr.mxu0 0.0
    %1054 = vmatpush2.msra.mxu0 0.0
    %1055 = vmatprep.subr.mxu0 0.0
    %1056 = vmatpush2.msra.mxu0 0.0
    %1057 = vmatprep.subr.mxu0 0.0
    %1058 = vmatpush2.msra.mxu0 0.0
    %1059 = vmatprep.subr.mxu0 0.0
    %1060 = vmatpush2.msra.mxu0 0.0
    %1061 = vmatprep.subr.mxu0 0.0
    %1062 = vmatpush2.msra.mxu0 0.0
    %1063 = vmatprep.subr.mxu0 0.0
    %1064 = vmatpush2.msra.mxu0 0.0
    %1065 = vmatprep.subr.mxu0 0.0
    %1066 = vmatpush2.msra.mxu0 0.0
    %1067 = vmatprep.subr.mxu0 0.0
    %1068 = vmatpush2.msra.mxu0 0.0
    %1069 = vmatprep.subr.mxu0 0.0
    %1070 = vmatpush2.msra.mxu0 0.0
    %1071 = vmatprep.subr.mxu0 0.0
    %1072 = vmatpush2.msra.mxu0 0.0
    %1073 = vmatprep.subr.mxu0 0.0
    %1074 = vmatpush2.msra.mxu0 0.0
    %1075 = vmatprep.subr.mxu0 0.0
    %1076 = vmatpush2.msra.mxu0 0.0
    %1077 = vmatprep.subr.mxu0 0.0
    %1078 = vmatpush2.msra.mxu0 0.0
    %1079 = vmatprep.subr.mxu0 0.0
    %1080 = vmatpush2.msra.mxu0 0.0
    %1081 = vmatprep.mubr.f32.mxu0 0.0
    %v1082 = vand.u32 %v134, 4294901760
    %v1083 = vsub.f32 %v134, %v1082
    %1084 = vmatmul.mubr.f32.gmra.mxu0 %v1083
    %v1085 = vpop.f32.mrf.mxu0
    %v1086 = vadd.f32 %v984, %v1085
    %v1087 = vpop.f32.mrf.mxu0
    %v1088 = vadd.f32 %v986, %v1087
    %1089 = vmatprep.mubr.f32.mxu0 0.0
    %v1090 = vand.u32 %v137, 4294901760
    %v1091 = vsub.f32 %v137, %v1090
    %1092 = vmatmul.mubr.f32.gmra.mxu0 %v1091
    %v1093 = vpop.f32.mrf.mxu0
    %v1094 = vadd.f32 %v991, %v1093
    %v1095 = vpop.f32.mrf.mxu0
    %v1096 = vadd.f32 %v993, %v1095
    %1097 = vmatprep.mubr.f32.mxu0 0.0
    %v1098 = vand.u32 %v140, 4294901760
    %v1099 = vsub.f32 %v140, %v1098
    %1100 = vmatmul.mubr.f32.gmra.mxu0 %v1099
    %v1101 = vpop.f32.mrf.mxu0
    %v1102 = vadd.f32 %v998, %v1101
    %v1103 = vpop.f32.mrf.mxu0
    %v1104 = vadd.f32 %v1000, %v1103
    %1105 = vmatprep.mubr.f32.mxu0 0.0
    %v1106 = vand.u32 %v143, 4294901760
    %v1107 = vsub.f32 %v143, %v1106
    %1108 = vmatmul.mubr.f32.gmra.mxu0 %v1107
    %v1109 = vpop.f32.mrf.mxu0
    %v1110 = vadd.f32 %v1005, %v1109
    %v1111 = vpop.f32.mrf.mxu0
    %v1112 = vadd.f32 %v1007, %v1111
    %1113 = vdwg.mxu0
    %1114 = vmatprep.subr.mxu0 0.0
    %1115 = vmatpush1.msra.mxu0 0.0
    %1116 = vmatprep.subr.mxu0 0.0
    %1117 = vmatpush1.msra.mxu0 0.0
    %1118 = vmatprep.subr.mxu0 0.0
    %1119 = vmatpush1.msra.mxu0 0.0
    %1120 = vmatprep.subr.mxu0 0.0
    %1121 = vmatpush1.msra.mxu0 0.0
    %1122 = vmatprep.subr.mxu0 0.0
    %1123 = vmatpush1.msra.mxu0 0.0
    %1124 = vmatprep.subr.mxu0 0.0
    %1125 = vmatpush1.msra.mxu0 0.0
    %1126 = vmatprep.subr.mxu0 0.0
    %1127 = vmatpush1.msra.mxu0 0.0
    %1128 = vmatprep.subr.mxu0 0.0
    %1129 = vmatpush1.msra.mxu0 0.0
    %1130 = vmatprep.subr.mxu0 0.0
    %1131 = vmatpush1.msra.mxu0 0.0
    %1132 = vmatprep.subr.mxu0 0.0
    %1133 = vmatpush1.msra.mxu0 0.0
    %1134 = vmatprep.subr.mxu0 0.0
    %1135 = vmatpush1.msra.mxu0 0.0
    %1136 = vmatprep.subr.mxu0 0.0
    %1137 = vmatpush1.msra.mxu0 0.0
    %1138 = vmatprep.subr.mxu0 0.0
    %1139 = vmatpush1.msra.mxu0 0.0
    %1140 = vmatprep.subr.mxu0 0.0
    %1141 = vmatpush1.msra.mxu0 0.0
    %v1142 = vand.u32 %v123, 4294901760
    %1143 = vmatprep.subr.mxu0 %v1142
    %v1144 = vand.u32 %v122, 4294901760
    %1145 = vmatpush1.msra.mxu0 %v1144
    %v1146 = vand.u32 %v115, 4294901760
    %1147 = vmatprep.subr.mxu0 %v1146
    %v1148 = vand.u32 %v114, 4294901760
    %1149 = vmatpush1.msra.mxu0 %v1148
    %1150 = vmatprep.subr.mxu0 0.0
    %1151 = vmatpush2.msra.mxu0 0.0
    %1152 = vmatprep.subr.mxu0 0.0
    %1153 = vmatpush2.msra.mxu0 0.0
    %1154 = vmatprep.subr.mxu0 0.0
    %1155 = vmatpush2.msra.mxu0 0.0
    %1156 = vmatprep.subr.mxu0 0.0
    %1157 = vmatpush2.msra.mxu0 0.0
    %1158 = vmatprep.subr.mxu0 0.0
    %1159 = vmatpush2.msra.mxu0 0.0
    %1160 = vmatprep.subr.mxu0 0.0
    %1161 = vmatpush2.msra.mxu0 0.0
    %1162 = vmatprep.subr.mxu0 0.0
    %1163 = vmatpush2.msra.mxu0 0.0
    %1164 = vmatprep.subr.mxu0 0.0
    %1165 = vmatpush2.msra.mxu0 0.0
    %1166 = vmatprep.subr.mxu0 0.0
    %1167 = vmatpush2.msra.mxu0 0.0
    %1168 = vmatprep.subr.mxu0 0.0
    %1169 = vmatpush2.msra.mxu0 0.0
    %1170 = vmatprep.subr.mxu0 0.0
    %1171 = vmatpush2.msra.mxu0 0.0
    %1172 = vmatprep.subr.mxu0 0.0
    %1173 = vmatpush2.msra.mxu0 0.0
    %1174 = vmatprep.subr.mxu0 0.0
    %1175 = vmatpush2.msra.mxu0 0.0
    %1176 = vmatprep.subr.mxu0 0.0
    %1177 = vmatpush2.msra.mxu0 0.0
    %1178 = vmatprep.subr.mxu0 0.0
    %1179 = vmatpush2.msra.mxu0 0.0
    %1180 = vmatprep.subr.mxu0 0.0
    %1181 = vmatpush2.msra.mxu0 0.0
    %1182 = vmatprep.mubr.f32.mxu0 0.0
    %v1183 = vand.u32 %v134, 4294901760
    %v1184 = vsub.f32 %v134, %v1183
    %v1185 = vand.u32 %v1184, 4294901760
    %1186 = vmatmul.mubr.f32.gmra.mxu0 %v1185
    %v1187 = vpop.f32.mrf.mxu0
    %v1188 = vadd.f32 %v1086, %v1187
    %v1189 = vpop.f32.mrf.mxu0
    %v1190 = vadd.f32 %v1088, %v1189
    %1191 = vmatprep.mubr.f32.mxu0 0.0
    %v1192 = vand.u32 %v137, 4294901760
    %v1193 = vsub.f32 %v137, %v1192
    %v1194 = vand.u32 %v1193, 4294901760
    %1195 = vmatmul.mubr.f32.gmra.mxu0 %v1194
    %v1196 = vpop.f32.mrf.mxu0
    %v1197 = vadd.f32 %v1094, %v1196
    %v1198 = vpop.f32.mrf.mxu0
    %v1199 = vadd.f32 %v1096, %v1198
    %1200 = vmatprep.mubr.f32.mxu0 0.0
    %v1201 = vand.u32 %v140, 4294901760
    %v1202 = vsub.f32 %v140, %v1201
    %v1203 = vand.u32 %v1202, 4294901760
    %1204 = vmatmul.mubr.f32.gmra.mxu0 %v1203
    %v1205 = vpop.f32.mrf.mxu0
    %v1206 = vadd.f32 %v1102, %v1205
    %v1207 = vpop.f32.mrf.mxu0
    %v1208 = vadd.f32 %v1104, %v1207
    %1209 = vmatprep.mubr.f32.mxu0 0.0
    %v1210 = vand.u32 %v143, 4294901760
    %v1211 = vsub.f32 %v143, %v1210
    %v1212 = vand.u32 %v1211, 4294901760
    %1213 = vmatmul.mubr.f32.gmra.mxu0 %v1212
    %v1214 = vpop.f32.mrf.mxu0
    %v1215 = vadd.f32 %v1110, %v1214
    %v1216 = vpop.f32.mrf.mxu0
    %v1217 = vadd.f32 %v1112, %v1216
    %1218 = vdwg.mxu0
    %1219 = vmatprep.subr.mxu0 0.0
    %1220 = vmatpush1.msra.mxu0 0.0
    %1221 = vmatprep.subr.mxu0 0.0
    %1222 = vmatpush1.msra.mxu0 0.0
    %1223 = vmatprep.subr.mxu0 0.0
    %1224 = vmatpush1.msra.mxu0 0.0
    %1225 = vmatprep.subr.mxu0 0.0
    %1226 = vmatpush1.msra.mxu0 0.0
    %1227 = vmatprep.subr.mxu0 0.0
    %1228 = vmatpush1.msra.mxu0 0.0
    %1229 = vmatprep.subr.mxu0 0.0
    %1230 = vmatpush1.msra.mxu0 0.0
    %1231 = vmatprep.subr.mxu0 0.0
    %1232 = vmatpush1.msra.mxu0 0.0
    %1233 = vmatprep.subr.mxu0 0.0
    %1234 = vmatpush1.msra.mxu0 0.0
    %1235 = vmatprep.subr.mxu0 0.0
    %1236 = vmatpush1.msra.mxu0 0.0
    %1237 = vmatprep.subr.mxu0 0.0
    %1238 = vmatpush1.msra.mxu0 0.0
    %1239 = vmatprep.subr.mxu0 0.0
    %1240 = vmatpush1.msra.mxu0 0.0
    %1241 = vmatprep.subr.mxu0 0.0
    %1242 = vmatpush1.msra.mxu0 0.0
    %1243 = vmatprep.subr.mxu0 0.0
    %1244 = vmatpush1.msra.mxu0 0.0
    %1245 = vmatprep.subr.mxu0 0.0
    %1246 = vmatpush1.msra.mxu0 0.0
    %v1247 = vand.u32 %v123, 4294901760
    %v1248 = vsub.f32 %v123, %v1247
    %v1249 = vand.u32 %v1248, 4294901760
    %1250 = vmatprep.subr.mxu0 %v1249
    %v1251 = vand.u32 %v122, 4294901760
    %v1252 = vsub.f32 %v122, %v1251
    %v1253 = vand.u32 %v1252, 4294901760
    %1254 = vmatpush1.msra.mxu0 %v1253
    %v1255 = vand.u32 %v115, 4294901760
    %v1256 = vsub.f32 %v115, %v1255
    %v1257 = vand.u32 %v1256, 4294901760
    %1258 = vmatprep.subr.mxu0 %v1257
    %v1259 = vand.u32 %v114, 4294901760
    %v1260 = vsub.f32 %v114, %v1259
    %v1261 = vand.u32 %v1260, 4294901760
    %1262 = vmatpush1.msra.mxu0 %v1261
    %1263 = vmatprep.subr.mxu0 0.0
    %1264 = vmatpush2.msra.mxu0 0.0
    %1265 = vmatprep.subr.mxu0 0.0
    %1266 = vmatpush2.msra.mxu0 0.0
    %1267 = vmatprep.subr.mxu0 0.0
    %1268 = vmatpush2.msra.mxu0 0.0
    %1269 = vmatprep.subr.mxu0 0.0
    %1270 = vmatpush2.msra.mxu0 0.0
    %1271 = vmatprep.subr.mxu0 0.0
    %1272 = vmatpush2.msra.mxu0 0.0
    %1273 = vmatprep.subr.mxu0 0.0
    %1274 = vmatpush2.msra.mxu0 0.0
    %1275 = vmatprep.subr.mxu0 0.0
    %1276 = vmatpush2.msra.mxu0 0.0
    %1277 = vmatprep.subr.mxu0 0.0
    %1278 = vmatpush2.msra.mxu0 0.0
    %1279 = vmatprep.subr.mxu0 0.0
    %1280 = vmatpush2.msra.mxu0 0.0
    %1281 = vmatprep.subr.mxu0 0.0
    %1282 = vmatpush2.msra.mxu0 0.0
    %1283 = vmatprep.subr.mxu0 0.0
    %1284 = vmatpush2.msra.mxu0 0.0
    %1285 = vmatprep.subr.mxu0 0.0
    %1286 = vmatpush2.msra.mxu0 0.0
    %1287 = vmatprep.subr.mxu0 0.0
    %1288 = vmatpush2.msra.mxu0 0.0
    %1289 = vmatprep.subr.mxu0 0.0
    %1290 = vmatpush2.msra.mxu0 0.0
    %1291 = vmatprep.subr.mxu0 0.0
    %1292 = vmatpush2.msra.mxu0 0.0
    %1293 = vmatprep.subr.mxu0 0.0
    %1294 = vmatpush2.msra.mxu0 0.0
    %1295 = vmatprep.mubr.f32.mxu0 0.0
    %v1296 = vand.u32 %v134, 4294901760
    %1297 = vmatmul.mubr.f32.gmra.mxu0 %v1296
    %v1298 = vpop.f32.mrf.mxu0
    %v1299 = vadd.f32 %v1188, %v1298
    %v1300 = vpop.f32.mrf.mxu0
    %v1301 = vadd.f32 %v1190, %v1300
    %1302 = vmatprep.mubr.f32.mxu0 0.0
    %v1303 = vand.u32 %v137, 4294901760
    %1304 = vmatmul.mubr.f32.gmra.mxu0 %v1303
    %v1305 = vpop.f32.mrf.mxu0
    %v1306 = vadd.f32 %v1197, %v1305
    %v1307 = vpop.f32.mrf.mxu0
    %v1308 = vadd.f32 %v1199, %v1307
    %1309 = vmatprep.mubr.f32.mxu0 0.0
    %v1310 = vand.u32 %v140, 4294901760
    %1311 = vmatmul.mubr.f32.gmra.mxu0 %v1310
    %v1312 = vpop.f32.mrf.mxu0
    %v1313 = vadd.f32 %v1206, %v1312
    %v1314 = vpop.f32.mrf.mxu0
    %v1315 = vadd.f32 %v1208, %v1314
    %1316 = vmatprep.mubr.f32.mxu0 0.0
    %v1317 = vand.u32 %v143, 4294901760
    %1318 = vmatmul.mubr.f32.gmra.mxu0 %v1317
    %v1319 = vpop.f32.mrf.mxu0
    %v1320 = vadd.f32 %v1215, %v1319
    %v1321 = vpop.f32.mrf.mxu0
    %v1322 = vadd.f32 %v1217, %v1321
    %1323 = vdwg.mxu0
    %1324 = vmatprep.subr.mxu0 0.0
    %1325 = vmatpush1.msra.mxu0 0.0
    %1326 = vmatprep.subr.mxu0 0.0
    %1327 = vmatpush1.msra.mxu0 0.0
    %1328 = vmatprep.subr.mxu0 0.0
    %1329 = vmatpush1.msra.mxu0 0.0
    %1330 = vmatprep.subr.mxu0 0.0
    %1331 = vmatpush1.msra.mxu0 0.0
    %1332 = vmatprep.subr.mxu0 0.0
    %1333 = vmatpush1.msra.mxu0 0.0
    %1334 = vmatprep.subr.mxu0 0.0
    %1335 = vmatpush1.msra.mxu0 0.0
    %1336 = vmatprep.subr.mxu0 0.0
    %1337 = vmatpush1.msra.mxu0 0.0
    %1338 = vmatprep.subr.mxu0 0.0
    %1339 = vmatpush1.msra.mxu0 0.0
    %1340 = vmatprep.subr.mxu0 0.0
    %1341 = vmatpush1.msra.mxu0 0.0
    %1342 = vmatprep.subr.mxu0 0.0
    %1343 = vmatpush1.msra.mxu0 0.0
    %1344 = vmatprep.subr.mxu0 0.0
    %1345 = vmatpush1.msra.mxu0 0.0
    %1346 = vmatprep.subr.mxu0 0.0
    %1347 = vmatpush1.msra.mxu0 0.0
    %1348 = vmatprep.subr.mxu0 0.0
    %1349 = vmatpush1.msra.mxu0 0.0
    %1350 = vmatprep.subr.mxu0 0.0
    %1351 = vmatpush1.msra.mxu0 0.0
    %v1352 = vand.u32 %v123, 4294901760
    %1353 = vmatprep.subr.mxu0 %v1352
    %v1354 = vand.u32 %v122, 4294901760
    %1355 = vmatpush1.msra.mxu0 %v1354
    %v1356 = vand.u32 %v115, 4294901760
    %1357 = vmatprep.subr.mxu0 %v1356
    %v1358 = vand.u32 %v114, 4294901760
    %1359 = vmatpush1.msra.mxu0 %v1358
    %1360 = vmatprep.subr.mxu0 0.0
    %1361 = vmatpush2.msra.mxu0 0.0
    %1362 = vmatprep.subr.mxu0 0.0
    %1363 = vmatpush2.msra.mxu0 0.0
    %1364 = vmatprep.subr.mxu0 0.0
    %1365 = vmatpush2.msra.mxu0 0.0
    %1366 = vmatprep.subr.mxu0 0.0
    %1367 = vmatpush2.msra.mxu0 0.0
    %1368 = vmatprep.subr.mxu0 0.0
    %1369 = vmatpush2.msra.mxu0 0.0
    %1370 = vmatprep.subr.mxu0 0.0
    %1371 = vmatpush2.msra.mxu0 0.0
    %1372 = vmatprep.subr.mxu0 0.0
    %1373 = vmatpush2.msra.mxu0 0.0
    %1374 = vmatprep.subr.mxu0 0.0
    %1375 = vmatpush2.msra.mxu0 0.0
    %1376 = vmatprep.subr.mxu0 0.0
    %1377 = vmatpush2.msra.mxu0 0.0
    %1378 = vmatprep.subr.mxu0 0.0
    %1379 = vmatpush2.msra.mxu0 0.0
    %1380 = vmatprep.subr.mxu0 0.0
    %1381 = vmatpush2.msra.mxu0 0.0
    %1382 = vmatprep.subr.mxu0 0.0
    %1383 = vmatpush2.msra.mxu0 0.0
    %1384 = vmatprep.subr.mxu0 0.0
    %1385 = vmatpush2.msra.mxu0 0.0
    %1386 = vmatprep.subr.mxu0 0.0
    %1387 = vmatpush2.msra.mxu0 0.0
    %1388 = vmatprep.subr.mxu0 0.0
    %1389 = vmatpush2.msra.mxu0 0.0
    %1390 = vmatprep.subr.mxu0 0.0
    %1391 = vmatpush2.msra.mxu0 0.0
    %1392 = vmatprep.mubr.f32.mxu0 0.0
    %v1393 = vand.u32 %v134, 4294901760
    %1394 = vmatmul.mubr.f32.gmra.mxu0 %v1393
    %v1395 = vpop.f32.mrf.mxu0
    %v1396 = vadd.f32 %v1299, %v1395
    %v1397 = vpop.f32.mrf.mxu0
    %v1398 = vadd.f32 %v1301, %v1397
    %1399 = vmatprep.mubr.f32.mxu0 0.0
    %v1400 = vand.u32 %v137, 4294901760
    %1401 = vmatmul.mubr.f32.gmra.mxu0 %v1400
    %v1402 = vpop.f32.mrf.mxu0
    %v1403 = vadd.f32 %v1306, %v1402
    %v1404 = vpop.f32.mrf.mxu0
    %v1405 = vadd.f32 %v1308, %v1404
    %1406 = vmatprep.mubr.f32.mxu0 0.0
    %v1407 = vand.u32 %v140, 4294901760
    %1408 = vmatmul.mubr.f32.gmra.mxu0 %v1407
    %v1409 = vpop.f32.mrf.mxu0
    %v1410 = vadd.f32 %v1313, %v1409
    %v1411 = vpop.f32.mrf.mxu0
    %v1412 = vadd.f32 %v1315, %v1411
    %1413 = vmatprep.mubr.f32.mxu0 0.0
    %v1414 = vand.u32 %v143, 4294901760
    %1415 = vmatmul.mubr.f32.gmra.mxu0 %v1414
    %v1416 = vpop.f32.mrf.mxu0
    %v1417 = vadd.f32 %v1320, %v1416
    %v1418 = vpop.f32.mrf.mxu0
    %v1419 = vadd.f32 %v1322, %v1418
    %1420 = vdwg.mxu0
    %1421 = vmatprep.subr.mxu0 0.0
    %1422 = vmatpush1.msra.mxu0 0.0
    %1423 = vmatprep.subr.mxu0 0.0
    %1424 = vmatpush1.msra.mxu0 0.0
    %1425 = vmatprep.subr.mxu0 0.0
    %1426 = vmatpush1.msra.mxu0 0.0
    %1427 = vmatprep.subr.mxu0 0.0
    %1428 = vmatpush1.msra.mxu0 0.0
    %1429 = vmatprep.subr.mxu0 0.0
    %1430 = vmatpush1.msra.mxu0 0.0
    %1431 = vmatprep.subr.mxu0 0.0
    %1432 = vmatpush1.msra.mxu0 0.0
    %1433 = vmatprep.subr.mxu0 0.0
    %1434 = vmatpush1.msra.mxu0 0.0
    %1435 = vmatprep.subr.mxu0 0.0
    %1436 = vmatpush1.msra.mxu0 0.0
    %1437 = vmatprep.subr.mxu0 0.0
    %1438 = vmatpush1.msra.mxu0 0.0
    %1439 = vmatprep.subr.mxu0 0.0
    %1440 = vmatpush1.msra.mxu0 0.0
    %1441 = vmatprep.subr.mxu0 0.0
    %1442 = vmatpush1.msra.mxu0 0.0
    %1443 = vmatprep.subr.mxu0 0.0
    %1444 = vmatpush1.msra.mxu0 0.0
    %1445 = vmatprep.subr.mxu0 0.0
    %1446 = vmatpush1.msra.mxu0 0.0
    %1447 = vmatprep.subr.mxu0 0.0
    %1448 = vmatpush1.msra.mxu0 0.0
    %v1449 = vand.u32 %v125, 4294901760
    %1450 = vmatprep.subr.mxu0 %v1449
    %v1451 = vand.u32 %v124, 4294901760
    %1452 = vmatpush1.msra.mxu0 %v1451
    %v1453 = vand.u32 %v117, 4294901760
    %1454 = vmatprep.subr.mxu0 %v1453
    %v1455 = vand.u32 %v116, 4294901760
    %1456 = vmatpush1.msra.mxu0 %v1455
    %1457 = vmatprep.subr.mxu0 0.0
    %1458 = vmatpush2.msra.mxu0 0.0
    %1459 = vmatprep.subr.mxu0 0.0
    %1460 = vmatpush2.msra.mxu0 0.0
    %1461 = vmatprep.subr.mxu0 0.0
    %1462 = vmatpush2.msra.mxu0 0.0
    %1463 = vmatprep.subr.mxu0 0.0
    %1464 = vmatpush2.msra.mxu0 0.0
    %1465 = vmatprep.subr.mxu0 0.0
    %1466 = vmatpush2.msra.mxu0 0.0
    %1467 = vmatprep.subr.mxu0 0.0
    %1468 = vmatpush2.msra.mxu0 0.0
    %1469 = vmatprep.subr.mxu0 0.0
    %1470 = vmatpush2.msra.mxu0 0.0
    %1471 = vmatprep.subr.mxu0 0.0
    %1472 = vmatpush2.msra.mxu0 0.0
    %1473 = vmatprep.subr.mxu0 0.0
    %1474 = vmatpush2.msra.mxu0 0.0
    %1475 = vmatprep.subr.mxu0 0.0
    %1476 = vmatpush2.msra.mxu0 0.0
    %1477 = vmatprep.subr.mxu0 0.0
    %1478 = vmatpush2.msra.mxu0 0.0
    %1479 = vmatprep.subr.mxu0 0.0
    %1480 = vmatpush2.msra.mxu0 0.0
    %1481 = vmatprep.subr.mxu0 0.0
    %1482 = vmatpush2.msra.mxu0 0.0
    %1483 = vmatprep.subr.mxu0 0.0
    %1484 = vmatpush2.msra.mxu0 0.0
    %1485 = vmatprep.subr.mxu0 0.0
    %1486 = vmatpush2.msra.mxu0 0.0
    %1487 = vmatprep.subr.mxu0 0.0
    %1488 = vmatpush2.msra.mxu0 0.0
    %1489 = vmatprep.mubr.f32.mxu0 0.0
    %v1490 = vand.u32 %v134, 4294901760
    %v1491 = vsub.f32 %v134, %v1490
    %v1492 = vand.u32 %v1491, 4294901760
    %v1493 = vsub.f32 %v1491, %v1492
    %v1494 = vand.u32 %v1493, 4294901760
    %1495 = vmatmul.mubr.f32.gmra.mxu0 %v1494
    %v1496 = vpop.f32.mrf.mxu0
    %v1497 = vadd.f32 0.0, %v1496
    %v1498 = vpop.f32.mrf.mxu0
    %v1499 = vadd.f32 0.0, %v1498
    %1500 = vmatprep.mubr.f32.mxu0 0.0
    %v1501 = vand.u32 %v137, 4294901760
    %v1502 = vsub.f32 %v137, %v1501
    %v1503 = vand.u32 %v1502, 4294901760
    %v1504 = vsub.f32 %v1502, %v1503
    %v1505 = vand.u32 %v1504, 4294901760
    %1506 = vmatmul.mubr.f32.gmra.mxu0 %v1505
    %v1507 = vpop.f32.mrf.mxu0
    %v1508 = vadd.f32 0.0, %v1507
    %v1509 = vpop.f32.mrf.mxu0
    %v1510 = vadd.f32 0.0, %v1509
    %1511 = vmatprep.mubr.f32.mxu0 0.0
    %v1512 = vand.u32 %v140, 4294901760
    %v1513 = vsub.f32 %v140, %v1512
    %v1514 = vand.u32 %v1513, 4294901760
    %v1515 = vsub.f32 %v1513, %v1514
    %v1516 = vand.u32 %v1515, 4294901760
    %1517 = vmatmul.mubr.f32.gmra.mxu0 %v1516
    %v1518 = vpop.f32.mrf.mxu0
    %v1519 = vadd.f32 0.0, %v1518
    %v1520 = vpop.f32.mrf.mxu0
    %v1521 = vadd.f32 0.0, %v1520
    %1522 = vmatprep.mubr.f32.mxu0 0.0
    %v1523 = vand.u32 %v143, 4294901760
    %v1524 = vsub.f32 %v143, %v1523
    %v1525 = vand.u32 %v1524, 4294901760
    %v1526 = vsub.f32 %v1524, %v1525
    %v1527 = vand.u32 %v1526, 4294901760
    %1528 = vmatmul.mubr.f32.gmra.mxu0 %v1527
    %v1529 = vpop.f32.mrf.mxu0
    %v1530 = vadd.f32 0.0, %v1529
    %v1531 = vpop.f32.mrf.mxu0
    %v1532 = vadd.f32 0.0, %v1531
    %1533 = vdwg.mxu0
    %1534 = vmatprep.subr.mxu0 0.0
    %1535 = vmatpush1.msra.mxu0 0.0
    %1536 = vmatprep.subr.mxu0 0.0
    %1537 = vmatpush1.msra.mxu0 0.0
    %1538 = vmatprep.subr.mxu0 0.0
    %1539 = vmatpush1.msra.mxu0 0.0
    %1540 = vmatprep.subr.mxu0 0.0
    %1541 = vmatpush1.msra.mxu0 0.0
    %1542 = vmatprep.subr.mxu0 0.0
    %1543 = vmatpush1.msra.mxu0 0.0
    %1544 = vmatprep.subr.mxu0 0.0
    %1545 = vmatpush1.msra.mxu0 0.0
    %1546 = vmatprep.subr.mxu0 0.0
    %1547 = vmatpush1.msra.mxu0 0.0
    %1548 = vmatprep.subr.mxu0 0.0
    %1549 = vmatpush1.msra.mxu0 0.0
    %1550 = vmatprep.subr.mxu0 0.0
    %1551 = vmatpush1.msra.mxu0 0.0
    %1552 = vmatprep.subr.mxu0 0.0
    %1553 = vmatpush1.msra.mxu0 0.0
    %1554 = vmatprep.subr.mxu0 0.0
    %1555 = vmatpush1.msra.mxu0 0.0
    %1556 = vmatprep.subr.mxu0 0.0
    %1557 = vmatpush1.msra.mxu0 0.0
    %1558 = vmatprep.subr.mxu0 0.0
    %1559 = vmatpush1.msra.mxu0 0.0
    %1560 = vmatprep.subr.mxu0 0.0
    %1561 = vmatpush1.msra.mxu0 0.0
    %v1562 = vand.u32 %v125, 4294901760
    %v1563 = vsub.f32 %v125, %v1562
    %v1564 = vand.u32 %v1563, 4294901760
    %v1565 = vsub.f32 %v1563, %v1564
    %v1566 = vand.u32 %v1565, 4294901760
    %1567 = vmatprep.subr.mxu0 %v1566
    %v1568 = vand.u32 %v124, 4294901760
    %v1569 = vsub.f32 %v124, %v1568
    %v1570 = vand.u32 %v1569, 4294901760
    %v1571 = vsub.f32 %v1569, %v1570
    %v1572 = vand.u32 %v1571, 4294901760
    %1573 = vmatpush1.msra.mxu0 %v1572
    %v1574 = vand.u32 %v117, 4294901760
    %v1575 = vsub.f32 %v117, %v1574
    %v1576 = vand.u32 %v1575, 4294901760
    %v1577 = vsub.f32 %v1575, %v1576
    %v1578 = vand.u32 %v1577, 4294901760
    %1579 = vmatprep.subr.mxu0 %v1578
    %v1580 = vand.u32 %v116, 4294901760
    %v1581 = vsub.f32 %v116, %v1580
    %v1582 = vand.u32 %v1581, 4294901760
    %v1583 = vsub.f32 %v1581, %v1582
    %v1584 = vand.u32 %v1583, 4294901760
    %1585 = vmatpush1.msra.mxu0 %v1584
    %1586 = vmatprep.subr.mxu0 0.0
    %1587 = vmatpush2.msra.mxu0 0.0
    %1588 = vmatprep.subr.mxu0 0.0
    %1589 = vmatpush2.msra.mxu0 0.0
    %1590 = vmatprep.subr.mxu0 0.0
    %1591 = vmatpush2.msra.mxu0 0.0
    %1592 = vmatprep.subr.mxu0 0.0
    %1593 = vmatpush2.msra.mxu0 0.0
    %1594 = vmatprep.subr.mxu0 0.0
    %1595 = vmatpush2.msra.mxu0 0.0
    %1596 = vmatprep.subr.mxu0 0.0
    %1597 = vmatpush2.msra.mxu0 0.0
    %1598 = vmatprep.subr.mxu0 0.0
    %1599 = vmatpush2.msra.mxu0 0.0
    %1600 = vmatprep.subr.mxu0 0.0
    %1601 = vmatpush2.msra.mxu0 0.0
    %1602 = vmatprep.subr.mxu0 0.0
    %1603 = vmatpush2.msra.mxu0 0.0
    %1604 = vmatprep.subr.mxu0 0.0
    %1605 = vmatpush2.msra.mxu0 0.0
    %1606 = vmatprep.subr.mxu0 0.0
    %1607 = vmatpush2.msra.mxu0 0.0
    %1608 = vmatprep.subr.mxu0 0.0
    %1609 = vmatpush2.msra.mxu0 0.0
    %1610 = vmatprep.subr.mxu0 0.0
    %1611 = vmatpush2.msra.mxu0 0.0
    %1612 = vmatprep.subr.mxu0 0.0
    %1613 = vmatpush2.msra.mxu0 0.0
    %1614 = vmatprep.subr.mxu0 0.0
    %1615 = vmatpush2.msra.mxu0 0.0
    %1616 = vmatprep.subr.mxu0 0.0
    %1617 = vmatpush2.msra.mxu0 0.0
    %1618 = vmatprep.mubr.f32.mxu0 0.0
    %v1619 = vand.u32 %v134, 4294901760
    %1620 = vmatmul.mubr.f32.gmra.mxu0 %v1619
    %v1621 = vpop.f32.mrf.mxu0
    %v1622 = vadd.f32 %v1497, %v1621
    %v1623 = vpop.f32.mrf.mxu0
    %v1624 = vadd.f32 %v1499, %v1623
    %1625 = vmatprep.mubr.f32.mxu0 0.0
    %v1626 = vand.u32 %v137, 4294901760
    %1627 = vmatmul.mubr.f32.gmra.mxu0 %v1626
    %v1628 = vpop.f32.mrf.mxu0
    %v1629 = vadd.f32 %v1508, %v1628
    %v1630 = vpop.f32.mrf.mxu0
    %v1631 = vadd.f32 %v1510, %v1630
    %1632 = vmatprep.mubr.f32.mxu0 0.0
    %v1633 = vand.u32 %v140, 4294901760
    %1634 = vmatmul.mubr.f32.gmra.mxu0 %v1633
    %v1635 = vpop.f32.mrf.mxu0
    %v1636 = vadd.f32 %v1519, %v1635
    %v1637 = vpop.f32.mrf.mxu0
    %v1638 = vadd.f32 %v1521, %v1637
    %1639 = vmatprep.mubr.f32.mxu0 0.0
    %v1640 = vand.u32 %v143, 4294901760
    %1641 = vmatmul.mubr.f32.gmra.mxu0 %v1640
    %v1642 = vpop.f32.mrf.mxu0
    %v1643 = vadd.f32 %v1530, %v1642
    %v1644 = vpop.f32.mrf.mxu0
    %v1645 = vadd.f32 %v1532, %v1644
    %1646 = vdwg.mxu0
    %1647 = vmatprep.subr.mxu0 0.0
    %1648 = vmatpush1.msra.mxu0 0.0
    %1649 = vmatprep.subr.mxu0 0.0
    %1650 = vmatpush1.msra.mxu0 0.0
    %1651 = vmatprep.subr.mxu0 0.0
    %1652 = vmatpush1.msra.mxu0 0.0
    %1653 = vmatprep.subr.mxu0 0.0
    %1654 = vmatpush1.msra.mxu0 0.0
    %1655 = vmatprep.subr.mxu0 0.0
    %1656 = vmatpush1.msra.mxu0 0.0
    %1657 = vmatprep.subr.mxu0 0.0
    %1658 = vmatpush1.msra.mxu0 0.0
    %1659 = vmatprep.subr.mxu0 0.0
    %1660 = vmatpush1.msra.mxu0 0.0
    %1661 = vmatprep.subr.mxu0 0.0
    %1662 = vmatpush1.msra.mxu0 0.0
    %1663 = vmatprep.subr.mxu0 0.0
    %1664 = vmatpush1.msra.mxu0 0.0
    %1665 = vmatprep.subr.mxu0 0.0
    %1666 = vmatpush1.msra.mxu0 0.0
    %1667 = vmatprep.subr.mxu0 0.0
    %1668 = vmatpush1.msra.mxu0 0.0
    %1669 = vmatprep.subr.mxu0 0.0
    %1670 = vmatpush1.msra.mxu0 0.0
    %1671 = vmatprep.subr.mxu0 0.0
    %1672 = vmatpush1.msra.mxu0 0.0
    %1673 = vmatprep.subr.mxu0 0.0
    %1674 = vmatpush1.msra.mxu0 0.0
    %v1675 = vand.u32 %v125, 4294901760
    %v1676 = vsub.f32 %v125, %v1675
    %1677 = vmatprep.subr.mxu0 %v1676
    %v1678 = vand.u32 %v124, 4294901760
    %v1679 = vsub.f32 %v124, %v1678
    %1680 = vmatpush1.msra.mxu0 %v1679
    %v1681 = vand.u32 %v117, 4294901760
    %v1682 = vsub.f32 %v117, %v1681
    %1683 = vmatprep.subr.mxu0 %v1682
    %v1684 = vand.u32 %v116, 4294901760
    %v1685 = vsub.f32 %v116, %v1684
    %1686 = vmatpush1.msra.mxu0 %v1685
    %1687 = vmatprep.subr.mxu0 0.0
    %1688 = vmatpush2.msra.mxu0 0.0
    %1689 = vmatprep.subr.mxu0 0.0
    %1690 = vmatpush2.msra.mxu0 0.0
    %1691 = vmatprep.subr.mxu0 0.0
    %1692 = vmatpush2.msra.mxu0 0.0
    %1693 = vmatprep.subr.mxu0 0.0
    %1694 = vmatpush2.msra.mxu0 0.0
    %1695 = vmatprep.subr.mxu0 0.0
    %1696 = vmatpush2.msra.mxu0 0.0
    %1697 = vmatprep.subr.mxu0 0.0
    %1698 = vmatpush2.msra.mxu0 0.0
    %1699 = vmatprep.subr.mxu0 0.0
    %1700 = vmatpush2.msra.mxu0 0.0
    %1701 = vmatprep.subr.mxu0 0.0
    %1702 = vmatpush2.msra.mxu0 0.0
    %1703 = vmatprep.subr.mxu0 0.0
    %1704 = vmatpush2.msra.mxu0 0.0
    %1705 = vmatprep.subr.mxu0 0.0
    %1706 = vmatpush2.msra.mxu0 0.0
    %1707 = vmatprep.subr.mxu0 0.0
    %1708 = vmatpush2.msra.mxu0 0.0
    %1709 = vmatprep.subr.mxu0 0.0
    %1710 = vmatpush2.msra.mxu0 0.0
    %1711 = vmatprep.subr.mxu0 0.0
    %1712 = vmatpush2.msra.mxu0 0.0
    %1713 = vmatprep.subr.mxu0 0.0
    %1714 = vmatpush2.msra.mxu0 0.0
    %1715 = vmatprep.subr.mxu0 0.0
    %1716 = vmatpush2.msra.mxu0 0.0
    %1717 = vmatprep.subr.mxu0 0.0
    %1718 = vmatpush2.msra.mxu0 0.0
    %1719 = vmatprep.mubr.f32.mxu0 0.0
    %v1720 = vand.u32 %v134, 4294901760
    %v1721 = vsub.f32 %v134, %v1720
    %1722 = vmatmul.mubr.f32.gmra.mxu0 %v1721
    %v1723 = vpop.f32.mrf.mxu0
    %v1724 = vadd.f32 %v1622, %v1723
    %v1725 = vpop.f32.mrf.mxu0
    %v1726 = vadd.f32 %v1624, %v1725
    %1727 = vmatprep.mubr.f32.mxu0 0.0
    %v1728 = vand.u32 %v137, 4294901760
    %v1729 = vsub.f32 %v137, %v1728
    %1730 = vmatmul.mubr.f32.gmra.mxu0 %v1729
    %v1731 = vpop.f32.mrf.mxu0
    %v1732 = vadd.f32 %v1629, %v1731
    %v1733 = vpop.f32.mrf.mxu0
    %v1734 = vadd.f32 %v1631, %v1733
    %1735 = vmatprep.mubr.f32.mxu0 0.0
    %v1736 = vand.u32 %v140, 4294901760
    %v1737 = vsub.f32 %v140, %v1736
    %1738 = vmatmul.mubr.f32.gmra.mxu0 %v1737
    %v1739 = vpop.f32.mrf.mxu0
    %v1740 = vadd.f32 %v1636, %v1739
    %v1741 = vpop.f32.mrf.mxu0
    %v1742 = vadd.f32 %v1638, %v1741
    %1743 = vmatprep.mubr.f32.mxu0 0.0
    %v1744 = vand.u32 %v143, 4294901760
    %v1745 = vsub.f32 %v143, %v1744
    %1746 = vmatmul.mubr.f32.gmra.mxu0 %v1745
    %v1747 = vpop.f32.mrf.mxu0
    %v1748 = vadd.f32 %v1643, %v1747
    %v1749 = vpop.f32.mrf.mxu0
    %v1750 = vadd.f32 %v1645, %v1749
    %1751 = vdwg.mxu0
    %1752 = vmatprep.subr.mxu0 0.0
    %1753 = vmatpush1.msra.mxu0 0.0
    %1754 = vmatprep.subr.mxu0 0.0
    %1755 = vmatpush1.msra.mxu0 0.0
    %1756 = vmatprep.subr.mxu0 0.0
    %1757 = vmatpush1.msra.mxu0 0.0
    %1758 = vmatprep.subr.mxu0 0.0
    %1759 = vmatpush1.msra.mxu0 0.0
    %1760 = vmatprep.subr.mxu0 0.0
    %1761 = vmatpush1.msra.mxu0 0.0
    %1762 = vmatprep.subr.mxu0 0.0
    %1763 = vmatpush1.msra.mxu0 0.0
    %1764 = vmatprep.subr.mxu0 0.0
    %1765 = vmatpush1.msra.mxu0 0.0
    %1766 = vmatprep.subr.mxu0 0.0
    %1767 = vmatpush1.msra.mxu0 0.0
    %1768 = vmatprep.subr.mxu0 0.0
    %1769 = vmatpush1.msra.mxu0 0.0
    %1770 = vmatprep.subr.mxu0 0.0
    %1771 = vmatpush1.msra.mxu0 0.0
    %1772 = vmatprep.subr.mxu0 0.0
    %1773 = vmatpush1.msra.mxu0 0.0
    %1774 = vmatprep.subr.mxu0 0.0
    %1775 = vmatpush1.msra.mxu0 0.0
    %1776 = vmatprep.subr.mxu0 0.0
    %1777 = vmatpush1.msra.mxu0 0.0
    %1778 = vmatprep.subr.mxu0 0.0
    %1779 = vmatpush1.msra.mxu0 0.0
    %v1780 = vand.u32 %v125, 4294901760
    %1781 = vmatprep.subr.mxu0 %v1780
    %v1782 = vand.u32 %v124, 4294901760
    %1783 = vmatpush1.msra.mxu0 %v1782
    %v1784 = vand.u32 %v117, 4294901760
    %1785 = vmatprep.subr.mxu0 %v1784
    %v1786 = vand.u32 %v116, 4294901760
    %1787 = vmatpush1.msra.mxu0 %v1786
    %1788 = vmatprep.subr.mxu0 0.0
    %1789 = vmatpush2.msra.mxu0 0.0
    %1790 = vmatprep.subr.mxu0 0.0
    %1791 = vmatpush2.msra.mxu0 0.0
    %1792 = vmatprep.subr.mxu0 0.0
    %1793 = vmatpush2.msra.mxu0 0.0
    %1794 = vmatprep.subr.mxu0 0.0
    %1795 = vmatpush2.msra.mxu0 0.0
    %1796 = vmatprep.subr.mxu0 0.0
    %1797 = vmatpush2.msra.mxu0 0.0
    %1798 = vmatprep.subr.mxu0 0.0
    %1799 = vmatpush2.msra.mxu0 0.0
    %1800 = vmatprep.subr.mxu0 0.0
    %1801 = vmatpush2.msra.mxu0 0.0
    %1802 = vmatprep.subr.mxu0 0.0
    %1803 = vmatpush2.msra.mxu0 0.0
    %1804 = vmatprep.subr.mxu0 0.0
    %1805 = vmatpush2.msra.mxu0 0.0
    %1806 = vmatprep.subr.mxu0 0.0
    %1807 = vmatpush2.msra.mxu0 0.0
    %1808 = vmatprep.subr.mxu0 0.0
    %1809 = vmatpush2.msra.mxu0 0.0
    %1810 = vmatprep.subr.mxu0 0.0
    %1811 = vmatpush2.msra.mxu0 0.0
    %1812 = vmatprep.subr.mxu0 0.0
    %1813 = vmatpush2.msra.mxu0 0.0
    %1814 = vmatprep.subr.mxu0 0.0
    %1815 = vmatpush2.msra.mxu0 0.0
    %1816 = vmatprep.subr.mxu0 0.0
    %1817 = vmatpush2.msra.mxu0 0.0
    %1818 = vmatprep.subr.mxu0 0.0
    %1819 = vmatpush2.msra.mxu0 0.0
    %1820 = vmatprep.mubr.f32.mxu0 0.0
    %v1821 = vand.u32 %v134, 4294901760
    %v1822 = vsub.f32 %v134, %v1821
    %v1823 = vand.u32 %v1822, 4294901760
    %1824 = vmatmul.mubr.f32.gmra.mxu0 %v1823
    %v1825 = vpop.f32.mrf.mxu0
    %v1826 = vadd.f32 %v1724, %v1825
    %v1827 = vpop.f32.mrf.mxu0
    %v1828 = vadd.f32 %v1726, %v1827
    %1829 = vmatprep.mubr.f32.mxu0 0.0
    %v1830 = vand.u32 %v137, 4294901760
    %v1831 = vsub.f32 %v137, %v1830
    %v1832 = vand.u32 %v1831, 4294901760
    %1833 = vmatmul.mubr.f32.gmra.mxu0 %v1832
    %v1834 = vpop.f32.mrf.mxu0
    %v1835 = vadd.f32 %v1732, %v1834
    %v1836 = vpop.f32.mrf.mxu0
    %v1837 = vadd.f32 %v1734, %v1836
    %1838 = vmatprep.mubr.f32.mxu0 0.0
    %v1839 = vand.u32 %v140, 4294901760
    %v1840 = vsub.f32 %v140, %v1839
    %v1841 = vand.u32 %v1840, 4294901760
    %1842 = vmatmul.mubr.f32.gmra.mxu0 %v1841
    %v1843 = vpop.f32.mrf.mxu0
    %v1844 = vadd.f32 %v1740, %v1843
    %v1845 = vpop.f32.mrf.mxu0
    %v1846 = vadd.f32 %v1742, %v1845
    %1847 = vmatprep.mubr.f32.mxu0 0.0
    %v1848 = vand.u32 %v143, 4294901760
    %v1849 = vsub.f32 %v143, %v1848
    %v1850 = vand.u32 %v1849, 4294901760
    %1851 = vmatmul.mubr.f32.gmra.mxu0 %v1850
    %v1852 = vpop.f32.mrf.mxu0
    %v1853 = vadd.f32 %v1748, %v1852
    %v1854 = vpop.f32.mrf.mxu0
    %v1855 = vadd.f32 %v1750, %v1854
    %1856 = vdwg.mxu0
    %1857 = vmatprep.subr.mxu0 0.0
    %1858 = vmatpush1.msra.mxu0 0.0
    %1859 = vmatprep.subr.mxu0 0.0
    %1860 = vmatpush1.msra.mxu0 0.0
    %1861 = vmatprep.subr.mxu0 0.0
    %1862 = vmatpush1.msra.mxu0 0.0
    %1863 = vmatprep.subr.mxu0 0.0
    %1864 = vmatpush1.msra.mxu0 0.0
    %1865 = vmatprep.subr.mxu0 0.0
    %1866 = vmatpush1.msra.mxu0 0.0
    %1867 = vmatprep.subr.mxu0 0.0
    %1868 = vmatpush1.msra.mxu0 0.0
    %1869 = vmatprep.subr.mxu0 0.0
    %1870 = vmatpush1.msra.mxu0 0.0
    %1871 = vmatprep.subr.mxu0 0.0
    %1872 = vmatpush1.msra.mxu0 0.0
    %1873 = vmatprep.subr.mxu0 0.0
    %1874 = vmatpush1.msra.mxu0 0.0
    %1875 = vmatprep.subr.mxu0 0.0
    %1876 = vmatpush1.msra.mxu0 0.0
    %1877 = vmatprep.subr.mxu0 0.0
    %1878 = vmatpush1.msra.mxu0 0.0
    %1879 = vmatprep.subr.mxu0 0.0
    %1880 = vmatpush1.msra.mxu0 0.0
    %1881 = vmatprep.subr.mxu0 0.0
    %1882 = vmatpush1.msra.mxu0 0.0
    %1883 = vmatprep.subr.mxu0 0.0
    %1884 = vmatpush1.msra.mxu0 0.0
    %v1885 = vand.u32 %v125, 4294901760
    %v1886 = vsub.f32 %v125, %v1885
    %v1887 = vand.u32 %v1886, 4294901760
    %1888 = vmatprep.subr.mxu0 %v1887
    %v1889 = vand.u32 %v124, 4294901760
    %v1890 = vsub.f32 %v124, %v1889
    %v1891 = vand.u32 %v1890, 4294901760
    %1892 = vmatpush1.msra.mxu0 %v1891
    %v1893 = vand.u32 %v117, 4294901760
    %v1894 = vsub.f32 %v117, %v1893
    %v1895 = vand.u32 %v1894, 4294901760
    %1896 = vmatprep.subr.mxu0 %v1895
    %v1897 = vand.u32 %v116, 4294901760
    %v1898 = vsub.f32 %v116, %v1897
    %v1899 = vand.u32 %v1898, 4294901760
    %1900 = vmatpush1.msra.mxu0 %v1899
    %1901 = vmatprep.subr.mxu0 0.0
    %1902 = vmatpush2.msra.mxu0 0.0
    %1903 = vmatprep.subr.mxu0 0.0
    %1904 = vmatpush2.msra.mxu0 0.0
    %1905 = vmatprep.subr.mxu0 0.0
    %1906 = vmatpush2.msra.mxu0 0.0
    %1907 = vmatprep.subr.mxu0 0.0
    %1908 = vmatpush2.msra.mxu0 0.0
    %1909 = vmatprep.subr.mxu0 0.0
    %1910 = vmatpush2.msra.mxu0 0.0
    %1911 = vmatprep.subr.mxu0 0.0
    %1912 = vmatpush2.msra.mxu0 0.0
    %1913 = vmatprep.subr.mxu0 0.0
    %1914 = vmatpush2.msra.mxu0 0.0
    %1915 = vmatprep.subr.mxu0 0.0
    %1916 = vmatpush2.msra.mxu0 0.0
    %1917 = vmatprep.subr.mxu0 0.0
    %1918 = vmatpush2.msra.mxu0 0.0
    %1919 = vmatprep.subr.mxu0 0.0
    %1920 = vmatpush2.msra.mxu0 0.0
    %1921 = vmatprep.subr.mxu0 0.0
    %1922 = vmatpush2.msra.mxu0 0.0
    %1923 = vmatprep.subr.mxu0 0.0
    %1924 = vmatpush2.msra.mxu0 0.0
    %1925 = vmatprep.subr.mxu0 0.0
    %1926 = vmatpush2.msra.mxu0 0.0
    %1927 = vmatprep.subr.mxu0 0.0
    %1928 = vmatpush2.msra.mxu0 0.0
    %1929 = vmatprep.subr.mxu0 0.0
    %1930 = vmatpush2.msra.mxu0 0.0
    %1931 = vmatprep.subr.mxu0 0.0
    %1932 = vmatpush2.msra.mxu0 0.0
    %1933 = vmatprep.mubr.f32.mxu0 0.0
    %v1934 = vand.u32 %v134, 4294901760
    %1935 = vmatmul.mubr.f32.gmra.mxu0 %v1934
    %v1936 = vpop.f32.mrf.mxu0
    %v1937 = vadd.f32 %v1826, %v1936
    %v1938 = vpop.f32.mrf.mxu0
    %v1939 = vadd.f32 %v1828, %v1938
    %1940 = vmatprep.mubr.f32.mxu0 0.0
    %v1941 = vand.u32 %v137, 4294901760
    %1942 = vmatmul.mubr.f32.gmra.mxu0 %v1941
    %v1943 = vpop.f32.mrf.mxu0
    %v1944 = vadd.f32 %v1835, %v1943
    %v1945 = vpop.f32.mrf.mxu0
    %v1946 = vadd.f32 %v1837, %v1945
    %1947 = vmatprep.mubr.f32.mxu0 0.0
    %v1948 = vand.u32 %v140, 4294901760
    %1949 = vmatmul.mubr.f32.gmra.mxu0 %v1948
    %v1950 = vpop.f32.mrf.mxu0
    %v1951 = vadd.f32 %v1844, %v1950
    %v1952 = vpop.f32.mrf.mxu0
    %v1953 = vadd.f32 %v1846, %v1952
    %1954 = vmatprep.mubr.f32.mxu0 0.0
    %v1955 = vand.u32 %v143, 4294901760
    %1956 = vmatmul.mubr.f32.gmra.mxu0 %v1955
    %v1957 = vpop.f32.mrf.mxu0
    %v1958 = vadd.f32 %v1853, %v1957
    %v1959 = vpop.f32.mrf.mxu0
    %v1960 = vadd.f32 %v1855, %v1959
    %1961 = vdwg.mxu0
    %1962 = vmatprep.subr.mxu0 0.0
    %1963 = vmatpush1.msra.mxu0 0.0
    %1964 = vmatprep.subr.mxu0 0.0
    %1965 = vmatpush1.msra.mxu0 0.0
    %1966 = vmatprep.subr.mxu0 0.0
    %1967 = vmatpush1.msra.mxu0 0.0
    %1968 = vmatprep.subr.mxu0 0.0
    %1969 = vmatpush1.msra.mxu0 0.0
    %1970 = vmatprep.subr.mxu0 0.0
    %1971 = vmatpush1.msra.mxu0 0.0
    %1972 = vmatprep.subr.mxu0 0.0
    %1973 = vmatpush1.msra.mxu0 0.0
    %1974 = vmatprep.subr.mxu0 0.0
    %1975 = vmatpush1.msra.mxu0 0.0
    %1976 = vmatprep.subr.mxu0 0.0
    %1977 = vmatpush1.msra.mxu0 0.0
    %1978 = vmatprep.subr.mxu0 0.0
    %1979 = vmatpush1.msra.mxu0 0.0
    %1980 = vmatprep.subr.mxu0 0.0
    %1981 = vmatpush1.msra.mxu0 0.0
    %1982 = vmatprep.subr.mxu0 0.0
    %1983 = vmatpush1.msra.mxu0 0.0
    %1984 = vmatprep.subr.mxu0 0.0
    %1985 = vmatpush1.msra.mxu0 0.0
    %1986 = vmatprep.subr.mxu0 0.0
    %1987 = vmatpush1.msra.mxu0 0.0
    %1988 = vmatprep.subr.mxu0 0.0
    %1989 = vmatpush1.msra.mxu0 0.0
    %v1990 = vand.u32 %v125, 4294901760
    %1991 = vmatprep.subr.mxu0 %v1990
    %v1992 = vand.u32 %v124, 4294901760
    %1993 = vmatpush1.msra.mxu0 %v1992
    %v1994 = vand.u32 %v117, 4294901760
    %1995 = vmatprep.subr.mxu0 %v1994
    %v1996 = vand.u32 %v116, 4294901760
    %1997 = vmatpush1.msra.mxu0 %v1996
    %1998 = vmatprep.subr.mxu0 0.0
    %1999 = vmatpush2.msra.mxu0 0.0
    %2000 = vmatprep.subr.mxu0 0.0
    %2001 = vmatpush2.msra.mxu0 0.0
    %2002 = vmatprep.subr.mxu0 0.0
    %2003 = vmatpush2.msra.mxu0 0.0
    %2004 = vmatprep.subr.mxu0 0.0
    %2005 = vmatpush2.msra.mxu0 0.0
    %2006 = vmatprep.subr.mxu0 0.0
    %2007 = vmatpush2.msra.mxu0 0.0
    %2008 = vmatprep.subr.mxu0 0.0
    %2009 = vmatpush2.msra.mxu0 0.0
    %2010 = vmatprep.subr.mxu0 0.0
    %2011 = vmatpush2.msra.mxu0 0.0
    %2012 = vmatprep.subr.mxu0 0.0
    %2013 = vmatpush2.msra.mxu0 0.0
    %2014 = vmatprep.subr.mxu0 0.0
    %2015 = vmatpush2.msra.mxu0 0.0
    %2016 = vmatprep.subr.mxu0 0.0
    %2017 = vmatpush2.msra.mxu0 0.0
    %2018 = vmatprep.subr.mxu0 0.0
    %2019 = vmatpush2.msra.mxu0 0.0
    %2020 = vmatprep.subr.mxu0 0.0
    %2021 = vmatpush2.msra.mxu0 0.0
    %2022 = vmatprep.subr.mxu0 0.0
    %2023 = vmatpush2.msra.mxu0 0.0
    %2024 = vmatprep.subr.mxu0 0.0
    %2025 = vmatpush2.msra.mxu0 0.0
    %2026 = vmatprep.subr.mxu0 0.0
    %2027 = vmatpush2.msra.mxu0 0.0
    %2028 = vmatprep.subr.mxu0 0.0
    %2029 = vmatpush2.msra.mxu0 0.0
    %2030 = vmatprep.mubr.f32.mxu0 0.0
    %v2031 = vand.u32 %v134, 4294901760
    %2032 = vmatmul.mubr.f32.gmra.mxu0 %v2031
    %v2033 = vpop.f32.mrf.mxu0
    %v2034 = vadd.f32 %v1937, %v2033
    %v2035 = vpop.f32.mrf.mxu0
    %v2036 = vadd.f32 %v1939, %v2035
    %2037 = vmatprep.mubr.f32.mxu0 0.0
    %v2038 = vand.u32 %v137, 4294901760
    %2039 = vmatmul.mubr.f32.gmra.mxu0 %v2038
    %v2040 = vpop.f32.mrf.mxu0
    %v2041 = vadd.f32 %v1944, %v2040
    %v2042 = vpop.f32.mrf.mxu0
    %v2043 = vadd.f32 %v1946, %v2042
    %2044 = vmatprep.mubr.f32.mxu0 0.0
    %v2045 = vand.u32 %v140, 4294901760
    %2046 = vmatmul.mubr.f32.gmra.mxu0 %v2045
    %v2047 = vpop.f32.mrf.mxu0
    %v2048 = vadd.f32 %v1951, %v2047
    %v2049 = vpop.f32.mrf.mxu0
    %v2050 = vadd.f32 %v1953, %v2049
    %2051 = vmatprep.mubr.f32.mxu0 0.0
    %v2052 = vand.u32 %v143, 4294901760
    %2053 = vmatmul.mubr.f32.gmra.mxu0 %v2052
    %v2054 = vpop.f32.mrf.mxu0
    %v2055 = vadd.f32 %v1958, %v2054
    %v2056 = vpop.f32.mrf.mxu0
    %v2057 = vadd.f32 %v1960, %v2056
    %2058 = vdwg.mxu0
    %2059 = vmatprep.subr.mxu0 0.0
    %2060 = vmatpush1.msra.mxu0 0.0
    %2061 = vmatprep.subr.mxu0 0.0
    %2062 = vmatpush1.msra.mxu0 0.0
    %2063 = vmatprep.subr.mxu0 0.0
    %2064 = vmatpush1.msra.mxu0 0.0
    %2065 = vmatprep.subr.mxu0 0.0
    %2066 = vmatpush1.msra.mxu0 0.0
    %2067 = vmatprep.subr.mxu0 0.0
    %2068 = vmatpush1.msra.mxu0 0.0
    %2069 = vmatprep.subr.mxu0 0.0
    %2070 = vmatpush1.msra.mxu0 0.0
    %2071 = vmatprep.subr.mxu0 0.0
    %2072 = vmatpush1.msra.mxu0 0.0
    %2073 = vmatprep.subr.mxu0 0.0
    %2074 = vmatpush1.msra.mxu0 0.0
    %2075 = vmatprep.subr.mxu0 0.0
    %2076 = vmatpush1.msra.mxu0 0.0
    %2077 = vmatprep.subr.mxu0 0.0
    %2078 = vmatpush1.msra.mxu0 0.0
    %2079 = vmatprep.subr.mxu0 0.0
    %2080 = vmatpush1.msra.mxu0 0.0
    %2081 = vmatprep.subr.mxu0 0.0
    %2082 = vmatpush1.msra.mxu0 0.0
    %2083 = vmatprep.subr.mxu0 0.0
    %2084 = vmatpush1.msra.mxu0 0.0
    %2085 = vmatprep.subr.mxu0 0.0
    %2086 = vmatpush1.msra.mxu0 0.0
    %v2087 = vand.u32 %v127, 4294901760
    %2088 = vmatprep.subr.mxu0 %v2087
    %v2089 = vand.u32 %v126, 4294901760
    %2090 = vmatpush1.msra.mxu0 %v2089
    %v2091 = vand.u32 %v119, 4294901760
    %2092 = vmatprep.subr.mxu0 %v2091
    %v2093 = vand.u32 %v118, 4294901760
    %2094 = vmatpush1.msra.mxu0 %v2093
    %2095 = vmatprep.subr.mxu0 0.0
    %2096 = vmatpush2.msra.mxu0 0.0
    %2097 = vmatprep.subr.mxu0 0.0
    %2098 = vmatpush2.msra.mxu0 0.0
    %2099 = vmatprep.subr.mxu0 0.0
    %2100 = vmatpush2.msra.mxu0 0.0
    %2101 = vmatprep.subr.mxu0 0.0
    %2102 = vmatpush2.msra.mxu0 0.0
    %2103 = vmatprep.subr.mxu0 0.0
    %2104 = vmatpush2.msra.mxu0 0.0
    %2105 = vmatprep.subr.mxu0 0.0
    %2106 = vmatpush2.msra.mxu0 0.0
    %2107 = vmatprep.subr.mxu0 0.0
    %2108 = vmatpush2.msra.mxu0 0.0
    %2109 = vmatprep.subr.mxu0 0.0
    %2110 = vmatpush2.msra.mxu0 0.0
    %2111 = vmatprep.subr.mxu0 0.0
    %2112 = vmatpush2.msra.mxu0 0.0
    %2113 = vmatprep.subr.mxu0 0.0
    %2114 = vmatpush2.msra.mxu0 0.0
    %2115 = vmatprep.subr.mxu0 0.0
    %2116 = vmatpush2.msra.mxu0 0.0
    %2117 = vmatprep.subr.mxu0 0.0
    %2118 = vmatpush2.msra.mxu0 0.0
    %2119 = vmatprep.subr.mxu0 0.0
    %2120 = vmatpush2.msra.mxu0 0.0
    %2121 = vmatprep.subr.mxu0 0.0
    %2122 = vmatpush2.msra.mxu0 0.0
    %2123 = vmatprep.subr.mxu0 0.0
    %2124 = vmatpush2.msra.mxu0 0.0
    %2125 = vmatprep.subr.mxu0 0.0
    %2126 = vmatpush2.msra.mxu0 0.0
    %2127 = vmatprep.mubr.f32.mxu0 0.0
    %v2128 = vand.u32 %v134, 4294901760
    %v2129 = vsub.f32 %v134, %v2128
    %v2130 = vand.u32 %v2129, 4294901760
    %v2131 = vsub.f32 %v2129, %v2130
    %v2132 = vand.u32 %v2131, 4294901760
    %2133 = vmatmul.mubr.f32.gmra.mxu0 %v2132
    %v2134 = vpop.f32.mrf.mxu0
    %v2135 = vadd.f32 0.0, %v2134
    %v2136 = vpop.f32.mrf.mxu0
    %v2137 = vadd.f32 0.0, %v2136
    %2138 = vmatprep.mubr.f32.mxu0 0.0
    %v2139 = vand.u32 %v137, 4294901760
    %v2140 = vsub.f32 %v137, %v2139
    %v2141 = vand.u32 %v2140, 4294901760
    %v2142 = vsub.f32 %v2140, %v2141
    %v2143 = vand.u32 %v2142, 4294901760
    %2144 = vmatmul.mubr.f32.gmra.mxu0 %v2143
    %v2145 = vpop.f32.mrf.mxu0
    %v2146 = vadd.f32 0.0, %v2145
    %v2147 = vpop.f32.mrf.mxu0
    %v2148 = vadd.f32 0.0, %v2147
    %2149 = vmatprep.mubr.f32.mxu0 0.0
    %v2150 = vand.u32 %v140, 4294901760
    %v2151 = vsub.f32 %v140, %v2150
    %v2152 = vand.u32 %v2151, 4294901760
    %v2153 = vsub.f32 %v2151, %v2152
    %v2154 = vand.u32 %v2153, 4294901760
    %2155 = vmatmul.mubr.f32.gmra.mxu0 %v2154
    %v2156 = vpop.f32.mrf.mxu0
    %v2157 = vadd.f32 0.0, %v2156
    %v2158 = vpop.f32.mrf.mxu0
    %v2159 = vadd.f32 0.0, %v2158
    %2160 = vmatprep.mubr.f32.mxu0 0.0
    %v2161 = vand.u32 %v143, 4294901760
    %v2162 = vsub.f32 %v143, %v2161
    %v2163 = vand.u32 %v2162, 4294901760
    %v2164 = vsub.f32 %v2162, %v2163
    %v2165 = vand.u32 %v2164, 4294901760
    %2166 = vmatmul.mubr.f32.gmra.mxu0 %v2165
    %v2167 = vpop.f32.mrf.mxu0
    %v2168 = vadd.f32 0.0, %v2167
    %v2169 = vpop.f32.mrf.mxu0
    %v2170 = vadd.f32 0.0, %v2169
    %2171 = vdwg.mxu0
    %2172 = vmatprep.subr.mxu0 0.0
    %2173 = vmatpush1.msra.mxu0 0.0
    %2174 = vmatprep.subr.mxu0 0.0
    %2175 = vmatpush1.msra.mxu0 0.0
    %2176 = vmatprep.subr.mxu0 0.0
    %2177 = vmatpush1.msra.mxu0 0.0
    %2178 = vmatprep.subr.mxu0 0.0
    %2179 = vmatpush1.msra.mxu0 0.0
    %2180 = vmatprep.subr.mxu0 0.0
    %2181 = vmatpush1.msra.mxu0 0.0
    %2182 = vmatprep.subr.mxu0 0.0
    %2183 = vmatpush1.msra.mxu0 0.0
    %2184 = vmatprep.subr.mxu0 0.0
    %2185 = vmatpush1.msra.mxu0 0.0
    %2186 = vmatprep.subr.mxu0 0.0
    %2187 = vmatpush1.msra.mxu0 0.0
    %2188 = vmatprep.subr.mxu0 0.0
    %2189 = vmatpush1.msra.mxu0 0.0
    %2190 = vmatprep.subr.mxu0 0.0
    %2191 = vmatpush1.msra.mxu0 0.0
    %2192 = vmatprep.subr.mxu0 0.0
    %2193 = vmatpush1.msra.mxu0 0.0
    %2194 = vmatprep.subr.mxu0 0.0
    %2195 = vmatpush1.msra.mxu0 0.0
    %2196 = vmatprep.subr.mxu0 0.0
    %2197 = vmatpush1.msra.mxu0 0.0
    %2198 = vmatprep.subr.mxu0 0.0
    %2199 = vmatpush1.msra.mxu0 0.0
    %v2200 = vand.u32 %v127, 4294901760
    %v2201 = vsub.f32 %v127, %v2200
    %v2202 = vand.u32 %v2201, 4294901760
    %v2203 = vsub.f32 %v2201, %v2202
    %v2204 = vand.u32 %v2203, 4294901760
    %2205 = vmatprep.subr.mxu0 %v2204
    %v2206 = vand.u32 %v126, 4294901760
    %v2207 = vsub.f32 %v126, %v2206
    %v2208 = vand.u32 %v2207, 4294901760
    %v2209 = vsub.f32 %v2207, %v2208
    %v2210 = vand.u32 %v2209, 4294901760
    %2211 = vmatpush1.msra.mxu0 %v2210
    %v2212 = vand.u32 %v119, 4294901760
    %v2213 = vsub.f32 %v119, %v2212
    %v2214 = vand.u32 %v2213, 4294901760
    %v2215 = vsub.f32 %v2213, %v2214
    %v2216 = vand.u32 %v2215, 4294901760
    %2217 = vmatprep.subr.mxu0 %v2216
    %v2218 = vand.u32 %v118, 4294901760
    %v2219 = vsub.f32 %v118, %v2218
    %v2220 = vand.u32 %v2219, 4294901760
    %v2221 = vsub.f32 %v2219, %v2220
    %v2222 = vand.u32 %v2221, 4294901760
    %2223 = vmatpush1.msra.mxu0 %v2222
    %2224 = vmatprep.subr.mxu0 0.0
    %2225 = vmatpush2.msra.mxu0 0.0
    %2226 = vmatprep.subr.mxu0 0.0
    %2227 = vmatpush2.msra.mxu0 0.0
    %2228 = vmatprep.subr.mxu0 0.0
    %2229 = vmatpush2.msra.mxu0 0.0
    %2230 = vmatprep.subr.mxu0 0.0
    %2231 = vmatpush2.msra.mxu0 0.0
    %2232 = vmatprep.subr.mxu0 0.0
    %2233 = vmatpush2.msra.mxu0 0.0
    %2234 = vmatprep.subr.mxu0 0.0
    %2235 = vmatpush2.msra.mxu0 0.0
    %2236 = vmatprep.subr.mxu0 0.0
    %2237 = vmatpush2.msra.mxu0 0.0
    %2238 = vmatprep.subr.mxu0 0.0
    %2239 = vmatpush2.msra.mxu0 0.0
    %2240 = vmatprep.subr.mxu0 0.0
    %2241 = vmatpush2.msra.mxu0 0.0
    %2242 = vmatprep.subr.mxu0 0.0
    %2243 = vmatpush2.msra.mxu0 0.0
    %2244 = vmatprep.subr.mxu0 0.0
    %2245 = vmatpush2.msra.mxu0 0.0
    %2246 = vmatprep.subr.mxu0 0.0
    %2247 = vmatpush2.msra.mxu0 0.0
    %2248 = vmatprep.subr.mxu0 0.0
    %2249 = vmatpush2.msra.mxu0 0.0
    %2250 = vmatprep.subr.mxu0 0.0
    %2251 = vmatpush2.msra.mxu0 0.0
    %2252 = vmatprep.subr.mxu0 0.0
    %2253 = vmatpush2.msra.mxu0 0.0
    %2254 = vmatprep.subr.mxu0 0.0
    %2255 = vmatpush2.msra.mxu0 0.0
    %2256 = vmatprep.mubr.f32.mxu0 0.0
    %v2257 = vand.u32 %v134, 4294901760
    %2258 = vmatmul.mubr.f32.gmra.mxu0 %v2257
    %v2259 = vpop.f32.mrf.mxu0
    %v2260 = vadd.f32 %v2135, %v2259
    %v2261 = vpop.f32.mrf.mxu0
    %v2262 = vadd.f32 %v2137, %v2261
    %2263 = vmatprep.mubr.f32.mxu0 0.0
    %v2264 = vand.u32 %v137, 4294901760
    %2265 = vmatmul.mubr.f32.gmra.mxu0 %v2264
    %v2266 = vpop.f32.mrf.mxu0
    %v2267 = vadd.f32 %v2146, %v2266
    %v2268 = vpop.f32.mrf.mxu0
    %v2269 = vadd.f32 %v2148, %v2268
    %2270 = vmatprep.mubr.f32.mxu0 0.0
    %v2271 = vand.u32 %v140, 4294901760
    %2272 = vmatmul.mubr.f32.gmra.mxu0 %v2271
    %v2273 = vpop.f32.mrf.mxu0
    %v2274 = vadd.f32 %v2157, %v2273
    %v2275 = vpop.f32.mrf.mxu0
    %v2276 = vadd.f32 %v2159, %v2275
    %2277 = vmatprep.mubr.f32.mxu0 0.0
    %v2278 = vand.u32 %v143, 4294901760
    %2279 = vmatmul.mubr.f32.gmra.mxu0 %v2278
    %v2280 = vpop.f32.mrf.mxu0
    %v2281 = vadd.f32 %v2168, %v2280
    %v2282 = vpop.f32.mrf.mxu0
    %v2283 = vadd.f32 %v2170, %v2282
    %2284 = vdwg.mxu0
    %2285 = vmatprep.subr.mxu0 0.0
    %2286 = vmatpush1.msra.mxu0 0.0
    %2287 = vmatprep.subr.mxu0 0.0
    %2288 = vmatpush1.msra.mxu0 0.0
    %2289 = vmatprep.subr.mxu0 0.0
    %2290 = vmatpush1.msra.mxu0 0.0
    %2291 = vmatprep.subr.mxu0 0.0
    %2292 = vmatpush1.msra.mxu0 0.0
    %2293 = vmatprep.subr.mxu0 0.0
    %2294 = vmatpush1.msra.mxu0 0.0
    %2295 = vmatprep.subr.mxu0 0.0
    %2296 = vmatpush1.msra.mxu0 0.0
    %2297 = vmatprep.subr.mxu0 0.0
    %2298 = vmatpush1.msra.mxu0 0.0
    %2299 = vmatprep.subr.mxu0 0.0
    %2300 = vmatpush1.msra.mxu0 0.0
    %2301 = vmatprep.subr.mxu0 0.0
    %2302 = vmatpush1.msra.mxu0 0.0
    %2303 = vmatprep.subr.mxu0 0.0
    %2304 = vmatpush1.msra.mxu0 0.0
    %2305 = vmatprep.subr.mxu0 0.0
    %2306 = vmatpush1.msra.mxu0 0.0
    %2307 = vmatprep.subr.mxu0 0.0
    %2308 = vmatpush1.msra.mxu0 0.0
    %2309 = vmatprep.subr.mxu0 0.0
    %2310 = vmatpush1.msra.mxu0 0.0
    %2311 = vmatprep.subr.mxu0 0.0
    %2312 = vmatpush1.msra.mxu0 0.0
    %v2313 = vand.u32 %v127, 4294901760
    %v2314 = vsub.f32 %v127, %v2313
    %2315 = vmatprep.subr.mxu0 %v2314
    %v2316 = vand.u32 %v126, 4294901760
    %v2317 = vsub.f32 %v126, %v2316
    %2318 = vmatpush1.msra.mxu0 %v2317
    %v2319 = vand.u32 %v119, 4294901760
    %v2320 = vsub.f32 %v119, %v2319
    %2321 = vmatprep.subr.mxu0 %v2320
    %v2322 = vand.u32 %v118, 4294901760
    %v2323 = vsub.f32 %v118, %v2322
    %2324 = vmatpush1.msra.mxu0 %v2323
    %2325 = vmatprep.subr.mxu0 0.0
    %2326 = vmatpush2.msra.mxu0 0.0
    %2327 = vmatprep.subr.mxu0 0.0
    %2328 = vmatpush2.msra.mxu0 0.0
    %2329 = vmatprep.subr.mxu0 0.0
    %2330 = vmatpush2.msra.mxu0 0.0
    %2331 = vmatprep.subr.mxu0 0.0
    %2332 = vmatpush2.msra.mxu0 0.0
    %2333 = vmatprep.subr.mxu0 0.0
    %2334 = vmatpush2.msra.mxu0 0.0
    %2335 = vmatprep.subr.mxu0 0.0
    %2336 = vmatpush2.msra.mxu0 0.0
    %2337 = vmatprep.subr.mxu0 0.0
    %2338 = vmatpush2.msra.mxu0 0.0
    %2339 = vmatprep.subr.mxu0 0.0
    %2340 = vmatpush2.msra.mxu0 0.0
    %2341 = vmatprep.subr.mxu0 0.0
    %2342 = vmatpush2.msra.mxu0 0.0
    %2343 = vmatprep.subr.mxu0 0.0
    %2344 = vmatpush2.msra.mxu0 0.0
    %2345 = vmatprep.subr.mxu0 0.0
    %2346 = vmatpush2.msra.mxu0 0.0
    %2347 = vmatprep.subr.mxu0 0.0
    %2348 = vmatpush2.msra.mxu0 0.0
    %2349 = vmatprep.subr.mxu0 0.0
    %2350 = vmatpush2.msra.mxu0 0.0
    %2351 = vmatprep.subr.mxu0 0.0
    %2352 = vmatpush2.msra.mxu0 0.0
    %2353 = vmatprep.subr.mxu0 0.0
    %2354 = vmatpush2.msra.mxu0 0.0
    %2355 = vmatprep.subr.mxu0 0.0
    %2356 = vmatpush2.msra.mxu0 0.0
    %2357 = vmatprep.mubr.f32.mxu0 0.0
    %v2358 = vand.u32 %v134, 4294901760
    %v2359 = vsub.f32 %v134, %v2358
    %2360 = vmatmul.mubr.f32.gmra.mxu0 %v2359
    %v2361 = vpop.f32.mrf.mxu0
    %v2362 = vadd.f32 %v2260, %v2361
    %v2363 = vpop.f32.mrf.mxu0
    %v2364 = vadd.f32 %v2262, %v2363
    %2365 = vmatprep.mubr.f32.mxu0 0.0
    %v2366 = vand.u32 %v137, 4294901760
    %v2367 = vsub.f32 %v137, %v2366
    %2368 = vmatmul.mubr.f32.gmra.mxu0 %v2367
    %v2369 = vpop.f32.mrf.mxu0
    %v2370 = vadd.f32 %v2267, %v2369
    %v2371 = vpop.f32.mrf.mxu0
    %v2372 = vadd.f32 %v2269, %v2371
    %2373 = vmatprep.mubr.f32.mxu0 0.0
    %v2374 = vand.u32 %v140, 4294901760
    %v2375 = vsub.f32 %v140, %v2374
    %2376 = vmatmul.mubr.f32.gmra.mxu0 %v2375
    %v2377 = vpop.f32.mrf.mxu0
    %v2378 = vadd.f32 %v2274, %v2377
    %v2379 = vpop.f32.mrf.mxu0
    %v2380 = vadd.f32 %v2276, %v2379
    %2381 = vmatprep.mubr.f32.mxu0 0.0
    %v2382 = vand.u32 %v143, 4294901760
    %v2383 = vsub.f32 %v143, %v2382
    %2384 = vmatmul.mubr.f32.gmra.mxu0 %v2383
    %v2385 = vpop.f32.mrf.mxu0
    %v2386 = vadd.f32 %v2281, %v2385
    %v2387 = vpop.f32.mrf.mxu0
    %v2388 = vadd.f32 %v2283, %v2387
    %2389 = vdwg.mxu0
    %2390 = vmatprep.subr.mxu0 0.0
    %2391 = vmatpush1.msra.mxu0 0.0
    %2392 = vmatprep.subr.mxu0 0.0
    %2393 = vmatpush1.msra.mxu0 0.0
    %2394 = vmatprep.subr.mxu0 0.0
    %2395 = vmatpush1.msra.mxu0 0.0
    %2396 = vmatprep.subr.mxu0 0.0
    %2397 = vmatpush1.msra.mxu0 0.0
    %2398 = vmatprep.subr.mxu0 0.0
    %2399 = vmatpush1.msra.mxu0 0.0
    %2400 = vmatprep.subr.mxu0 0.0
    %2401 = vmatpush1.msra.mxu0 0.0
    %2402 = vmatprep.subr.mxu0 0.0
    %2403 = vmatpush1.msra.mxu0 0.0
    %2404 = vmatprep.subr.mxu0 0.0
    %2405 = vmatpush1.msra.mxu0 0.0
    %2406 = vmatprep.subr.mxu0 0.0
    %2407 = vmatpush1.msra.mxu0 0.0
    %2408 = vmatprep.subr.mxu0 0.0
    %2409 = vmatpush1.msra.mxu0 0.0
    %2410 = vmatprep.subr.mxu0 0.0
    %2411 = vmatpush1.msra.mxu0 0.0
    %2412 = vmatprep.subr.mxu0 0.0
    %2413 = vmatpush1.msra.mxu0 0.0
    %2414 = vmatprep.subr.mxu0 0.0
    %2415 = vmatpush1.msra.mxu0 0.0
    %2416 = vmatprep.subr.mxu0 0.0
    %2417 = vmatpush1.msra.mxu0 0.0
    %v2418 = vand.u32 %v127, 4294901760
    %2419 = vmatprep.subr.mxu0 %v2418
    %v2420 = vand.u32 %v126, 4294901760
    %2421 = vmatpush1.msra.mxu0 %v2420
    %v2422 = vand.u32 %v119, 4294901760
    %2423 = vmatprep.subr.mxu0 %v2422
    %v2424 = vand.u32 %v118, 4294901760
    %2425 = vmatpush1.msra.mxu0 %v2424
    %2426 = vmatprep.subr.mxu0 0.0
    %2427 = vmatpush2.msra.mxu0 0.0
    %2428 = vmatprep.subr.mxu0 0.0
    %2429 = vmatpush2.msra.mxu0 0.0
    %2430 = vmatprep.subr.mxu0 0.0
    %2431 = vmatpush2.msra.mxu0 0.0
    %2432 = vmatprep.subr.mxu0 0.0
    %2433 = vmatpush2.msra.mxu0 0.0
    %2434 = vmatprep.subr.mxu0 0.0
    %2435 = vmatpush2.msra.mxu0 0.0
    %2436 = vmatprep.subr.mxu0 0.0
    %2437 = vmatpush2.msra.mxu0 0.0
    %2438 = vmatprep.subr.mxu0 0.0
    %2439 = vmatpush2.msra.mxu0 0.0
    %2440 = vmatprep.subr.mxu0 0.0
    %2441 = vmatpush2.msra.mxu0 0.0
    %2442 = vmatprep.subr.mxu0 0.0
    %2443 = vmatpush2.msra.mxu0 0.0
    %2444 = vmatprep.subr.mxu0 0.0
    %2445 = vmatpush2.msra.mxu0 0.0
    %2446 = vmatprep.subr.mxu0 0.0
    %2447 = vmatpush2.msra.mxu0 0.0
    %2448 = vmatprep.subr.mxu0 0.0
    %2449 = vmatpush2.msra.mxu0 0.0
    %2450 = vmatprep.subr.mxu0 0.0
    %2451 = vmatpush2.msra.mxu0 0.0
    %2452 = vmatprep.subr.mxu0 0.0
    %2453 = vmatpush2.msra.mxu0 0.0
    %2454 = vmatprep.subr.mxu0 0.0
    %2455 = vmatpush2.msra.mxu0 0.0
    %2456 = vmatprep.subr.mxu0 0.0
    %2457 = vmatpush2.msra.mxu0 0.0
    %2458 = vmatprep.mubr.f32.mxu0 0.0
    %v2459 = vand.u32 %v134, 4294901760
    %v2460 = vsub.f32 %v134, %v2459
    %v2461 = vand.u32 %v2460, 4294901760
    %2462 = vmatmul.mubr.f32.gmra.mxu0 %v2461
    %v2463 = vpop.f32.mrf.mxu0
    %v2464 = vadd.f32 %v2362, %v2463
    %v2465 = vpop.f32.mrf.mxu0
    %v2466 = vadd.f32 %v2364, %v2465
    %2467 = vmatprep.mubr.f32.mxu0 0.0
    %v2468 = vand.u32 %v137, 4294901760
    %v2469 = vsub.f32 %v137, %v2468
    %v2470 = vand.u32 %v2469, 4294901760
    %2471 = vmatmul.mubr.f32.gmra.mxu0 %v2470
    %v2472 = vpop.f32.mrf.mxu0
    %v2473 = vadd.f32 %v2370, %v2472
    %v2474 = vpop.f32.mrf.mxu0
    %v2475 = vadd.f32 %v2372, %v2474
    %2476 = vmatprep.mubr.f32.mxu0 0.0
    %v2477 = vand.u32 %v140, 4294901760
    %v2478 = vsub.f32 %v140, %v2477
    %v2479 = vand.u32 %v2478, 4294901760
    %2480 = vmatmul.mubr.f32.gmra.mxu0 %v2479
    %v2481 = vpop.f32.mrf.mxu0
    %v2482 = vadd.f32 %v2378, %v2481
    %v2483 = vpop.f32.mrf.mxu0
    %v2484 = vadd.f32 %v2380, %v2483
    %2485 = vmatprep.mubr.f32.mxu0 0.0
    %v2486 = vand.u32 %v143, 4294901760
    %v2487 = vsub.f32 %v143, %v2486
    %v2488 = vand.u32 %v2487, 4294901760
    %2489 = vmatmul.mubr.f32.gmra.mxu0 %v2488
    %v2490 = vpop.f32.mrf.mxu0
    %v2491 = vadd.f32 %v2386, %v2490
    %v2492 = vpop.f32.mrf.mxu0
    %v2493 = vadd.f32 %v2388, %v2492
    %2494 = vdwg.mxu0
    %2495 = vmatprep.subr.mxu0 0.0
    %2496 = vmatpush1.msra.mxu0 0.0
    %2497 = vmatprep.subr.mxu0 0.0
    %2498 = vmatpush1.msra.mxu0 0.0
    %2499 = vmatprep.subr.mxu0 0.0
    %2500 = vmatpush1.msra.mxu0 0.0
    %2501 = vmatprep.subr.mxu0 0.0
    %2502 = vmatpush1.msra.mxu0 0.0
    %2503 = vmatprep.subr.mxu0 0.0
    %2504 = vmatpush1.msra.mxu0 0.0
    %2505 = vmatprep.subr.mxu0 0.0
    %2506 = vmatpush1.msra.mxu0 0.0
    %2507 = vmatprep.subr.mxu0 0.0
    %2508 = vmatpush1.msra.mxu0 0.0
    %2509 = vmatprep.subr.mxu0 0.0
    %2510 = vmatpush1.msra.mxu0 0.0
    %2511 = vmatprep.subr.mxu0 0.0
    %2512 = vmatpush1.msra.mxu0 0.0
    %2513 = vmatprep.subr.mxu0 0.0
    %2514 = vmatpush1.msra.mxu0 0.0
    %2515 = vmatprep.subr.mxu0 0.0
    %2516 = vmatpush1.msra.mxu0 0.0
    %2517 = vmatprep.subr.mxu0 0.0
    %2518 = vmatpush1.msra.mxu0 0.0
    %2519 = vmatprep.subr.mxu0 0.0
    %2520 = vmatpush1.msra.mxu0 0.0
    %2521 = vmatprep.subr.mxu0 0.0
    %2522 = vmatpush1.msra.mxu0 0.0
    %v2523 = vand.u32 %v127, 4294901760
    %v2524 = vsub.f32 %v127, %v2523
    %v2525 = vand.u32 %v2524, 4294901760
    %2526 = vmatprep.subr.mxu0 %v2525
    %v2527 = vand.u32 %v126, 4294901760
    %v2528 = vsub.f32 %v126, %v2527
    %v2529 = vand.u32 %v2528, 4294901760
    %2530 = vmatpush1.msra.mxu0 %v2529
    %v2531 = vand.u32 %v119, 4294901760
    %v2532 = vsub.f32 %v119, %v2531
    %v2533 = vand.u32 %v2532, 4294901760
    %2534 = vmatprep.subr.mxu0 %v2533
    %v2535 = vand.u32 %v118, 4294901760
    %v2536 = vsub.f32 %v118, %v2535
    %v2537 = vand.u32 %v2536, 4294901760
    %2538 = vmatpush1.msra.mxu0 %v2537
    %2539 = vmatprep.subr.mxu0 0.0
    %2540 = vmatpush2.msra.mxu0 0.0
    %2541 = vmatprep.subr.mxu0 0.0
    %2542 = vmatpush2.msra.mxu0 0.0
    %2543 = vmatprep.subr.mxu0 0.0
    %2544 = vmatpush2.msra.mxu0 0.0
    %2545 = vmatprep.subr.mxu0 0.0
    %2546 = vmatpush2.msra.mxu0 0.0
    %2547 = vmatprep.subr.mxu0 0.0
    %2548 = vmatpush2.msra.mxu0 0.0
    %2549 = vmatprep.subr.mxu0 0.0
    %2550 = vmatpush2.msra.mxu0 0.0
    %2551 = vmatprep.subr.mxu0 0.0
    %2552 = vmatpush2.msra.mxu0 0.0
    %2553 = vmatprep.subr.mxu0 0.0
    %2554 = vmatpush2.msra.mxu0 0.0
    %2555 = vmatprep.subr.mxu0 0.0
    %2556 = vmatpush2.msra.mxu0 0.0
    %2557 = vmatprep.subr.mxu0 0.0
    %2558 = vmatpush2.msra.mxu0 0.0
    %2559 = vmatprep.subr.mxu0 0.0
    %2560 = vmatpush2.msra.mxu0 0.0
    %2561 = vmatprep.subr.mxu0 0.0
    %2562 = vmatpush2.msra.mxu0 0.0
    %2563 = vmatprep.subr.mxu0 0.0
    %2564 = vmatpush2.msra.mxu0 0.0
    %2565 = vmatprep.subr.mxu0 0.0
    %2566 = vmatpush2.msra.mxu0 0.0
    %2567 = vmatprep.subr.mxu0 0.0
    %2568 = vmatpush2.msra.mxu0 0.0
    %2569 = vmatprep.subr.mxu0 0.0
    %2570 = vmatpush2.msra.mxu0 0.0
    %2571 = vmatprep.mubr.f32.mxu0 0.0
    %v2572 = vand.u32 %v134, 4294901760
    %2573 = vmatmul.mubr.f32.gmra.mxu0 %v2572
    %v2574 = vpop.f32.mrf.mxu0
    %v2575 = vadd.f32 %v2464, %v2574
    %v2576 = vpop.f32.mrf.mxu0
    %v2577 = vadd.f32 %v2466, %v2576
    %2578 = vmatprep.mubr.f32.mxu0 0.0
    %v2579 = vand.u32 %v137, 4294901760
    %2580 = vmatmul.mubr.f32.gmra.mxu0 %v2579
    %v2581 = vpop.f32.mrf.mxu0
    %v2582 = vadd.f32 %v2473, %v2581
    %v2583 = vpop.f32.mrf.mxu0
    %v2584 = vadd.f32 %v2475, %v2583
    %2585 = vmatprep.mubr.f32.mxu0 0.0
    %v2586 = vand.u32 %v140, 4294901760
    %2587 = vmatmul.mubr.f32.gmra.mxu0 %v2586
    %v2588 = vpop.f32.mrf.mxu0
    %v2589 = vadd.f32 %v2482, %v2588
    %v2590 = vpop.f32.mrf.mxu0
    %v2591 = vadd.f32 %v2484, %v2590
    %2592 = vmatprep.mubr.f32.mxu0 0.0
    %v2593 = vand.u32 %v143, 4294901760
    %2594 = vmatmul.mubr.f32.gmra.mxu0 %v2593
    %v2595 = vpop.f32.mrf.mxu0
    %v2596 = vadd.f32 %v2491, %v2595
    %v2597 = vpop.f32.mrf.mxu0
    %v2598 = vadd.f32 %v2493, %v2597
    %2599 = vdwg.mxu0
    %2600 = vmatprep.subr.mxu0 0.0
    %2601 = vmatpush1.msra.mxu0 0.0
    %2602 = vmatprep.subr.mxu0 0.0
    %2603 = vmatpush1.msra.mxu0 0.0
    %2604 = vmatprep.subr.mxu0 0.0
    %2605 = vmatpush1.msra.mxu0 0.0
    %2606 = vmatprep.subr.mxu0 0.0
    %2607 = vmatpush1.msra.mxu0 0.0
    %2608 = vmatprep.subr.mxu0 0.0
    %2609 = vmatpush1.msra.mxu0 0.0
    %2610 = vmatprep.subr.mxu0 0.0
    %2611 = vmatpush1.msra.mxu0 0.0
    %2612 = vmatprep.subr.mxu0 0.0
    %2613 = vmatpush1.msra.mxu0 0.0
    %2614 = vmatprep.subr.mxu0 0.0
    %2615 = vmatpush1.msra.mxu0 0.0
    %2616 = vmatprep.subr.mxu0 0.0
    %2617 = vmatpush1.msra.mxu0 0.0
    %2618 = vmatprep.subr.mxu0 0.0
    %2619 = vmatpush1.msra.mxu0 0.0
    %2620 = vmatprep.subr.mxu0 0.0
    %2621 = vmatpush1.msra.mxu0 0.0
    %2622 = vmatprep.subr.mxu0 0.0
    %2623 = vmatpush1.msra.mxu0 0.0
    %2624 = vmatprep.subr.mxu0 0.0
    %2625 = vmatpush1.msra.mxu0 0.0
    %2626 = vmatprep.subr.mxu0 0.0
    %2627 = vmatpush1.msra.mxu0 0.0
    %v2628 = vand.u32 %v127, 4294901760
    %2629 = vmatprep.subr.mxu0 %v2628
    %v2630 = vand.u32 %v126, 4294901760
    %2631 = vmatpush1.msra.mxu0 %v2630
    %v2632 = vand.u32 %v119, 4294901760
    %2633 = vmatprep.subr.mxu0 %v2632
    %v2634 = vand.u32 %v118, 4294901760
    %2635 = vmatpush1.msra.mxu0 %v2634
    %2636 = vmatprep.subr.mxu0 0.0
    %2637 = vmatpush2.msra.mxu0 0.0
    %2638 = vmatprep.subr.mxu0 0.0
    %2639 = vmatpush2.msra.mxu0 0.0
    %2640 = vmatprep.subr.mxu0 0.0
    %2641 = vmatpush2.msra.mxu0 0.0
    %2642 = vmatprep.subr.mxu0 0.0
    %2643 = vmatpush2.msra.mxu0 0.0
    %2644 = vmatprep.subr.mxu0 0.0
    %2645 = vmatpush2.msra.mxu0 0.0
    %2646 = vmatprep.subr.mxu0 0.0
    %2647 = vmatpush2.msra.mxu0 0.0
    %2648 = vmatprep.subr.mxu0 0.0
    %2649 = vmatpush2.msra.mxu0 0.0
    %2650 = vmatprep.subr.mxu0 0.0
    %2651 = vmatpush2.msra.mxu0 0.0
    %2652 = vmatprep.subr.mxu0 0.0
    %2653 = vmatpush2.msra.mxu0 0.0
    %2654 = vmatprep.subr.mxu0 0.0
    %2655 = vmatpush2.msra.mxu0 0.0
    %2656 = vmatprep.subr.mxu0 0.0
    %2657 = vmatpush2.msra.mxu0 0.0
    %2658 = vmatprep.subr.mxu0 0.0
    %2659 = vmatpush2.msra.mxu0 0.0
    %2660 = vmatprep.subr.mxu0 0.0
    %2661 = vmatpush2.msra.mxu0 0.0
    %2662 = vmatprep.subr.mxu0 0.0
    %2663 = vmatpush2.msra.mxu0 0.0
    %2664 = vmatprep.subr.mxu0 0.0
    %2665 = vmatpush2.msra.mxu0 0.0
    %2666 = vmatprep.subr.mxu0 0.0
    %2667 = vmatpush2.msra.mxu0 0.0
    %2668 = vmatprep.mubr.f32.mxu0 0.0
    %v2669 = vand.u32 %v134, 4294901760
    %2670 = vmatmul.mubr.f32.gmra.mxu0 %v2669
    %v2671 = vpop.f32.mrf.mxu0
    %v2672 = vadd.f32 %v2575, %v2671
    %v2673 = vpop.f32.mrf.mxu0
    %v2674 = vadd.f32 %v2577, %v2673
    %2675 = vmatprep.mubr.f32.mxu0 0.0
    %v2676 = vand.u32 %v137, 4294901760
    %2677 = vmatmul.mubr.f32.gmra.mxu0 %v2676
    %v2678 = vpop.f32.mrf.mxu0
    %v2679 = vadd.f32 %v2582, %v2678
    %v2680 = vpop.f32.mrf.mxu0
    %v2681 = vadd.f32 %v2584, %v2680
    %2682 = vmatprep.mubr.f32.mxu0 0.0
    %v2683 = vand.u32 %v140, 4294901760
    %2684 = vmatmul.mubr.f32.gmra.mxu0 %v2683
    %v2685 = vpop.f32.mrf.mxu0
    %v2686 = vadd.f32 %v2589, %v2685
    %v2687 = vpop.f32.mrf.mxu0
    %v2688 = vadd.f32 %v2591, %v2687
    %2689 = vmatprep.mubr.f32.mxu0 0.0
    %v2690 = vand.u32 %v143, 4294901760
    %2691 = vmatmul.mubr.f32.gmra.mxu0 %v2690
    %v2692 = vpop.f32.mrf.mxu0
    %v2693 = vadd.f32 %v2596, %v2692
    %v2694 = vpop.f32.mrf.mxu0
    %v2695 = vadd.f32 %v2598, %v2694
    %2696 = vdwg.mxu0
    %2697 = vst [vmem:[#allocation2] sm:$0xff] %v758
    %2698 = vst [vmem:[#allocation2 + $0x8] sm:$0xff] %v760
    %2699 = vst [vmem:[#allocation2 + $0x10] sm:$0xff] %v1396
    %2700 = vst [vmem:[#allocation2 + $0x18] sm:$0xff] %v1398
    %2701 = vst [vmem:[#allocation2 + $0x20] sm:$0xff] %v765
    %2702 = vst [vmem:[#allocation2 + $0x28] sm:$0xff] %v767
    %2703 = vst [vmem:[#allocation2 + $0x30] sm:$0xff] %v1403
    %2704 = vst [vmem:[#allocation2 + $0x38] sm:$0xff] %v1405
    %2705 = vst [vmem:[#allocation2 + $0x40] sm:$0xff] %v772
    %2706 = vst [vmem:[#allocation2 + $0x48] sm:$0xff] %v774
    %2707 = vst [vmem:[#allocation2 + $0x50] sm:$0xff] %v1410
    %2708 = vst [vmem:[#allocation2 + $0x58] sm:$0xff] %v1412
    %2709 = vst [vmem:[#allocation2 + $0x60] sm:$0xff] %v779
    %2710 = vst [vmem:[#allocation2 + $0x68] sm:$0xff] %v781
    %2711 = vst [vmem:[#allocation2 + $0x70] sm:$0xff] %v1417
    %2712 = vst [vmem:[#allocation2 + $0x78] sm:$0xff] %v1419
    %s2713 = scalar_lea.vmem [#allocation2], 128
    %2714 = vst [vmem:[%s2713] sm:$0xff] %v2034
    %2715 = vst [vmem:[%s2713 + $0x8] sm:$0xff] %v2036
    %2716 = vst [vmem:[%s2713 + $0x10] sm:$0xff] %v2672
    %2717 = vst [vmem:[%s2713 + $0x18] sm:$0xff] %v2674
    %2718 = vst [vmem:[%s2713 + $0x20] sm:$0xff] %v2041
    %2719 = vst [vmem:[%s2713 + $0x28] sm:$0xff] %v2043
    %2720 = vst [vmem:[%s2713 + $0x30] sm:$0xff] %v2679
    %2721 = vst [vmem:[%s2713 + $0x38] sm:$0xff] %v2681
    %2722 = vst [vmem:[%s2713 + $0x40] sm:$0xff] %v2048
    %2723 = vst [vmem:[%s2713 + $0x48] sm:$0xff] %v2050
    %2724 = vst [vmem:[%s2713 + $0x50] sm:$0xff] %v2686
    %2725 = vst [vmem:[%s2713 + $0x58] sm:$0xff] %v2688
    %2726 = vst [vmem:[%s2713 + $0x60] sm:$0xff] %v2055
    %2727 = vst [vmem:[%s2713 + $0x68] sm:$0xff] %v2057
    %2728 = vst [vmem:[%s2713 + $0x70] sm:$0xff] %v2693
    %2729 = vst [vmem:[%s2713 + $0x78] sm:$0xff] %v2695
    // Predicated region
    $region10: #{fn.1} parent=1 // pred_check
      _
    $region11: #{fn.1} parent=1 // pred_check_branch
      %2731 = sbr.rel (0) target = $region13
    $region12: #{fn.1} parent=1 // pred_region
      %s2733 = ssub.s32 4096, 4096
      %2734 = vsyncadd [#allocation3], %s2733
      %s2735 = sshll.u32 [#allocation2], 4
      %s2736 = int_to_ptr.vmem [resolvable:$true] %s2735
      %2741 = dma.vmem_to_hbm [thread:$0]  %s2736, 4096, %s2, [#allocation3], 512, 512, 32
    $region13: #{fn.1} parent=1 // pred_fallthru
      _
    // Predicated region
    $region14: #{fn.1} parent=1 // pred_check
      _
    $region15: #{fn.1} parent=1 // pred_check_branch
      %2743 = sbr.rel (0) target = $region17
    $region16: #{fn.1} parent=1 // pred_region
      %2744 = dma.done [#allocation3], 4096
    $region17: #{fn.1} parent=1 // pred_fallthru
      _
    %2745 = vsyncpa [#allocation3], 1

</llo_original>
